<compile_context>
chip_gen: v7x
topology: tpu7x:2x2x1
jax: 0.10.0
libtpu: 0.0.40
codegen_flags: <defaults>
</compile_context>

<pallas_src>
import functools

import jax
import jax.numpy as jnp
from jax import lax
from jax.experimental import pallas as pl
from jax.experimental.pallas import tpu as pltpu

LANE = 128


def _round_up(x, m):
    return (x + m - 1) // m * m


def _pick_row_tile(h, w, max_rows=1024):
    """Largest divisor of h with th*w <= max_rows (keeps the MXU fed without a
    huge per-step im2col scratch; per-grid-step overhead ~0.35us)."""
    best = 1
    for th in range(1, h + 1):
        if h % th == 0 and th * w <= max_rows:
            best = th
    return best


# ----------------------------------------------------------------------------
# Pallas kernel: fused (3x3 + 1x1 + identity) conv + bias + ReLU on one
# (row tile, Cout tile): lane-aligned im2col build + 3 accumulating MXU dots.
# ----------------------------------------------------------------------------
def _repvgg_fused_kernel(x_ref, w_ref, b_ref, o_ref, col_ref, *,
                         th, w_out, cin_p, halo, num_co):
    # x_ref  : (1, th+2, Wp, Cin_p) halo'd row tile    (halo=True)
    #          (1, Hp,   Wp, Cin_p) whole padded image (halo=False), bf16
    # w_ref  : (3, 3*Cin_p, TCO)   fused weights for this Cout tile (bf16),
    #                              grouped by kernel row dy; row = dx*Cin_p + ci
    # b_ref  : (1, TCO)            fused bias (f32)
    # o_ref  : (1, th, W, TCO)     output tile (bf16, lane-dense)
    # col_ref: (th, W, 9*Cin_p)    im2col scratch; tap (dy,dx) at lane
    #                              offset (3*dy+dx)*Cin_p (128-aligned)
    r = pl.program_id(1)
    co = pl.program_id(2)
    tco = o_ref.shape[3]
    row0 = 0 if halo else r * th          # top padded-input row of this tile

    def build_dy(dy):
        # Three lane-aligned tap copies for kernel row dy.
        for dx in range(3):
            tap = 3 * dy + dx
            col_ref[:, :, tap * cin_p:(tap + 1) * cin_p] = (
                x_ref[0, pl.ds(row0 + dy, th), dx:dx + w_out, :])

    acc = jnp.zeros((th * w_out, tco), jnp.float32)
    for dy in range(3):
        if num_co == 1:
            # Single Cout tile: issue the dy-group copies right before their
            # dot so the vst traffic overlaps the previous dy's matmul.
            build_dy(dy)
        else:
            # Several Cout tiles: build the im2col once (co == 0), reuse it.
            pl.when(co == 0)(functools.partial(build_dy, dy))
        cols = col_ref[:, :, 3 * dy * cin_p:3 * (dy + 1) * cin_p]
        acc = acc + jnp.dot(cols.reshape(th * w_out, 3 * cin_p), w_ref[dy],
                            preferred_element_type=jnp.float32)

    acc = acc + b_ref[...]                                   # fused bias (f32)
    o_ref[0] = jnp.maximum(acc, 0.0).reshape(th, w_out, tco).astype(o_ref.dtype)


# ----------------------------------------------------------------------------
# Wrappers
# ----------------------------------------------------------------------------
def repvgg_block_pallas_nhwc(x_nhwc, w_fused, b_fused, out_channels=None, *,
                             row_tile=None, out_dtype=jnp.bfloat16,
                             resident_image_bytes=2 * 1024 * 1024):
    """Fused RepVGG block on NHWC input.

    w_fused: (3, 3*Cin_p, Cout_p) with Cin_p/Cout_p multiples of 128,
    b_fused: (Cout_p,).  Returns (B, H, W, out_channels) in `out_dtype`.
    """
    B, H, W, Cin = x_nhwc.shape
    assert w_fused.ndim == 3 and w_fused.shape[0] == 3
    cin_p = w_fused.shape[1] // 3
    cout_p = w_fused.shape[2]
    assert cin_p % LANE == 0 and cout_p % LANE == 0, "fused weights must be lane-padded"
    assert cin_p >= Cin
    assert W % 8 == 0, "W must be a multiple of 8 (sublane) for free reshapes"

    cout = out_channels if out_channels is not None else cout_p
    th = row_tile if row_tile is not None else _pick_row_tile(H, W)
    assert H % th == 0, "row tile must divide H"

    tco = LANE
    num_co = cout_p // tco
    Hp, Wp = H + 2, W + 2

    # One combined pad (+1 halo in H/W, zero-pad channels to Cin_p) + bf16 cast.
    # TODO(synk): fuse this pad/cast into the producer in a real network.
    xp = jnp.pad(x_nhwc, ((0, 0), (1, 1), (1, 1), (0, cin_p - Cin))).astype(jnp.bfloat16)

    # Adaptive input residency.
    image_bytes = Hp * Wp * cin_p * 2
    use_halo = (image_bytes > resident_image_bytes) and (th < H)
    if use_halo:
        # Halo'd row tile: element-offset indexing on the H axis (overlapping
        # (th+2)-row windows) keeps per-step input VMEM ~ (th+2)/H of the image.
        x_spec = pl.BlockSpec((1, pl.Element(th + 2), Wp, cin_p),
                              lambda b, r, c: (b, r * th, 0, 0))
        x_block_bytes = (th + 2) * Wp * cin_p * 2
    else:
        # Whole padded image per batch element: resident across row/Cout tiles.
        x_spec = pl.BlockSpec((1, Hp, Wp, cin_p), lambda b, r, c: (b, 0, 0, 0))
        x_block_bytes = image_bytes

    kernel = functools.partial(_repvgg_fused_kernel, th=th, w_out=W,
                               cin_p=cin_p, halo=use_halo, num_co=num_co)

    # VMEM accounting: 2 pipeline buffers per in/out block + the col scratch.
    w_block_bytes = 3 * 3 * cin_p * tco * 2
    o_block_bytes = th * W * tco * 2
    col_bytes = th * W * 9 * cin_p * 2
    vmem_est = 2 * (x_block_bytes + w_block_bytes + tco * 4 + o_block_bytes) + col_bytes
    vmem_limit = int(min(64 * 1024 * 1024, max(16 * 1024 * 1024, 1.5 * vmem_est)))

    cost = pl.CostEstimate(
        flops=2 * B * H * W * 9 * cin_p * cout_p,
        transcendentals=0,
        bytes_accessed=int(xp.size * 2 + w_fused.size * 2 + B * H * W * cout_p * 2),
    )

    out = pl.pallas_call(
        kernel,
        out_shape=jax.ShapeDtypeStruct((B, H, W, cout_p), out_dtype),
        grid_spec=pltpu.PrefetchScalarGridSpec(
            num_scalar_prefetch=0,
            grid=(B, H // th, num_co),
            in_specs=[
                x_spec,
                # Per-Cout-tile fused weights / bias (constant across b, r).
                pl.BlockSpec((3, 3 * cin_p, tco), lambda b, r, c: (0, 0, c)),
                pl.BlockSpec((1, tco), lambda b, r, c: (0, c)),
            ],
            out_specs=pl.BlockSpec((1, th, W, tco), lambda b, r, c: (b, r, 0, c)),
            scratch_shapes=[pltpu.VMEM((th, W, 9 * cin_p), jnp.bfloat16)],
        ),
        compiler_params=pltpu.CompilerParams(
            # co must stay "arbitrary": the im2col scratch built at co == 0 is
            # reused by the following co steps of the same (b, r).
            dimension_semantics=("parallel", "parallel", "arbitrary"),
            vmem_limit_bytes=vmem_limit,
        ),
        cost_estimate=cost,
    )(xp, w_fused.astype(jnp.bfloat16), b_fused.reshape(1, cout_p).astype(jnp.float32))

    if cout != cout_p:
        out = out[..., :cout]
    return out


def repvgg_block_pallas(x_nchw, w_fused, b_fused, out_channels=None, *, row_tile=None):
    """NCHW interface matching the PyTorch module (returns bf16 NCHW).

    In a real network the NCHW<->NHWC transposes belong at network boundaries,
    not per block; kept here only to match the module's interface.
    """
    assert x_nchw.ndim == 4
    x = jnp.transpose(x_nchw, (0, 2, 3, 1))                      # NCHW -> NHWC
    y = repvgg_block_pallas_nhwc(x, w_fused, b_fused, out_channels, row_tile=row_tile)
    return jnp.transpose(y, (0, 3, 1, 2))                        # NHWC -> NCHW


# ----------------------------------------------------------------------------
# Parameter construction + RepVGG re-parameterization (all in f32)
# ----------------------------------------------------------------------------
def _fold_bn(gamma, beta, mean, var, eps=1e-5):
    scale = gamma / jnp.sqrt(var + eps)
    return scale, beta - mean * scale


def make_raw_params(key, in_channels, out_channels):
    """Deterministic PyTorch-layout params: conv weights + BN stats per branch."""
    k3, k1 = jax.random.split(key, 2)
    w3 = jax.random.normal(k3, (out_channels, in_channels, 3, 3), jnp.float32) * 0.1
    w1 = jax.random.normal(k1, (out_channels, in_channels, 1, 1), jnp.float32) * 0.1

    def bn(c, off):
        gamma = 1.0 + 0.1 * jnp.arange(c, dtype=jnp.float32) + off
        beta = 0.05 * jnp.arange(c, dtype=jnp.float32) - off
        mean = 0.02 * jnp.arange(c, dtype=jnp.float32)
        var = 1.0 + 0.03 * jnp.arange(c, dtype=jnp.float32)
        return gamma, beta, mean, var

    return dict(w3=w3, bn3=bn(out_channels, 0.10),
                w1=w1, bn1=bn(out_channels, 0.20),
                bn_id=bn(in_channels, 0.30))


def fuse_repvgg_params(raw, *, has_identity):
    """Fold BN into each branch, fold 1x1 + identity into the 3x3 kernel, and
    lay the result out lane-padded for the kernel.

    Returns (w, b): w (3, 3*Cin_p, Cout_p) f32 with row = dx*Cin_p + ci inside
    each kernel row dy; b (Cout_p,) f32.  Cin_p / Cout_p are multiples of 128.
    """
    w3, (g3, be3, m3, v3) = raw["w3"], raw["bn3"]
    w1, (g1, be1, m1, v1) = raw["w1"], raw["bn1"]
    gi, bei, mi, vi = raw["bn_id"]
    Cout, Cin = w3.shape[:2]

    s3, b3 = _fold_bn(g3, be3, m3, v3)
    s1, b1 = _fold_bn(g1, be1, m1, v1)

    wf = w3 * s3[:, None, None, None]                              # (Cout,Cin,3,3)
    wf = wf.at[:, :, 1, 1].add(w1[:, :, 0, 0] * s1[:, None])       # 1x1 -> center tap
    bias = b3 + b1
    if has_identity:
        assert Cin == Cout
        si, bi = _fold_bn(gi, bei, mi, vi)
        wf = wf.at[jnp.arange(Cout), jnp.arange(Cin), 1, 1].add(si)  # identity -> diag
        bias = bias + bi

    cin_p, cout_p = _round_up(Cin, LANE), _round_up(Cout, LANE)
    w = jnp.transpose(wf, (2, 3, 1, 0))                            # (3,3,Cin,Cout)
    w = jnp.pad(w, ((0, 0), (0, 0), (0, cin_p - Cin), (0, cout_p - Cout)))
    w = w.reshape(3, 3 * cin_p, cout_p)
    b = jnp.pad(bias, (0, cout_p - Cout))
    return w, b


# ----------------------------------------------------------------------------
# Pure-JAX reference of the ORIGINAL three-branch module (f32, XLA conv)
# ----------------------------------------------------------------------------
def repvgg_block_ref(x_nchw, raw, *, has_identity):
    w3, (g3, be3, m3, v3) = raw["w3"], raw["bn3"]
    w1, (g1, be1, m1, v1) = raw["w1"], raw["bn1"]
    gi, bei, mi, vi = raw["bn_id"]
    s3, b3 = _fold_bn(g3, be3, m3, v3)
    s1, b1 = _fold_bn(g1, be1, m1, v1)

    x = jnp.transpose(x_nchw, (0, 2, 3, 1))                         # NHWC
    w3f = jnp.transpose(w3 * s3[:, None, None, None], (2, 3, 1, 0))  # HWIO
    y = lax.conv_general_dilated(
        x, w3f, window_strides=(1, 1), padding=((1, 1), (1, 1)),
        dimension_numbers=("NHWC", "HWIO", "NHWC")) + b3
    w1f = (w1[:, :, 0, 0] * s1[:, None]).T                           # (Cin,Cout)
    y = y + jnp.einsum("bhwc,cd->bhwd", x, w1f) + b1
    if has_identity:
        si, bi = _fold_bn(gi, bei, mi, vi)
        y = y + x * si + bi
    y = jnp.maximum(y, 0.0)
    return jnp.transpose(y, (0, 3, 1, 2))


# ----------------------------------------------------------------------------
if __name__ == "__main__":
    B, C, H, W = 2, 4, 16, 16
    in_channels = out_channels = C
    stride = 1
    has_identity = (in_channels == out_channels) and (stride == 1)

    key = jax.random.PRNGKey(0)
    kx, kp = jax.random.split(key)
    x = jax.random.normal(kx, (B, C, H, W), jnp.float32)   # NCHW, like PyTorch
    # Round activations to bf16 values up front (the kernel feeds bf16 to the
    # MXU); the f32 reference consumes the same rounded values so the tolerance
    # only absorbs weight/output rounding + accumulation-order differences.
    x = x.astype(jnp.bfloat16).astype(jnp.float32)

    raw = make_raw_params(kp, in_channels, out_channels)
    fused_w, fused_b = fuse_repvgg_params(raw, has_identity=has_identity)

    out = repvgg_block_pallas(x, fused_w, fused_b, out_channels)
    out = jax.block_until_ready(out)

    ref = repvgg_block_ref(x, raw, has_identity=has_identity)
    ref = jax.block_until_ready(ref)

    assert out.shape == (B, out_channels, H, W)
    out_f32 = out.astype(jnp.float32)
    max_err = float(jnp.max(jnp.abs(out_f32 - ref)))
    assert jnp.allclose(out_f32, ref, atol=4e-2, rtol=4e-2), (
        f"Pallas output mismatch vs reference (max abs err {max_err})")

    print("KERNEL_OK")
</pallas_src>

<mosaic_0001>
module attributes {stable_mosaic.version = 11 : i64} {
  func.func @_repvgg_fused_kernel(%arg0: i32, %arg1: i32, %arg2: i32, %arg3: memref<1x18x18x128xbf16, #tpu.memory_space<vmem>>, %arg4: memref<3x384x128xbf16, #tpu.memory_space<vmem>>, %arg5: memref<1x128xf32, #tpu.memory_space<vmem>>, %arg6: memref<1x16x16x128xbf16, #tpu.memory_space<vmem>>, %arg7: memref<16x16x1152xbf16, #tpu.memory_space<vmem>>) attributes {dimension_semantics = [#tpu.dimension_semantics<parallel>, #tpu.dimension_semantics<parallel>, #tpu.dimension_semantics<arbitrary>], iteration_bounds = array<i64: 2, 1, 1>, scalar_prefetch = 0 : i64, scratch_operands = 1 : i64, tpu.core_type = #tpu.core_type<tc>, window_params = [{transform_indices = @transform_0, window_bounds = array<i64: 1, 18, 18, 128>}, {transform_indices = @transform_1, window_bounds = array<i64: 3, 384, 128>}, {transform_indices = @transform_2, window_bounds = array<i64: 1, 128>}, {transform_indices = @transform_3, window_bounds = array<i64: 1, 16, 16, 128>}]} {
    %c16_i32 = arith.constant 16 : i32
    %0 = arith.muli %arg1, %c16_i32 : i32
    %cst = arith.constant 0.000000e+00 : f32
    %1 = vector.broadcast %cst : f32 to vector<256x128xf32>
    %c0_i32 = arith.constant 0 : i32
    %2 = arith.addi %0, %c0_i32 : i32
    %c0 = arith.constant 0 : index
    %3 = arith.index_cast %2 : i32 to index
    %c0_0 = arith.constant 0 : index
    %c0_1 = arith.constant 0 : index
    %4 = vector.load %arg3[%c0, %3, %c0_0, %c0_1] : memref<1x18x18x128xbf16, #tpu.memory_space<vmem>>, vector<1x16x16x128xbf16>
    %5 = vector.shape_cast %4 : vector<1x16x16x128xbf16> to vector<16x16x128xbf16>
    %c0_2 = arith.constant 0 : index
    %c0_3 = arith.constant 0 : index
    %c0_4 = arith.constant 0 : index
    %6 = vector.load %arg7[%c0_2, %c0_3, %c0_4] : memref<16x16x1152xbf16, #tpu.memory_space<vmem>>, vector<16x16x128xbf16>
    tpu.vector_store %arg7[%c0_2, %c0_3, %c0_4], %5 {strides = array<i32>} : memref<16x16x1152xbf16, #tpu.memory_space<vmem>>, vector<16x16x128xbf16>,
    %c0_i32_5 = arith.constant 0 : i32
    %7 = arith.addi %0, %c0_i32_5 : i32
    %c0_6 = arith.constant 0 : index
    %8 = arith.index_cast %7 : i32 to index
    %c1 = arith.constant 1 : index
    %c0_7 = arith.constant 0 : index
    %9 = vector.load %arg3[%c0_6, %8, %c1, %c0_7] : memref<1x18x18x128xbf16, #tpu.memory_space<vmem>>, vector<1x16x16x128xbf16>
    %10 = vector.shape_cast %9 : vector<1x16x16x128xbf16> to vector<16x16x128xbf16>
    %c0_8 = arith.constant 0 : index
    %c0_9 = arith.constant 0 : index
    %c128 = arith.constant 128 : index
    %11 = vector.load %arg7[%c0_8, %c0_9, %c128] : memref<16x16x1152xbf16, #tpu.memory_space<vmem>>, vector<16x16x128xbf16>
    tpu.vector_store %arg7[%c0_8, %c0_9, %c128], %10 {strides = array<i32>} : memref<16x16x1152xbf16, #tpu.memory_space<vmem>>, vector<16x16x128xbf16>,
    %c0_i32_10 = arith.constant 0 : i32
    %12 = arith.addi %0, %c0_i32_10 : i32
    %c0_11 = arith.constant 0 : index
    %13 = arith.index_cast %12 : i32 to index
    %c2 = arith.constant 2 : index
    %c0_12 = arith.constant 0 : index
    %14 = vector.load %arg3[%c0_11, %13, %c2, %c0_12] : memref<1x18x18x128xbf16, #tpu.memory_space<vmem>>, vector<1x16x16x128xbf16>
    %15 = vector.shape_cast %14 : vector<1x16x16x128xbf16> to vector<16x16x128xbf16>
    %c0_13 = arith.constant 0 : index
    %c0_14 = arith.constant 0 : index
    %c256 = arith.constant 256 : index
    %16 = vector.load %arg7[%c0_13, %c0_14, %c256] : memref<16x16x1152xbf16, #tpu.memory_space<vmem>>, vector<16x16x128xbf16>
    tpu.vector_store %arg7[%c0_13, %c0_14, %c256], %15 {strides = array<i32>} : memref<16x16x1152xbf16, #tpu.memory_space<vmem>>, vector<16x16x128xbf16>,
    %c0_15 = arith.constant 0 : index
    %c0_16 = arith.constant 0 : index
    %c0_17 = arith.constant 0 : index
    %17 = vector.load %arg7[%c0_15, %c0_16, %c0_17] : memref<16x16x1152xbf16, #tpu.memory_space<vmem>>, vector<16x16x384xbf16>
    %18 = vector.shape_cast %17 : vector<16x16x384xbf16> to vector<256x384xbf16>
    %c0_18 = arith.constant 0 : index
    %c0_19 = arith.constant 0 : index
    %c0_20 = arith.constant 0 : index
    %19 = vector.load %arg4[%c0_18, %c0_19, %c0_20] : memref<3x384x128xbf16, #tpu.memory_space<vmem>>, vector<1x384x128xbf16>
    %20 = vector.shape_cast %19 : vector<1x384x128xbf16> to vector<384x128xbf16>
    %cst_21 = arith.constant dense<0.000000e+00> : vector<256x128xf32>
    %21 = tpu.matmul %18, %20, %cst_21 {dimension_numbers = #tpu.dot_dimension_numbers<[1], [0], [0], [1], [0, 0, 1, 1], [], []>} : vector<256x384xbf16>, vector<384x128xbf16>, vector<256x128xf32> -> vector<256x128xf32>
    %22 = arith.addf %1, %21 : vector<256x128xf32>
    %c1_i32 = arith.constant 1 : i32
    %23 = arith.addi %0, %c1_i32 : i32
    %c0_22 = arith.constant 0 : index
    %24 = arith.index_cast %23 : i32 to index
    %c0_23 = arith.constant 0 : index
    %c0_24 = arith.constant 0 : index
    %25 = vector.load %arg3[%c0_22, %24, %c0_23, %c0_24] : memref<1x18x18x128xbf16, #tpu.memory_space<vmem>>, vector<1x16x16x128xbf16>
    %26 = vector.shape_cast %25 : vector<1x16x16x128xbf16> to vector<16x16x128xbf16>
    %c0_25 = arith.constant 0 : index
    %c0_26 = arith.constant 0 : index
    %c384 = arith.constant 384 : index
    %27 = vector.load %arg7[%c0_25, %c0_26, %c384] : memref<16x16x1152xbf16, #tpu.memory_space<vmem>>, vector<16x16x128xbf16>
    tpu.vector_store %arg7[%c0_25, %c0_26, %c384], %26 {strides = array<i32>} : memref<16x16x1152xbf16, #tpu.memory_space<vmem>>, vector<16x16x128xbf16>,
    %c1_i32_27 = arith.constant 1 : i32
    %28 = arith.addi %0, %c1_i32_27 : i32
    %c0_28 = arith.constant 0 : index
    %29 = arith.index_cast %28 : i32 to index
    %c1_29 = arith.constant 1 : index
    %c0_30 = arith.constant 0 : index
    %30 = vector.load %arg3[%c0_28, %29, %c1_29, %c0_30] : memref<1x18x18x128xbf16, #tpu.memory_space<vmem>>, vector<1x16x16x128xbf16>
    %31 = vector.shape_cast %30 : vector<1x16x16x128xbf16> to vector<16x16x128xbf16>
    %c0_31 = arith.constant 0 : index
    %c0_32 = arith.constant 0 : index
    %c512 = arith.constant 512 : index
    %32 = vector.load %arg7[%c0_31, %c0_32, %c512] : memref<16x16x1152xbf16, #tpu.memory_space<vmem>>, vector<16x16x128xbf16>
    tpu.vector_store %arg7[%c0_31, %c0_32, %c512], %31 {strides = array<i32>} : memref<16x16x1152xbf16, #tpu.memory_space<vmem>>, vector<16x16x128xbf16>,
    %c1_i32_33 = arith.constant 1 : i32
    %33 = arith.addi %0, %c1_i32_33 : i32
    %c0_34 = arith.constant 0 : index
    %34 = arith.index_cast %33 : i32 to index
    %c2_35 = arith.constant 2 : index
    %c0_36 = arith.constant 0 : index
    %35 = vector.load %arg3[%c0_34, %34, %c2_35, %c0_36] : memref<1x18x18x128xbf16, #tpu.memory_space<vmem>>, vector<1x16x16x128xbf16>
    %36 = vector.shape_cast %35 : vector<1x16x16x128xbf16> to vector<16x16x128xbf16>
    %c0_37 = arith.constant 0 : index
    %c0_38 = arith.constant 0 : index
    %c640 = arith.constant 640 : index
    %37 = vector.load %arg7[%c0_37, %c0_38, %c640] : memref<16x16x1152xbf16, #tpu.memory_space<vmem>>, vector<16x16x128xbf16>
    tpu.vector_store %arg7[%c0_37, %c0_38, %c640], %36 {strides = array<i32>} : memref<16x16x1152xbf16, #tpu.memory_space<vmem>>, vector<16x16x128xbf16>,
    %c0_39 = arith.constant 0 : index
    %c0_40 = arith.constant 0 : index
    %c384_41 = arith.constant 384 : index
    %38 = vector.load %arg7[%c0_39, %c0_40, %c384_41] : memref<16x16x1152xbf16, #tpu.memory_space<vmem>>, vector<16x16x384xbf16>
    %39 = vector.shape_cast %38 : vector<16x16x384xbf16> to vector<256x384xbf16>
    %c1_42 = arith.constant 1 : index
    %c0_43 = arith.constant 0 : index
    %c0_44 = arith.constant 0 : index
    %40 = vector.load %arg4[%c1_42, %c0_43, %c0_44] : memref<3x384x128xbf16, #tpu.memory_space<vmem>>, vector<1x384x128xbf16>
    %41 = vector.shape_cast %40 : vector<1x384x128xbf16> to vector<384x128xbf16>
    %cst_45 = arith.constant dense<0.000000e+00> : vector<256x128xf32>
    %42 = tpu.matmul %39, %41, %cst_45 {dimension_numbers = #tpu.dot_dimension_numbers<[1], [0], [0], [1], [0, 0, 1, 1], [], []>} : vector<256x384xbf16>, vector<384x128xbf16>, vector<256x128xf32> -> vector<256x128xf32>
    %43 = arith.addf %22, %42 : vector<256x128xf32>
    %c2_i32 = arith.constant 2 : i32
    %44 = arith.addi %0, %c2_i32 : i32
    %c0_46 = arith.constant 0 : index
    %45 = arith.index_cast %44 : i32 to index
    %c0_47 = arith.constant 0 : index
    %c0_48 = arith.constant 0 : index
    %46 = vector.load %arg3[%c0_46, %45, %c0_47, %c0_48] : memref<1x18x18x128xbf16, #tpu.memory_space<vmem>>, vector<1x16x16x128xbf16>
    %47 = vector.shape_cast %46 : vector<1x16x16x128xbf16> to vector<16x16x128xbf16>
    %c0_49 = arith.constant 0 : index
    %c0_50 = arith.constant 0 : index
    %c768 = arith.constant 768 : index
    %48 = vector.load %arg7[%c0_49, %c0_50, %c768] : memref<16x16x1152xbf16, #tpu.memory_space<vmem>>, vector<16x16x128xbf16>
    tpu.vector_store %arg7[%c0_49, %c0_50, %c768], %47 {strides = array<i32>} : memref<16x16x1152xbf16, #tpu.memory_space<vmem>>, vector<16x16x128xbf16>,
    %c2_i32_51 = arith.constant 2 : i32
    %49 = arith.addi %0, %c2_i32_51 : i32
    %c0_52 = arith.constant 0 : index
    %50 = arith.index_cast %49 : i32 to index
    %c1_53 = arith.constant 1 : index
    %c0_54 = arith.constant 0 : index
    %51 = vector.load %arg3[%c0_52, %50, %c1_53, %c0_54] : memref<1x18x18x128xbf16, #tpu.memory_space<vmem>>, vector<1x16x16x128xbf16>
    %52 = vector.shape_cast %51 : vector<1x16x16x128xbf16> to vector<16x16x128xbf16>
    %c0_55 = arith.constant 0 : index
    %c0_56 = arith.constant 0 : index
    %c896 = arith.constant 896 : index
    %53 = vector.load %arg7[%c0_55, %c0_56, %c896] : memref<16x16x1152xbf16, #tpu.memory_space<vmem>>, vector<16x16x128xbf16>
    tpu.vector_store %arg7[%c0_55, %c0_56, %c896], %52 {strides = array<i32>} : memref<16x16x1152xbf16, #tpu.memory_space<vmem>>, vector<16x16x128xbf16>,
    %c2_i32_57 = arith.constant 2 : i32
    %54 = arith.addi %0, %c2_i32_57 : i32
    %c0_58 = arith.constant 0 : index
    %55 = arith.index_cast %54 : i32 to index
    %c2_59 = arith.constant 2 : index
    %c0_60 = arith.constant 0 : index
    %56 = vector.load %arg3[%c0_58, %55, %c2_59, %c0_60] : memref<1x18x18x128xbf16, #tpu.memory_space<vmem>>, vector<1x16x16x128xbf16>
    %57 = vector.shape_cast %56 : vector<1x16x16x128xbf16> to vector<16x16x128xbf16>
    %c0_61 = arith.constant 0 : index
    %c0_62 = arith.constant 0 : index
    %c1024 = arith.constant 1024 : index
    %58 = vector.load %arg7[%c0_61, %c0_62, %c1024] : memref<16x16x1152xbf16, #tpu.memory_space<vmem>>, vector<16x16x128xbf16>
    tpu.vector_store %arg7[%c0_61, %c0_62, %c1024], %57 {strides = array<i32>} : memref<16x16x1152xbf16, #tpu.memory_space<vmem>>, vector<16x16x128xbf16>,
    %c0_63 = arith.constant 0 : index
    %c0_64 = arith.constant 0 : index
    %c768_65 = arith.constant 768 : index
    %59 = vector.load %arg7[%c0_63, %c0_64, %c768_65] : memref<16x16x1152xbf16, #tpu.memory_space<vmem>>, vector<16x16x384xbf16>
    %60 = vector.shape_cast %59 : vector<16x16x384xbf16> to vector<256x384xbf16>
    %c2_66 = arith.constant 2 : index
    %c0_67 = arith.constant 0 : index
    %c0_68 = arith.constant 0 : index
    %61 = vector.load %arg4[%c2_66, %c0_67, %c0_68] : memref<3x384x128xbf16, #tpu.memory_space<vmem>>, vector<1x384x128xbf16>
    %62 = vector.shape_cast %61 : vector<1x384x128xbf16> to vector<384x128xbf16>
    %cst_69 = arith.constant dense<0.000000e+00> : vector<256x128xf32>
    %63 = tpu.matmul %60, %62, %cst_69 {dimension_numbers = #tpu.dot_dimension_numbers<[1], [0], [0], [1], [0, 0, 1, 1], [], []>} : vector<256x384xbf16>, vector<384x128xbf16>, vector<256x128xf32> -> vector<256x128xf32>
    %64 = arith.addf %43, %63 : vector<256x128xf32>
    %c0_70 = arith.constant 0 : index
    %c0_71 = arith.constant 0 : index
    %65 = vector.load %arg5[%c0_70, %c0_71] : memref<1x128xf32, #tpu.memory_space<vmem>>, vector<1x128xf32>
    %66 = vector.broadcast %65 : vector<1x128xf32> to vector<256x128xf32>
    %67 = arith.addf %64, %66 : vector<256x128xf32>
    %cst_72 = arith.constant 0.000000e+00 : f32
    %68 = vector.broadcast %cst_72 : f32 to vector<256x128xf32>
    %69 = arith.maximumf %67, %68 : vector<256x128xf32>
    %70 = vector.shape_cast %69 : vector<256x128xf32> to vector<16x16x128xf32>
    %71 = arith.truncf %70 : vector<16x16x128xf32> to vector<16x16x128xbf16>
    %c0_73 = arith.constant 0 : index
    %c0_74 = arith.constant 0 : index
    %c0_75 = arith.constant 0 : index
    %c0_76 = arith.constant 0 : index
    %72 = vector.load %arg6[%c0_73, %c0_74, %c0_75, %c0_76] : memref<1x16x16x128xbf16, #tpu.memory_space<vmem>>, vector<1x16x16x128xbf16>
    %73 = vector.shape_cast %72 : vector<1x16x16x128xbf16> to vector<16x16x128xbf16>
    %74 = vector.shape_cast %71 : vector<16x16x128xbf16> to vector<1x16x16x128xbf16>
    tpu.vector_store %arg6[%c0_73, %c0_74, %c0_75, %c0_76], %74 {strides = array<i32>} : memref<1x16x16x128xbf16, #tpu.memory_space<vmem>>, vector<1x16x16x128xbf16>,
    return
  }
  func.func @transform_0(%arg0: i32, %arg1: i32, %arg2: i32) -> (i32, i32, i32, i32) {
    %c0_i32 = arith.constant 0 : i32
    %c0_i32_0 = arith.constant 0 : i32
    %c0_i32_1 = arith.constant 0 : i32
    %c0_i32_2 = arith.constant 0 : i32
    return %arg0, %c0_i32, %c0_i32_0, %c0_i32_1 : i32, i32, i32, i32
  }
  func.func @transform_1(%arg0: i32, %arg1: i32, %arg2: i32) -> (i32, i32, i32) {
    %c0_i32 = arith.constant 0 : i32
    %c0_i32_0 = arith.constant 0 : i32
    %c0_i32_1 = arith.constant 0 : i32
    return %c0_i32, %c0_i32_0, %arg2 : i32, i32, i32
  }
  func.func @transform_2(%arg0: i32, %arg1: i32, %arg2: i32) -> (i32, i32) {
    %c0_i32 = arith.constant 0 : i32
    %c0_i32_0 = arith.constant 0 : i32
    return %c0_i32, %arg2 : i32, i32
  }
  func.func @transform_3(%arg0: i32, %arg1: i32, %arg2: i32) -> (i32, i32, i32, i32) {
    %c0_i32 = arith.constant 0 : i32
    %c0_i32_0 = arith.constant 0 : i32
    return %arg0, %arg1, %c0_i32, %arg2 : i32, i32, i32, i32
  }
}

</mosaic_0001>

<llo_original>
// kernel: tpu_custom_call.1
$region0: #{tpu_custom_call.1}
  #allocation0 [shape = 'u32[]', space=smem, size = 0x4, offset = 0x4, fixed_abs, tag = 'smem constant byte address 0x4 - core index']
  #allocation1 [shape = 'u32[144,128]{1,0:T(1,128)}', space=vmem, size = 0x12000, scoped, tag = 'internal scratch']
  #allocation2 [shape = 'bf16[16,16,1152]{2,1,0:T(16,128)(2,1)}', space=vmem, size = 0x90000, scoped, tag = 'scratch operand']
  %s0 = inlined_call_operand.vmem [shape: bf16[2,18,18,128], index: 0, kind: input, shape index: {}]
  %s1 = inlined_call_operand.vmem [shape: bf16[3,384,128], index: 1, kind: input, shape index: {}]
  %s2 = inlined_call_operand.vmem [shape: f32[1,128], index: 2, kind: input, shape index: {}]
  %s3 = inlined_call_operand.hbm [shape: bf16[2,16,16,128], index: 3, kind: output, shape index: {}]
  %s4 = sld [smem:[#allocation0]]
  $region45: #{tpu_custom_call.1} parent=0
    _
  %s6 = ssub.s32 1, %s4
  %s7 = scalar_select 0, %s6, %s4
  $region1: #{tpu_custom_call.1} parent=0
    #allocation3 [shape = 'u8[131072]{0}', space=vmem, size = 0x20000, scoped, tag = 'output window, operand 0']
    #allocation4 [shape = 's32[2]{0}', space=sflag, size = 0x8, scoped, tag = 'scoped memory for tpu_custom_call.1']
    %8 = vsyncpa [#allocation4], 0
    %s9 = scalar_lea.sflag [#allocation4], 1
    %10 = vsyncpa %s9, 0
    loop: start=0, step=1, limit=4
    $region2: #{tpu_custom_call.1} parent=1 // loop_pre_header
      _
    $region3: #{tpu_custom_call.1} parent=1 // loop_header
      %s12 = sphi 0, %s16
      %p13 = scmp.ge.s32.totalorder %s12, 4
      %s19 = sphi 0, %s38
      %s20 = sphi 0, %s34
      %s21 = sphi 0, %s30
      %s22 = sphi 0, %s19
      %s23 = sphi 0, %s20
      %s24 = sphi 0, %s21
      %s25 = sphi 0, %s22
      %s26 = sphi 0, %s23
      %s27 = sphi 0, %s24
      %s41 = sphi 0, %s43
      %s44 = sphi 0, %s41
      %s45 = sphi 0, %s44
      %s61 = sphi 0, %s45
      %s67 = sphi 0, %s69
      %s70 = sphi 0, %s67
      %s71 = sphi 0, %s70
      %s87 = sphi 0, %s71
      %s93 = sphi 0, %s95
      %s96 = sphi 0, %s93
      %s97 = sphi 0, %s96
      %s113 = sphi 0, %s97
      %s123 = sphi 0, %s125
      %s126 = sphi 0, %s123
      %s127 = sphi 0, %s126
      %s143 = sphi 0, %s127
    $region4: #{tpu_custom_call.1} parent=1 // loop_header_branch
      %15 = sbr.rel (%p13) target = $region8
    $region5: #{tpu_custom_call.1} parent=1 // loop_body
      %s17 = ssub.s32 %s12, 1
      %s18 = ssub.s32 %s12, 2
      %s28 = sadd.s32 1, %s21
      %p29 = scmp.ge.s32.totalorder %s28, 1
      %s30 = scalar_select %p29, 0, %s28
      %s31 = sadd.s32 1, %s20
      %s32 = scalar_select %p29, %s31, %s20
      %p33 = scmp.ge.s32.totalorder %s32, 1
      %s34 = scalar_select %p33, 0, %s32
      %s35 = sadd.s32 1, %s19
      %s36 = scalar_select %p33, %s35, %s19
      %p37 = scmp.ge.s32.totalorder %s36, 2
      %s38 = scalar_select %p37, 0, %s36
      %s39 = ssub.s32 %s19, %s38
      %p40 = scmp.eq.s32.totalorder %s39, 0
      %s42 = sadd.s32 %s41, 1
      %s43 = scalar_select %p40, %s41, %s42
      %p46 = pneg %p40
      %p47 = scmp.eq.s32.totalorder %s12, 1
      %p48 = por %p46, %p47
      %p49 = scmp.ne.s32.totalorder %s41, %s44
      %p50 = scmp.eq.s32.totalorder %s12, 0
      %p51 = por %p49, %p50
      %p52 = scmp.ne.s32.totalorder %s41, %s44
      %p53 = scmp.eq.s32.totalorder %s17, 1
      %p54 = por %p52, %p53
      %p55 = scmp.ne.s32.totalorder %s44, %s45
      %p56 = scmp.eq.s32.totalorder %s17, 0
      %p57 = por %p55, %p56
      %p58 = scmp.ne.s32.totalorder %s44, %s45
      %p59 = scmp.eq.s32.totalorder %s18, 1
      %p60 = por %p58, %p59
      %p62 = scmp.ne.s32.totalorder %s45, %s61
      %p63 = scmp.eq.s32.totalorder %s18, 0
      %p64 = por %p62, %p63
      %s65 = ssub.s32 %s21, %s30
      %p66 = scmp.eq.s32.totalorder %s65, 0
      %s68 = sadd.s32 %s67, 1
      %s69 = scalar_select %p66, %s67, %s68
      %p72 = pneg %p66
      %p73 = scmp.eq.s32.totalorder %s12, 1
      %p74 = por %p72, %p73
      %p75 = scmp.ne.s32.totalorder %s67, %s70
      %p76 = scmp.eq.s32.totalorder %s12, 0
      %p77 = por %p75, %p76
      %p78 = scmp.ne.s32.totalorder %s67, %s70
      %p79 = scmp.eq.s32.totalorder %s17, 1
      %p80 = por %p78, %p79
      %p81 = scmp.ne.s32.totalorder %s70, %s71
      %p82 = scmp.eq.s32.totalorder %s17, 0
      %p83 = por %p81, %p82
      %p84 = scmp.ne.s32.totalorder %s70, %s71
      %p85 = scmp.eq.s32.totalorder %s18, 1
      %p86 = por %p84, %p85
      %p88 = scmp.ne.s32.totalorder %s71, %s87
      %p89 = scmp.eq.s32.totalorder %s18, 0
      %p90 = por %p88, %p89
      %s91 = ssub.s32 %s21, %s30
      %p92 = scmp.eq.s32.totalorder %s91, 0
      %s94 = sadd.s32 %s93, 1
      %s95 = scalar_select %p92, %s93, %s94
      %p98 = pneg %p92
      %p99 = scmp.eq.s32.totalorder %s12, 1
      %p100 = por %p98, %p99
      %p101 = scmp.ne.s32.totalorder %s93, %s96
      %p102 = scmp.eq.s32.totalorder %s12, 0
      %p103 = por %p101, %p102
      %p104 = scmp.ne.s32.totalorder %s93, %s96
      %p105 = scmp.eq.s32.totalorder %s17, 1
      %p106 = por %p104, %p105
      %p107 = scmp.ne.s32.totalorder %s96, %s97
      %p108 = scmp.eq.s32.totalorder %s17, 0
      %p109 = por %p107, %p108
      %p110 = scmp.ne.s32.totalorder %s96, %s97
      %p111 = scmp.eq.s32.totalorder %s18, 1
      %p112 = por %p110, %p111
      %p114 = scmp.ne.s32.totalorder %s97, %s113
      %p115 = scmp.eq.s32.totalorder %s18, 0
      %p116 = por %p114, %p115
      %s117 = ssub.s32 %s19, %s38
      %s118 = ssub.s32 %s20, %s34
      %s119 = sor.u32 %s117, %s118
      %s120 = ssub.s32 %s21, %s30
      %s121 = sor.u32 %s119, %s120
      %p122 = scmp.eq.s32.totalorder %s121, 0
      %s124 = sadd.s32 %s123, 1
      %s125 = scalar_select %p122, %s123, %s124
      %p128 = pneg %p122
      %p129 = scmp.eq.s32.totalorder %s12, 1
      %p130 = por %p128, %p129
      %p131 = scmp.ne.s32.totalorder %s123, %s126
      %p132 = scmp.eq.s32.totalorder %s12, 0
      %p133 = por %p131, %p132
      %p134 = scmp.ne.s32.totalorder %s123, %s126
      %p135 = scmp.eq.s32.totalorder %s17, 1
      %p136 = por %p134, %p135
      %p137 = scmp.ne.s32.totalorder %s126, %s127
      %p138 = scmp.eq.s32.totalorder %s17, 0
      %p139 = por %p137, %p138
      %p140 = scmp.ne.s32.totalorder %s126, %s127
      %p141 = scmp.eq.s32.totalorder %s18, 1
      %p142 = por %p140, %p141
      %p144 = scmp.ne.s32.totalorder %s127, %s143
      %p145 = scmp.eq.s32.totalorder %s18, 0
      %p146 = por %p144, %p145
      %p147 = scmp.le.s32.totalorder 1, %s12
      %p148 = scmp.lt.s32.totalorder %s12, 3
      %p149 = pnand %p147, %p148
      %p150 = pneg %p149
      // Predicated region
      $region9: #{tpu_custom_call.1} parent=5 // pred_check
        _
      $region10: #{tpu_custom_call.1} parent=5 // pred_check_branch
        %152 = sbr.rel (%p149) target = $region12
      $region11: #{tpu_custom_call.1} parent=5 // pred_region
        %s153 = ssub.s32 %s12, 1
        // Predicated region
        $region13: #{tpu_custom_call.1} parent=11 // pred_check
          %p154 = pneg %p83
        $region14: #{tpu_custom_call.1} parent=11 // pred_check_branch
          %156 = sbr.rel (%p154) target = $region16
        $region15: #{tpu_custom_call.1} parent=11 // pred_region
          %p157 = scmp.lt.s32.totalorder %s24, 0
          %s158 = scalar_select %p157, %s24, 0
          %s159 = smul.addr %s158, 4
          %s160 = scalar_lea.vmem %s1, %s159
        $region16: #{tpu_custom_call.1} parent=11 // pred_fallthru
          _
        // Predicated region
        $region17: #{tpu_custom_call.1} parent=11 // pred_check
          %p161 = pneg %p109
        $region18: #{tpu_custom_call.1} parent=11 // pred_check_branch
          %163 = sbr.rel (%p161) target = $region20
        $region19: #{tpu_custom_call.1} parent=11 // pred_region
          %p164 = scmp.lt.s32.totalorder %s24, 0
          %s165 = scalar_select %p164, %s24, 0
          %s166 = scalar_lea.vmem %s2, %s165
        $region20: #{tpu_custom_call.1} parent=11 // pred_fallthru
          _
      $region12: #{tpu_custom_call.1} parent=5 // pred_fallthru
        _
      %p167 = scmp.lt.s32.totalorder %s12, 2
      // Predicated region
      $region21: #{tpu_custom_call.1} parent=5 // pred_check
        %p168 = pneg %p167
      $region22: #{tpu_custom_call.1} parent=5 // pred_check_branch
        %170 = sbr.rel (%p168) target = $region24
      $region23: #{tpu_custom_call.1} parent=5 // pred_region
        // Predicated region
        $region25: #{tpu_custom_call.1} parent=23 // pred_check
          %p171 = pneg %p51
        $region26: #{tpu_custom_call.1} parent=23 // pred_check_branch
          %173 = sbr.rel (%p171) target = $region28
        $region27: #{tpu_custom_call.1} parent=23 // pred_region
          %p174 = scmp.lt.s32.totalorder %s19, 1
          %s175 = scalar_select %p174, %s19, 1
          %s176 = smul.addr %s175, 54
          %s177 = smul.addr %s176, 4
          %s178 = scalar_lea.vmem %s0, %s177
        $region28: #{tpu_custom_call.1} parent=23 // pred_fallthru
          _
      $region24: #{tpu_custom_call.1} parent=5 // pred_fallthru
        _
      %p179 = scmp.le.s32.totalorder 1, %s12
      %p180 = scmp.lt.s32.totalorder %s12, 3
      %p181 = pnand %p179, %p180
      %p182 = pneg %p181
      // Predicated region
      $region29: #{tpu_custom_call.1} parent=5 // pred_check
        _
      $region30: #{tpu_custom_call.1} parent=5 // pred_check_branch
        %184 = sbr.rel (%p181) target = $region32
      $region31: #{tpu_custom_call.1} parent=5 // pred_region
        %s185 = ssub.s32 %s12, 1
        %p186 = scmp.lt.s32.totalorder %s22, 1
        %s187 = scalar_select %p186, %s22, 1
        %s188 = smul.addr %s187, 54
        %s189 = smul.addr %s188, 4
        %s190 = scalar_lea.vmem %s0, %s189
        %p191 = pneg %p57
        %p192 = pneg %p54
        %p193 = scmp.lt.s32.totalorder %s24, 0
        %s194 = scalar_select %p193, %s24, 0
        %s195 = smul.addr %s194, 4
        %s196 = scalar_lea.vmem %s1, %s195
        %p197 = pneg %p83
        %p198 = pneg %p80
        %p199 = scmp.lt.s32.totalorder %s24, 0
        %s200 = scalar_select %p199, %s24, 0
        %s201 = scalar_lea.vmem %s2, %s200
        %p202 = pneg %p109
        %p203 = pneg %p106
        %p204 = pneg %p139
        %p205 = pneg %p136
        %s206 = sand.u32 %s126, 1
        %s207 = scalar_lea.sflag [#allocation4], %s206
        %s208 = sand.u32 %s126, 1
        %s209 = smul.addr %s208, 128
        %s210 = scalar_lea.vmem [#allocation3], %s209
        %p211 = scmp.lt.s32.totalorder %s22, 1
        %s212 = scalar_select %p211, %s22, 1
        %s213 = smul.addr %s212, 54
        %s214 = smul.addr %s213, 4
        %s215 = scalar_lea.vmem %s0, %s214
        %p216 = scmp.lt.s32.totalorder %s24, 0
        %s217 = scalar_select %p216, %s24, 0
        %s218 = smul.addr %s217, 4
        %s219 = scalar_lea.vmem %s1, %s218
        %p220 = scmp.lt.s32.totalorder %s24, 0
        %s221 = scalar_select %p220, %s24, 0
        %s222 = scalar_lea.vmem %s2, %s221
        %s223 = smul.u32 16, %s23
        %s225 = smul.u32 %s23, 16
        %s226 = smul.u32 %s225, 3
        %s227 = smul.addr %s226, 4
        %s228 = scalar_lea.vmem %s215, %s227
        %v229 = vld [vmem:[%s228] sm:$0xf]
        %v230 = vld [vmem:[%s228 + $0x4] sm:$0xf]
        %v231 = vld [vmem:[%s228 + $0xc] sm:$0xf]
        %v232 = vld [vmem:[%s228 + $0x10] sm:$0xf]
        %v233 = vld [vmem:[%s228 + $0x18] sm:$0xf]
        %v234 = vld [vmem:[%s228 + $0x1c] sm:$0xf]
        %v235 = vld [vmem:[%s228 + $0x24] sm:$0xf]
        %v236 = vld [vmem:[%s228 + $0x28] sm:$0xf]
        %v237 = vld [vmem:[%s228 + $0x30] sm:$0xf]
        %v238 = vld [vmem:[%s228 + $0x34] sm:$0xf]
        %v239 = vld [vmem:[%s228 + $0x3c] sm:$0xf]
        %v240 = vld [vmem:[%s228 + $0x40] sm:$0xf]
        %v241 = vld [vmem:[%s228 + $0x48] sm:$0xf]
        %v242 = vld [vmem:[%s228 + $0x4c] sm:$0xf]
        %v243 = vld [vmem:[%s228 + $0x54] sm:$0xf]
        %v244 = vld [vmem:[%s228 + $0x58] sm:$0xf]
        %v245 = vld [vmem:[%s228 + $0x60] sm:$0xf]
        %v246 = vld [vmem:[%s228 + $0x64] sm:$0xf]
        %v247 = vld [vmem:[%s228 + $0x6c] sm:$0xf]
        %v248 = vld [vmem:[%s228 + $0x70] sm:$0xf]
        %v249 = vld [vmem:[%s228 + $0x78] sm:$0xf]
        %v250 = vld [vmem:[%s228 + $0x7c] sm:$0xf]
        %v251 = vld [vmem:[%s228 + $0x84] sm:$0xf]
        %v252 = vld [vmem:[%s228 + $0x88] sm:$0xf]
        %v253 = vld [vmem:[%s228 + $0x90] sm:$0xf]
        %v254 = vld [vmem:[%s228 + $0x94] sm:$0xf]
        %v255 = vld [vmem:[%s228 + $0x9c] sm:$0xf]
        %v256 = vld [vmem:[%s228 + $0xa0] sm:$0xf]
        %v257 = vld [vmem:[%s228 + $0xa8] sm:$0xf]
        %v258 = vld [vmem:[%s228 + $0xac] sm:$0xf]
        %v259 = vld [vmem:[%s228 + $0xb4] sm:$0xf]
        %v260 = vld [vmem:[%s228 + $0xb8] sm:$0xf]
        %v293 = vunpack.c.l.b16 %v229
        %v294 = vunpack.c.l.b16 %v230
        %v295 = vunpack.c.l.b16 %v231
        %v296 = vunpack.c.l.b16 %v232
        %v297 = vunpack.c.l.b16 %v233
        %v298 = vunpack.c.l.b16 %v234
        %v299 = vunpack.c.l.b16 %v235
        %v300 = vunpack.c.l.b16 %v236
        %v301 = vunpack.c.l.b16 %v237
        %v302 = vunpack.c.l.b16 %v238
        %v303 = vunpack.c.l.b16 %v239
        %v304 = vunpack.c.l.b16 %v240
        %v305 = vunpack.c.l.b16 %v241
        %v306 = vunpack.c.l.b16 %v242
        %v307 = vunpack.c.l.b16 %v243
        %v308 = vunpack.c.l.b16 %v244
        %v309 = vunpack.c.l.b16 %v245
        %v310 = vunpack.c.l.b16 %v246
        %v311 = vunpack.c.l.b16 %v247
        %v312 = vunpack.c.l.b16 %v248
        %v313 = vunpack.c.l.b16 %v249
        %v314 = vunpack.c.l.b16 %v250
        %v315 = vunpack.c.l.b16 %v251
        %v316 = vunpack.c.l.b16 %v252
        %v317 = vunpack.c.l.b16 %v253
        %v318 = vunpack.c.l.b16 %v254
        %v319 = vunpack.c.l.b16 %v255
        %v320 = vunpack.c.l.b16 %v256
        %v321 = vunpack.c.l.b16 %v257
        %v322 = vunpack.c.l.b16 %v258
        %v323 = vunpack.c.l.b16 %v259
        %v324 = vunpack.c.l.b16 %v260
        %v325 = vpack.c.b16 %v294, %v293
        %v326 = vpack.c.b16 %v296, %v295
        %v327 = vpack.c.b16 %v298, %v297
        %v328 = vpack.c.b16 %v300, %v299
        %v329 = vpack.c.b16 %v302, %v301
        %v330 = vpack.c.b16 %v304, %v303
        %v331 = vpack.c.b16 %v306, %v305
        %v332 = vpack.c.b16 %v308, %v307
        %v333 = vpack.c.b16 %v310, %v309
        %v334 = vpack.c.b16 %v312, %v311
        %v335 = vpack.c.b16 %v314, %v313
        %v336 = vpack.c.b16 %v316, %v315
        %v337 = vpack.c.b16 %v318, %v317
        %v338 = vpack.c.b16 %v320, %v319
        %v339 = vpack.c.b16 %v322, %v321
        %v340 = vpack.c.b16 %v324, %v323
        %357 = vst [vmem:[#allocation2] sm:$0xff] %v325
        %358 = vst [vmem:[#allocation2 + $0x48] sm:$0xff] %v326
        %359 = vst [vmem:[#allocation2 + $0x90] sm:$0xff] %v327
        %360 = vst [vmem:[#allocation2 + $0xd8] sm:$0xff] %v328
        %361 = vst [vmem:[#allocation2 + $0x120] sm:$0xff] %v329
        %362 = vst [vmem:[#allocation2 + $0x168] sm:$0xff] %v330
        %363 = vst [vmem:[#allocation2 + $0x1b0] sm:$0xff] %v331
        %364 = vst [vmem:[#allocation2 + $0x1f8] sm:$0xff] %v332
        %365 = vst [vmem:[#allocation2 + $0x240] sm:$0xff] %v333
        %366 = vst [vmem:[#allocation2 + $0x288] sm:$0xff] %v334
        %367 = vst [vmem:[#allocation2 + $0x2d0] sm:$0xff] %v335
        %368 = vst [vmem:[#allocation2 + $0x318] sm:$0xff] %v336
        %369 = vst [vmem:[#allocation2 + $0x360] sm:$0xff] %v337
        %370 = vst [vmem:[#allocation2 + $0x3a8] sm:$0xff] %v338
        %371 = vst [vmem:[#allocation2 + $0x3f0] sm:$0xff] %v339
        %372 = vst [vmem:[#allocation2 + $0x438] sm:$0xff] %v340
        %v373 = vld [vmem:[%s228] sm:$0xf]
        %v374 = vld [vmem:[%s228 + $0x4] sm:$0xf]
        %v375 = vld [vmem:[%s228 + $0x8] sm:$0x1]
        %v376 = vld [vmem:[%s228 + $0xc] sm:$0xf]
        %v377 = vld [vmem:[%s228 + $0x10] sm:$0xf]
        %v378 = vld [vmem:[%s228 + $0x14] sm:$0x1]
        %v379 = vld [vmem:[%s228 + $0x18] sm:$0xf]
        %v380 = vld [vmem:[%s228 + $0x1c] sm:$0xf]
        %v381 = vld [vmem:[%s228 + $0x20] sm:$0x1]
        %v382 = vld [vmem:[%s228 + $0x24] sm:$0xf]
        %v383 = vld [vmem:[%s228 + $0x28] sm:$0xf]
        %v384 = vld [vmem:[%s228 + $0x2c] sm:$0x1]
        %v385 = vld [vmem:[%s228 + $0x30] sm:$0xf]
        %v386 = vld [vmem:[%s228 + $0x34] sm:$0xf]
        %v387 = vld [vmem:[%s228 + $0x38] sm:$0x1]
        %v388 = vld [vmem:[%s228 + $0x3c] sm:$0xf]
        %v389 = vld [vmem:[%s228 + $0x40] sm:$0xf]
        %v390 = vld [vmem:[%s228 + $0x44] sm:$0x1]
        %v391 = vld [vmem:[%s228 + $0x48] sm:$0xf]
        %v392 = vld [vmem:[%s228 + $0x4c] sm:$0xf]
        %v393 = vld [vmem:[%s228 + $0x50] sm:$0x1]
        %v394 = vld [vmem:[%s228 + $0x54] sm:$0xf]
        %v395 = vld [vmem:[%s228 + $0x58] sm:$0xf]
        %v396 = vld [vmem:[%s228 + $0x5c] sm:$0x1]
        %v397 = vld [vmem:[%s228 + $0x60] sm:$0xf]
        %v398 = vld [vmem:[%s228 + $0x64] sm:$0xf]
        %v399 = vld [vmem:[%s228 + $0x68] sm:$0x1]
        %v400 = vld [vmem:[%s228 + $0x6c] sm:$0xf]
        %v401 = vld [vmem:[%s228 + $0x70] sm:$0xf]
        %v402 = vld [vmem:[%s228 + $0x74] sm:$0x1]
        %v403 = vld [vmem:[%s228 + $0x78] sm:$0xf]
        %v404 = vld [vmem:[%s228 + $0x7c] sm:$0xf]
        %v405 = vld [vmem:[%s228 + $0x80] sm:$0x1]
        %v406 = vld [vmem:[%s228 + $0x84] sm:$0xf]
        %v407 = vld [vmem:[%s228 + $0x88] sm:$0xf]
        %v408 = vld [vmem:[%s228 + $0x8c] sm:$0x1]
        %v409 = vld [vmem:[%s228 + $0x90] sm:$0xf]
        %v410 = vld [vmem:[%s228 + $0x94] sm:$0xf]
        %v411 = vld [vmem:[%s228 + $0x98] sm:$0x1]
        %v412 = vld [vmem:[%s228 + $0x9c] sm:$0xf]
        %v413 = vld [vmem:[%s228 + $0xa0] sm:$0xf]
        %v414 = vld [vmem:[%s228 + $0xa4] sm:$0x1]
        %v415 = vld [vmem:[%s228 + $0xa8] sm:$0xf]
        %v416 = vld [vmem:[%s228 + $0xac] sm:$0xf]
        %v417 = vld [vmem:[%s228 + $0xb0] sm:$0x1]
        %v418 = vld [vmem:[%s228 + $0xb4] sm:$0xf]
        %v419 = vld [vmem:[%s228 + $0xb8] sm:$0xf]
        %v420 = vld [vmem:[%s228 + $0xbc] sm:$0x1]
        %v469 = vunpack.c.l.b16 %v373
        %v470 = vunpack.c.l.b16 %v374
        %v471 = vunpack.c.l.b16 %v375
        %v472 = vunpack.c.l.b16 %v376
        %v473 = vunpack.c.l.b16 %v377
        %v474 = vunpack.c.l.b16 %v378
        %v475 = vunpack.c.l.b16 %v379
        %v476 = vunpack.c.l.b16 %v380
        %v477 = vunpack.c.l.b16 %v381
        %v478 = vunpack.c.l.b16 %v382
        %v479 = vunpack.c.l.b16 %v383
        %v480 = vunpack.c.l.b16 %v384
        %v481 = vunpack.c.l.b16 %v385
        %v482 = vunpack.c.l.b16 %v386
        %v483 = vunpack.c.l.b16 %v387
        %v484 = vunpack.c.l.b16 %v388
        %v485 = vunpack.c.l.b16 %v389
        %v486 = vunpack.c.l.b16 %v390
        %v487 = vunpack.c.l.b16 %v391
        %v488 = vunpack.c.l.b16 %v392
        %v489 = vunpack.c.l.b16 %v393
        %v490 = vunpack.c.l.b16 %v394
        %v491 = vunpack.c.l.b16 %v395
        %v492 = vunpack.c.l.b16 %v396
        %v493 = vunpack.c.l.b16 %v397
        %v494 = vunpack.c.l.b16 %v398
        %v495 = vunpack.c.l.b16 %v399
        %v496 = vunpack.c.l.b16 %v400
        %v497 = vunpack.c.l.b16 %v401
        %v498 = vunpack.c.l.b16 %v402
        %v499 = vunpack.c.l.b16 %v403
        %v500 = vunpack.c.l.b16 %v404
        %v501 = vunpack.c.l.b16 %v405
        %v502 = vunpack.c.l.b16 %v406
        %v503 = vunpack.c.l.b16 %v407
        %v504 = vunpack.c.l.b16 %v408
        %v505 = vunpack.c.l.b16 %v409
        %v506 = vunpack.c.l.b16 %v410
        %v507 = vunpack.c.l.b16 %v411
        %v508 = vunpack.c.l.b16 %v412
        %v509 = vunpack.c.l.b16 %v413
        %v510 = vunpack.c.l.b16 %v414
        %v511 = vunpack.c.l.b16 %v415
        %v512 = vunpack.c.l.b16 %v416
        %v513 = vunpack.c.l.b16 %v417
        %v514 = vunpack.c.l.b16 %v418
        %v515 = vunpack.c.l.b16 %v419
        %v516 = vunpack.c.l.b16 %v420
        %v517 = vpack.c.b16 %v470, %v469
        %v518 = vpack.c.b16 %v471, %v471
        %v519 = vpack.c.b16 %v473, %v472
        %v520 = vpack.c.b16 %v474, %v474
        %v521 = vpack.c.b16 %v476, %v475
        %v522 = vpack.c.b16 %v477, %v477
        %v523 = vpack.c.b16 %v479, %v478
        %v524 = vpack.c.b16 %v480, %v480
        %v525 = vpack.c.b16 %v482, %v481
        %v526 = vpack.c.b16 %v483, %v483
        %v527 = vpack.c.b16 %v485, %v484
        %v528 = vpack.c.b16 %v486, %v486
        %v529 = vpack.c.b16 %v488, %v487
        %v530 = vpack.c.b16 %v489, %v489
        %v531 = vpack.c.b16 %v491, %v490
        %v532 = vpack.c.b16 %v492, %v492
        %v533 = vpack.c.b16 %v494, %v493
        %v534 = vpack.c.b16 %v495, %v495
        %v535 = vpack.c.b16 %v497, %v496
        %v536 = vpack.c.b16 %v498, %v498
        %v537 = vpack.c.b16 %v500, %v499
        %v538 = vpack.c.b16 %v501, %v501
        %v539 = vpack.c.b16 %v503, %v502
        %v540 = vpack.c.b16 %v504, %v504
        %v541 = vpack.c.b16 %v506, %v505
        %v542 = vpack.c.b16 %v507, %v507
        %v543 = vpack.c.b16 %v509, %v508
        %v544 = vpack.c.b16 %v510, %v510
        %v545 = vpack.c.b16 %v512, %v511
        %v546 = vpack.c.b16 %v513, %v513
        %v547 = vpack.c.b16 %v515, %v514
        %v548 = vpack.c.b16 %v516, %v516
        %vm549 = vsmask.f32 7424
        %v551 = vshrl.u32 %v517, 16
        %v553 = vshll.u32 %v517, 16
        %v555 = vrot.slane %v553, 1
        %v556 = vor.u32 %v551, %v555
        %v558 = vshll.u32 %v518, 16
        %v560 = vrot.slane %v558, 1
        %v561 = vsel %vm549, %v556, %v560
        %v563 = vshrl.u32 %v519, 16
        %v565 = vshll.u32 %v519, 16
        %v567 = vrot.slane %v565, 1
        %v568 = vor.u32 %v563, %v567
        %v570 = vshll.u32 %v520, 16
        %v572 = vrot.slane %v570, 1
        %v573 = vsel %vm549, %v568, %v572
        %v575 = vshrl.u32 %v521, 16
        %v577 = vshll.u32 %v521, 16
        %v579 = vrot.slane %v577, 1
        %v580 = vor.u32 %v575, %v579
        %v582 = vshll.u32 %v522, 16
        %v584 = vrot.slane %v582, 1
        %v585 = vsel %vm549, %v580, %v584
        %v587 = vshrl.u32 %v523, 16
        %v589 = vshll.u32 %v523, 16
        %v591 = vrot.slane %v589, 1
        %v592 = vor.u32 %v587, %v591
        %v594 = vshll.u32 %v524, 16
        %v596 = vrot.slane %v594, 1
        %v597 = vsel %vm549, %v592, %v596
        %v599 = vshrl.u32 %v525, 16
        %v601 = vshll.u32 %v525, 16
        %v603 = vrot.slane %v601, 1
        %v604 = vor.u32 %v599, %v603
        %v606 = vshll.u32 %v526, 16
        %v608 = vrot.slane %v606, 1
        %v609 = vsel %vm549, %v604, %v608
        %v611 = vshrl.u32 %v527, 16
        %v613 = vshll.u32 %v527, 16
        %v615 = vrot.slane %v613, 1
        %v616 = vor.u32 %v611, %v615
        %v618 = vshll.u32 %v528, 16
        %v620 = vrot.slane %v618, 1
        %v621 = vsel %vm549, %v616, %v620
        %v623 = vshrl.u32 %v529, 16
        %v625 = vshll.u32 %v529, 16
        %v627 = vrot.slane %v625, 1
        %v628 = vor.u32 %v623, %v627
        %v630 = vshll.u32 %v530, 16
        %v632 = vrot.slane %v630, 1
        %v633 = vsel %vm549, %v628, %v632
        %v635 = vshrl.u32 %v531, 16
        %v637 = vshll.u32 %v531, 16
        %v639 = vrot.slane %v637, 1
        %v640 = vor.u32 %v635, %v639
        %v642 = vshll.u32 %v532, 16
        %v644 = vrot.slane %v642, 1
        %v645 = vsel %vm549, %v640, %v644
        %v647 = vshrl.u32 %v533, 16
        %v649 = vshll.u32 %v533, 16
        %v651 = vrot.slane %v649, 1
        %v652 = vor.u32 %v647, %v651
        %v654 = vshll.u32 %v534, 16
        %v656 = vrot.slane %v654, 1
        %v657 = vsel %vm549, %v652, %v656
        %v659 = vshrl.u32 %v535, 16
        %v661 = vshll.u32 %v535, 16
        %v663 = vrot.slane %v661, 1
        %v664 = vor.u32 %v659, %v663
        %v666 = vshll.u32 %v536, 16
        %v668 = vrot.slane %v666, 1
        %v669 = vsel %vm549, %v664, %v668
        %v671 = vshrl.u32 %v537, 16
        %v673 = vshll.u32 %v537, 16
        %v675 = vrot.slane %v673, 1
        %v676 = vor.u32 %v671, %v675
        %v678 = vshll.u32 %v538, 16
        %v680 = vrot.slane %v678, 1
        %v681 = vsel %vm549, %v676, %v680
        %v683 = vshrl.u32 %v539, 16
        %v685 = vshll.u32 %v539, 16
        %v687 = vrot.slane %v685, 1
        %v688 = vor.u32 %v683, %v687
        %v690 = vshll.u32 %v540, 16
        %v692 = vrot.slane %v690, 1
        %v693 = vsel %vm549, %v688, %v692
        %v695 = vshrl.u32 %v541, 16
        %v697 = vshll.u32 %v541, 16
        %v699 = vrot.slane %v697, 1
        %v700 = vor.u32 %v695, %v699
        %v702 = vshll.u32 %v542, 16
        %v704 = vrot.slane %v702, 1
        %v705 = vsel %vm549, %v700, %v704
        %v707 = vshrl.u32 %v543, 16
        %v709 = vshll.u32 %v543, 16
        %v711 = vrot.slane %v709, 1
        %v712 = vor.u32 %v707, %v711
        %v714 = vshll.u32 %v544, 16
        %v716 = vrot.slane %v714, 1
        %v717 = vsel %vm549, %v712, %v716
        %v719 = vshrl.u32 %v545, 16
        %v721 = vshll.u32 %v545, 16
        %v723 = vrot.slane %v721, 1
        %v724 = vor.u32 %v719, %v723
        %v726 = vshll.u32 %v546, 16
        %v728 = vrot.slane %v726, 1
        %v729 = vsel %vm549, %v724, %v728
        %v731 = vshrl.u32 %v547, 16
        %v733 = vshll.u32 %v547, 16
        %v735 = vrot.slane %v733, 1
        %v736 = vor.u32 %v731, %v735
        %v738 = vshll.u32 %v548, 16
        %v740 = vrot.slane %v738, 1
        %v741 = vsel %vm549, %v736, %v740
        %758 = vst [vmem:[#allocation2 + $0x8] sm:$0xff] %v561
        %759 = vst [vmem:[#allocation2 + $0x50] sm:$0xff] %v573
        %760 = vst [vmem:[#allocation2 + $0x98] sm:$0xff] %v585
        %761 = vst [vmem:[#allocation2 + $0xe0] sm:$0xff] %v597
        %762 = vst [vmem:[#allocation2 + $0x128] sm:$0xff] %v609
        %763 = vst [vmem:[#allocation2 + $0x170] sm:$0xff] %v621
        %764 = vst [vmem:[#allocation2 + $0x1b8] sm:$0xff] %v633
        %765 = vst [vmem:[#allocation2 + $0x200] sm:$0xff] %v645
        %766 = vst [vmem:[#allocation2 + $0x248] sm:$0xff] %v657
        %767 = vst [vmem:[#allocation2 + $0x290] sm:$0xff] %v669
        %768 = vst [vmem:[#allocation2 + $0x2d8] sm:$0xff] %v681
        %769 = vst [vmem:[#allocation2 + $0x320] sm:$0xff] %v693
        %770 = vst [vmem:[#allocation2 + $0x368] sm:$0xff] %v705
        %771 = vst [vmem:[#allocation2 + $0x3b0] sm:$0xff] %v717
        %772 = vst [vmem:[#allocation2 + $0x3f8] sm:$0xff] %v729
        %773 = vst [vmem:[#allocation2 + $0x440] sm:$0xff] %v741
        %v774 = vld [vmem:[%s228] sm:$0xe]
        %v775 = vld [vmem:[%s228 + $0x4] sm:$0xf]
        %v776 = vld [vmem:[%s228 + $0x8] sm:$0x1]
        %v777 = vld [vmem:[%s228 + $0xc] sm:$0xe]
        %v778 = vld [vmem:[%s228 + $0x10] sm:$0xf]
        %v779 = vld [vmem:[%s228 + $0x14] sm:$0x1]
        %v780 = vld [vmem:[%s228 + $0x18] sm:$0xe]
        %v781 = vld [vmem:[%s228 + $0x1c] sm:$0xf]
        %v782 = vld [vmem:[%s228 + $0x20] sm:$0x1]
        %v783 = vld [vmem:[%s228 + $0x24] sm:$0xe]
        %v784 = vld [vmem:[%s228 + $0x28] sm:$0xf]
        %v785 = vld [vmem:[%s228 + $0x2c] sm:$0x1]
        %v786 = vld [vmem:[%s228 + $0x30] sm:$0xe]
        %v787 = vld [vmem:[%s228 + $0x34] sm:$0xf]
        %v788 = vld [vmem:[%s228 + $0x38] sm:$0x1]
        %v789 = vld [vmem:[%s228 + $0x3c] sm:$0xe]
        %v790 = vld [vmem:[%s228 + $0x40] sm:$0xf]
        %v791 = vld [vmem:[%s228 + $0x44] sm:$0x1]
        %v792 = vld [vmem:[%s228 + $0x48] sm:$0xe]
        %v793 = vld [vmem:[%s228 + $0x4c] sm:$0xf]
        %v794 = vld [vmem:[%s228 + $0x50] sm:$0x1]
        %v795 = vld [vmem:[%s228 + $0x54] sm:$0xe]
        %v796 = vld [vmem:[%s228 + $0x58] sm:$0xf]
        %v797 = vld [vmem:[%s228 + $0x5c] sm:$0x1]
        %v798 = vld [vmem:[%s228 + $0x60] sm:$0xe]
        %v799 = vld [vmem:[%s228 + $0x64] sm:$0xf]
        %v800 = vld [vmem:[%s228 + $0x68] sm:$0x1]
        %v801 = vld [vmem:[%s228 + $0x6c] sm:$0xe]
        %v802 = vld [vmem:[%s228 + $0x70] sm:$0xf]
        %v803 = vld [vmem:[%s228 + $0x74] sm:$0x1]
        %v804 = vld [vmem:[%s228 + $0x78] sm:$0xe]
        %v805 = vld [vmem:[%s228 + $0x7c] sm:$0xf]
        %v806 = vld [vmem:[%s228 + $0x80] sm:$0x1]
        %v807 = vld [vmem:[%s228 + $0x84] sm:$0xe]
        %v808 = vld [vmem:[%s228 + $0x88] sm:$0xf]
        %v809 = vld [vmem:[%s228 + $0x8c] sm:$0x1]
        %v810 = vld [vmem:[%s228 + $0x90] sm:$0xe]
        %v811 = vld [vmem:[%s228 + $0x94] sm:$0xf]
        %v812 = vld [vmem:[%s228 + $0x98] sm:$0x1]
        %v813 = vld [vmem:[%s228 + $0x9c] sm:$0xe]
        %v814 = vld [vmem:[%s228 + $0xa0] sm:$0xf]
        %v815 = vld [vmem:[%s228 + $0xa4] sm:$0x1]
        %v816 = vld [vmem:[%s228 + $0xa8] sm:$0xe]
        %v817 = vld [vmem:[%s228 + $0xac] sm:$0xf]
        %v818 = vld [vmem:[%s228 + $0xb0] sm:$0x1]
        %v819 = vld [vmem:[%s228 + $0xb4] sm:$0xe]
        %v820 = vld [vmem:[%s228 + $0xb8] sm:$0xf]
        %v821 = vld [vmem:[%s228 + $0xbc] sm:$0x1]
        %v870 = vunpack.c.l.b16 %v774
        %v871 = vunpack.c.l.b16 %v775
        %v872 = vunpack.c.l.b16 %v776
        %v873 = vunpack.c.l.b16 %v777
        %v874 = vunpack.c.l.b16 %v778
        %v875 = vunpack.c.l.b16 %v779
        %v876 = vunpack.c.l.b16 %v780
        %v877 = vunpack.c.l.b16 %v781
        %v878 = vunpack.c.l.b16 %v782
        %v879 = vunpack.c.l.b16 %v783
        %v880 = vunpack.c.l.b16 %v784
        %v881 = vunpack.c.l.b16 %v785
        %v882 = vunpack.c.l.b16 %v786
        %v883 = vunpack.c.l.b16 %v787
        %v884 = vunpack.c.l.b16 %v788
        %v885 = vunpack.c.l.b16 %v789
        %v886 = vunpack.c.l.b16 %v790
        %v887 = vunpack.c.l.b16 %v791
        %v888 = vunpack.c.l.b16 %v792
        %v889 = vunpack.c.l.b16 %v793
        %v890 = vunpack.c.l.b16 %v794
        %v891 = vunpack.c.l.b16 %v795
        %v892 = vunpack.c.l.b16 %v796
        %v893 = vunpack.c.l.b16 %v797
        %v894 = vunpack.c.l.b16 %v798
        %v895 = vunpack.c.l.b16 %v799
        %v896 = vunpack.c.l.b16 %v800
        %v897 = vunpack.c.l.b16 %v801
        %v898 = vunpack.c.l.b16 %v802
        %v899 = vunpack.c.l.b16 %v803
        %v900 = vunpack.c.l.b16 %v804
        %v901 = vunpack.c.l.b16 %v805
        %v902 = vunpack.c.l.b16 %v806
        %v903 = vunpack.c.l.b16 %v807
        %v904 = vunpack.c.l.b16 %v808
        %v905 = vunpack.c.l.b16 %v809
        %v906 = vunpack.c.l.b16 %v810
        %v907 = vunpack.c.l.b16 %v811
        %v908 = vunpack.c.l.b16 %v812
        %v909 = vunpack.c.l.b16 %v813
        %v910 = vunpack.c.l.b16 %v814
        %v911 = vunpack.c.l.b16 %v815
        %v912 = vunpack.c.l.b16 %v816
        %v913 = vunpack.c.l.b16 %v817
        %v914 = vunpack.c.l.b16 %v818
        %v915 = vunpack.c.l.b16 %v819
        %v916 = vunpack.c.l.b16 %v820
        %v917 = vunpack.c.l.b16 %v821
        %v918 = vpack.c.b16 %v871, %v870
        %v919 = vpack.c.b16 %v872, %v872
        %v920 = vpack.c.b16 %v874, %v873
        %v921 = vpack.c.b16 %v875, %v875
        %v922 = vpack.c.b16 %v877, %v876
        %v923 = vpack.c.b16 %v878, %v878
        %v924 = vpack.c.b16 %v880, %v879
        %v925 = vpack.c.b16 %v881, %v881
        %v926 = vpack.c.b16 %v883, %v882
        %v927 = vpack.c.b16 %v884, %v884
        %v928 = vpack.c.b16 %v886, %v885
        %v929 = vpack.c.b16 %v887, %v887
        %v930 = vpack.c.b16 %v889, %v888
        %v931 = vpack.c.b16 %v890, %v890
        %v932 = vpack.c.b16 %v892, %v891
        %v933 = vpack.c.b16 %v893, %v893
        %v934 = vpack.c.b16 %v895, %v894
        %v935 = vpack.c.b16 %v896, %v896
        %v936 = vpack.c.b16 %v898, %v897
        %v937 = vpack.c.b16 %v899, %v899
        %v938 = vpack.c.b16 %v901, %v900
        %v939 = vpack.c.b16 %v902, %v902
        %v940 = vpack.c.b16 %v904, %v903
        %v941 = vpack.c.b16 %v905, %v905
        %v942 = vpack.c.b16 %v907, %v906
        %v943 = vpack.c.b16 %v908, %v908
        %v944 = vpack.c.b16 %v910, %v909
        %v945 = vpack.c.b16 %v911, %v911
        %v946 = vpack.c.b16 %v913, %v912
        %v947 = vpack.c.b16 %v914, %v914
        %v948 = vpack.c.b16 %v916, %v915
        %v949 = vpack.c.b16 %v917, %v917
        %vm950 = vcmask 1046528
        %v951 = vrot.slane %v918, 1
        %v952 = vrot.slane %v919, 1
        %v953 = vsel %vm950, %v951, %v952
        %v954 = vrot.slane %v920, 1
        %v955 = vrot.slane %v921, 1
        %v956 = vsel %vm950, %v954, %v955
        %v957 = vrot.slane %v922, 1
        %v958 = vrot.slane %v923, 1
        %v959 = vsel %vm950, %v957, %v958
        %v960 = vrot.slane %v924, 1
        %v961 = vrot.slane %v925, 1
        %v962 = vsel %vm950, %v960, %v961
        %v963 = vrot.slane %v926, 1
        %v964 = vrot.slane %v927, 1
        %v965 = vsel %vm950, %v963, %v964
        %v966 = vrot.slane %v928, 1
        %v967 = vrot.slane %v929, 1
        %v968 = vsel %vm950, %v966, %v967
        %v969 = vrot.slane %v930, 1
        %v970 = vrot.slane %v931, 1
        %v971 = vsel %vm950, %v969, %v970
        %v972 = vrot.slane %v932, 1
        %v973 = vrot.slane %v933, 1
        %v974 = vsel %vm950, %v972, %v973
        %v975 = vrot.slane %v934, 1
        %v976 = vrot.slane %v935, 1
        %v977 = vsel %vm950, %v975, %v976
        %v978 = vrot.slane %v936, 1
        %v979 = vrot.slane %v937, 1
        %v980 = vsel %vm950, %v978, %v979
        %v981 = vrot.slane %v938, 1
        %v982 = vrot.slane %v939, 1
        %v983 = vsel %vm950, %v981, %v982
        %v984 = vrot.slane %v940, 1
        %v985 = vrot.slane %v941, 1
        %v986 = vsel %vm950, %v984, %v985
        %v987 = vrot.slane %v942, 1
        %v988 = vrot.slane %v943, 1
        %v989 = vsel %vm950, %v987, %v988
        %v990 = vrot.slane %v944, 1
        %v991 = vrot.slane %v945, 1
        %v992 = vsel %vm950, %v990, %v991
        %v993 = vrot.slane %v946, 1
        %v994 = vrot.slane %v947, 1
        %v995 = vsel %vm950, %v993, %v994
        %v996 = vrot.slane %v948, 1
        %v997 = vrot.slane %v949, 1
        %v998 = vsel %vm950, %v996, %v997
        %1015 = vst [vmem:[#allocation2 + $0x10] sm:$0xff] %v953
        %1016 = vst [vmem:[#allocation2 + $0x58] sm:$0xff] %v956
        %1017 = vst [vmem:[#allocation2 + $0xa0] sm:$0xff] %v959
        %1018 = vst [vmem:[#allocation2 + $0xe8] sm:$0xff] %v962
        %1019 = vst [vmem:[#allocation2 + $0x130] sm:$0xff] %v965
        %1020 = vst [vmem:[#allocation2 + $0x178] sm:$0xff] %v968
        %1021 = vst [vmem:[#allocation2 + $0x1c0] sm:$0xff] %v971
        %1022 = vst [vmem:[#allocation2 + $0x208] sm:$0xff] %v974
        %1023 = vst [vmem:[#allocation2 + $0x250] sm:$0xff] %v977
        %1024 = vst [vmem:[#allocation2 + $0x298] sm:$0xff] %v980
        %1025 = vst [vmem:[#allocation2 + $0x2e0] sm:$0xff] %v983
        %1026 = vst [vmem:[#allocation2 + $0x328] sm:$0xff] %v986
        %1027 = vst [vmem:[#allocation2 + $0x370] sm:$0xff] %v989
        %1028 = vst [vmem:[#allocation2 + $0x3b8] sm:$0xff] %v992
        %1029 = vst [vmem:[#allocation2 + $0x400] sm:$0xff] %v995
        %1030 = vst [vmem:[#allocation2 + $0x448] sm:$0xff] %v998
        %v1031 = vld [vmem:[#allocation2] sm:$0xff]
        %v1032 = vld [vmem:[#allocation2 + $0x8] sm:$0xff]
        %v1033 = vld [vmem:[#allocation2 + $0x10] sm:$0xff]
        %v1034 = vld [vmem:[#allocation2 + $0x48] sm:$0xff]
        %v1035 = vld [vmem:[#allocation2 + $0x50] sm:$0xff]
        %v1036 = vld [vmem:[#allocation2 + $0x58] sm:$0xff]
        %v1037 = vld [vmem:[#allocation2 + $0x90] sm:$0xff]
        %v1038 = vld [vmem:[#allocation2 + $0x98] sm:$0xff]
        %v1039 = vld [vmem:[#allocation2 + $0xa0] sm:$0xff]
        %v1040 = vld [vmem:[#allocation2 + $0xd8] sm:$0xff]
        %v1041 = vld [vmem:[#allocation2 + $0xe0] sm:$0xff]
        %v1042 = vld [vmem:[#allocation2 + $0xe8] sm:$0xff]
        %v1043 = vld [vmem:[#allocation2 + $0x120] sm:$0xff]
        %v1044 = vld [vmem:[#allocation2 + $0x128] sm:$0xff]
        %v1045 = vld [vmem:[#allocation2 + $0x130] sm:$0xff]
        %v1046 = vld [vmem:[#allocation2 + $0x168] sm:$0xff]
        %v1047 = vld [vmem:[#allocation2 + $0x170] sm:$0xff]
        %v1048 = vld [vmem:[#allocation2 + $0x178] sm:$0xff]
        %v1049 = vld [vmem:[#allocation2 + $0x1b0] sm:$0xff]
        %v1050 = vld [vmem:[#allocation2 + $0x1b8] sm:$0xff]
        %v1051 = vld [vmem:[#allocation2 + $0x1c0] sm:$0xff]
        %v1052 = vld [vmem:[#allocation2 + $0x1f8] sm:$0xff]
        %v1053 = vld [vmem:[#allocation2 + $0x200] sm:$0xff]
        %v1054 = vld [vmem:[#allocation2 + $0x208] sm:$0xff]
        %v1055 = vld [vmem:[#allocation2 + $0x240] sm:$0xff]
        %v1056 = vld [vmem:[#allocation2 + $0x248] sm:$0xff]
        %v1057 = vld [vmem:[#allocation2 + $0x250] sm:$0xff]
        %v1058 = vld [vmem:[#allocation2 + $0x288] sm:$0xff]
        %v1059 = vld [vmem:[#allocation2 + $0x290] sm:$0xff]
        %v1060 = vld [vmem:[#allocation2 + $0x298] sm:$0xff]
        %v1061 = vld [vmem:[#allocation2 + $0x2d0] sm:$0xff]
        %v1062 = vld [vmem:[#allocation2 + $0x2d8] sm:$0xff]
        %v1063 = vld [vmem:[#allocation2 + $0x2e0] sm:$0xff]
        %v1064 = vld [vmem:[#allocation2 + $0x318] sm:$0xff]
        %v1065 = vld [vmem:[#allocation2 + $0x320] sm:$0xff]
        %v1066 = vld [vmem:[#allocation2 + $0x328] sm:$0xff]
        %v1067 = vld [vmem:[#allocation2 + $0x360] sm:$0xff]
        %v1068 = vld [vmem:[#allocation2 + $0x368] sm:$0xff]
        %v1069 = vld [vmem:[#allocation2 + $0x370] sm:$0xff]
        %v1070 = vld [vmem:[#allocation2 + $0x3a8] sm:$0xff]
        %v1071 = vld [vmem:[#allocation2 + $0x3b0] sm:$0xff]
        %v1072 = vld [vmem:[#allocation2 + $0x3b8] sm:$0xff]
        %v1073 = vld [vmem:[#allocation2 + $0x3f0] sm:$0xff]
        %v1074 = vld [vmem:[#allocation2 + $0x3f8] sm:$0xff]
        %v1075 = vld [vmem:[#allocation2 + $0x400] sm:$0xff]
        %v1076 = vld [vmem:[#allocation2 + $0x438] sm:$0xff]
        %v1077 = vld [vmem:[#allocation2 + $0x440] sm:$0xff]
        %v1078 = vld [vmem:[#allocation2 + $0x448] sm:$0xff]
        %v1079 = vld [vmem:[%s219] sm:$0xf]
        %v1080 = vld [vmem:[%s219 + $0x4] sm:$0xf]
        %v1081 = vld [vmem:[%s219 + $0x8] sm:$0xf]
        %v1082 = vld [vmem:[%s219 + $0xc] sm:$0xf]
        %v1083 = vld [vmem:[%s219 + $0x10] sm:$0xf]
        %v1084 = vld [vmem:[%s219 + $0x14] sm:$0xf]
        %v1085 = vld [vmem:[%s219 + $0x18] sm:$0xf]
        %v1086 = vld [vmem:[%s219 + $0x1c] sm:$0xf]
        %v1087 = vld [vmem:[%s219 + $0x20] sm:$0xf]
        %v1088 = vld [vmem:[%s219 + $0x24] sm:$0xf]
        %v1089 = vld [vmem:[%s219 + $0x28] sm:$0xf]
        %v1090 = vld [vmem:[%s219 + $0x2c] sm:$0xf]
        %v1091 = vld [vmem:[%s219 + $0x30] sm:$0xf]
        %v1092 = vld [vmem:[%s219 + $0x34] sm:$0xf]
        %v1093 = vld [vmem:[%s219 + $0x38] sm:$0xf]
        %v1094 = vld [vmem:[%s219 + $0x3c] sm:$0xf]
        %v1095 = vld [vmem:[%s219 + $0x40] sm:$0xf]
        %v1096 = vld [vmem:[%s219 + $0x44] sm:$0xf]
        %v1097 = vld [vmem:[%s219 + $0x48] sm:$0xf]
        %v1098 = vld [vmem:[%s219 + $0x4c] sm:$0xf]
        %v1099 = vld [vmem:[%s219 + $0x50] sm:$0xf]
        %v1100 = vld [vmem:[%s219 + $0x54] sm:$0xf]
        %v1101 = vld [vmem:[%s219 + $0x58] sm:$0xf]
        %v1102 = vld [vmem:[%s219 + $0x5c] sm:$0xf]
        %v1103 = vld [vmem:[%s219 + $0x60] sm:$0xf]
        %v1104 = vld [vmem:[%s219 + $0x64] sm:$0xf]
        %v1105 = vld [vmem:[%s219 + $0x68] sm:$0xf]
        %v1106 = vld [vmem:[%s219 + $0x6c] sm:$0xf]
        %v1107 = vld [vmem:[%s219 + $0x70] sm:$0xf]
        %v1108 = vld [vmem:[%s219 + $0x74] sm:$0xf]
        %v1109 = vld [vmem:[%s219 + $0x78] sm:$0xf]
        %v1110 = vld [vmem:[%s219 + $0x7c] sm:$0xf]
        %v1111 = vld [vmem:[%s219 + $0x80] sm:$0xf]
        %v1112 = vld [vmem:[%s219 + $0x84] sm:$0xf]
        %v1113 = vld [vmem:[%s219 + $0x88] sm:$0xf]
        %v1114 = vld [vmem:[%s219 + $0x8c] sm:$0xf]
        %v1115 = vld [vmem:[%s219 + $0x90] sm:$0xf]
        %v1116 = vld [vmem:[%s219 + $0x94] sm:$0xf]
        %v1117 = vld [vmem:[%s219 + $0x98] sm:$0xf]
        %v1118 = vld [vmem:[%s219 + $0x9c] sm:$0xf]
        %v1119 = vld [vmem:[%s219 + $0xa0] sm:$0xf]
        %v1120 = vld [vmem:[%s219 + $0xa4] sm:$0xf]
        %v1121 = vld [vmem:[%s219 + $0xa8] sm:$0xf]
        %v1122 = vld [vmem:[%s219 + $0xac] sm:$0xf]
        %v1123 = vld [vmem:[%s219 + $0xb0] sm:$0xf]
        %v1124 = vld [vmem:[%s219 + $0xb4] sm:$0xf]
        %v1125 = vld [vmem:[%s219 + $0xb8] sm:$0xf]
        %v1126 = vld [vmem:[%s219 + $0xbc] sm:$0xf]
        %s1127 = sadd.s32 %s225, 1
        %s1128 = smul.u32 %s1127, 3
        %s1129 = smul.addr %s1128, 4
        %s1130 = scalar_lea.vmem %s215, %s1129
        %v1131 = vld [vmem:[%s1130] sm:$0xf]
        %v1132 = vld [vmem:[%s1130 + $0x4] sm:$0xf]
        %v1133 = vld [vmem:[%s1130 + $0xc] sm:$0xf]
        %v1134 = vld [vmem:[%s1130 + $0x10] sm:$0xf]
        %v1135 = vld [vmem:[%s1130 + $0x18] sm:$0xf]
        %v1136 = vld [vmem:[%s1130 + $0x1c] sm:$0xf]
        %v1137 = vld [vmem:[%s1130 + $0x24] sm:$0xf]
        %v1138 = vld [vmem:[%s1130 + $0x28] sm:$0xf]
        %v1139 = vld [vmem:[%s1130 + $0x30] sm:$0xf]
        %v1140 = vld [vmem:[%s1130 + $0x34] sm:$0xf]
        %v1141 = vld [vmem:[%s1130 + $0x3c] sm:$0xf]
        %v1142 = vld [vmem:[%s1130 + $0x40] sm:$0xf]
        %v1143 = vld [vmem:[%s1130 + $0x48] sm:$0xf]
        %v1144 = vld [vmem:[%s1130 + $0x4c] sm:$0xf]
        %v1145 = vld [vmem:[%s1130 + $0x54] sm:$0xf]
        %v1146 = vld [vmem:[%s1130 + $0x58] sm:$0xf]
        %v1147 = vld [vmem:[%s1130 + $0x60] sm:$0xf]
        %v1148 = vld [vmem:[%s1130 + $0x64] sm:$0xf]
        %v1149 = vld [vmem:[%s1130 + $0x6c] sm:$0xf]
        %v1150 = vld [vmem:[%s1130 + $0x70] sm:$0xf]
        %v1151 = vld [vmem:[%s1130 + $0x78] sm:$0xf]
        %v1152 = vld [vmem:[%s1130 + $0x7c] sm:$0xf]
        %v1153 = vld [vmem:[%s1130 + $0x84] sm:$0xf]
        %v1154 = vld [vmem:[%s1130 + $0x88] sm:$0xf]
        %v1155 = vld [vmem:[%s1130 + $0x90] sm:$0xf]
        %v1156 = vld [vmem:[%s1130 + $0x94] sm:$0xf]
        %v1157 = vld [vmem:[%s1130 + $0x9c] sm:$0xf]
        %v1158 = vld [vmem:[%s1130 + $0xa0] sm:$0xf]
        %v1159 = vld [vmem:[%s1130 + $0xa8] sm:$0xf]
        %v1160 = vld [vmem:[%s1130 + $0xac] sm:$0xf]
        %v1161 = vld [vmem:[%s1130 + $0xb4] sm:$0xf]
        %v1162 = vld [vmem:[%s1130 + $0xb8] sm:$0xf]
        %v1195 = vunpack.c.l.b16 %v1131
        %v1196 = vunpack.c.l.b16 %v1132
        %v1197 = vunpack.c.l.b16 %v1133
        %v1198 = vunpack.c.l.b16 %v1134
        %v1199 = vunpack.c.l.b16 %v1135
        %v1200 = vunpack.c.l.b16 %v1136
        %v1201 = vunpack.c.l.b16 %v1137
        %v1202 = vunpack.c.l.b16 %v1138
        %v1203 = vunpack.c.l.b16 %v1139
        %v1204 = vunpack.c.l.b16 %v1140
        %v1205 = vunpack.c.l.b16 %v1141
        %v1206 = vunpack.c.l.b16 %v1142
        %v1207 = vunpack.c.l.b16 %v1143
        %v1208 = vunpack.c.l.b16 %v1144
        %v1209 = vunpack.c.l.b16 %v1145
        %v1210 = vunpack.c.l.b16 %v1146
        %v1211 = vunpack.c.l.b16 %v1147
        %v1212 = vunpack.c.l.b16 %v1148
        %v1213 = vunpack.c.l.b16 %v1149
        %v1214 = vunpack.c.l.b16 %v1150
        %v1215 = vunpack.c.l.b16 %v1151
        %v1216 = vunpack.c.l.b16 %v1152
        %v1217 = vunpack.c.l.b16 %v1153
        %v1218 = vunpack.c.l.b16 %v1154
        %v1219 = vunpack.c.l.b16 %v1155
        %v1220 = vunpack.c.l.b16 %v1156
        %v1221 = vunpack.c.l.b16 %v1157
        %v1222 = vunpack.c.l.b16 %v1158
        %v1223 = vunpack.c.l.b16 %v1159
        %v1224 = vunpack.c.l.b16 %v1160
        %v1225 = vunpack.c.l.b16 %v1161
        %v1226 = vunpack.c.l.b16 %v1162
        %v1227 = vpack.c.b16 %v1196, %v1195
        %v1228 = vpack.c.b16 %v1198, %v1197
        %v1229 = vpack.c.b16 %v1200, %v1199
        %v1230 = vpack.c.b16 %v1202, %v1201
        %v1231 = vpack.c.b16 %v1204, %v1203
        %v1232 = vpack.c.b16 %v1206, %v1205
        %v1233 = vpack.c.b16 %v1208, %v1207
        %v1234 = vpack.c.b16 %v1210, %v1209
        %v1235 = vpack.c.b16 %v1212, %v1211
        %v1236 = vpack.c.b16 %v1214, %v1213
        %v1237 = vpack.c.b16 %v1216, %v1215
        %v1238 = vpack.c.b16 %v1218, %v1217
        %v1239 = vpack.c.b16 %v1220, %v1219
        %v1240 = vpack.c.b16 %v1222, %v1221
        %v1241 = vpack.c.b16 %v1224, %v1223
        %v1242 = vpack.c.b16 %v1226, %v1225
        %1259 = vst [vmem:[#allocation2 + $0x18] sm:$0xff] %v1227
        %1260 = vst [vmem:[#allocation2 + $0x60] sm:$0xff] %v1228
        %1261 = vst [vmem:[#allocation2 + $0xa8] sm:$0xff] %v1229
        %1262 = vst [vmem:[#allocation2 + $0xf0] sm:$0xff] %v1230
        %1263 = vst [vmem:[#allocation2 + $0x138] sm:$0xff] %v1231
        %1264 = vst [vmem:[#allocation2 + $0x180] sm:$0xff] %v1232
        %1265 = vst [vmem:[#allocation2 + $0x1c8] sm:$0xff] %v1233
        %1266 = vst [vmem:[#allocation2 + $0x210] sm:$0xff] %v1234
        %1267 = vst [vmem:[#allocation2 + $0x258] sm:$0xff] %v1235
        %1268 = vst [vmem:[#allocation2 + $0x2a0] sm:$0xff] %v1236
        %1269 = vst [vmem:[#allocation2 + $0x2e8] sm:$0xff] %v1237
        %1270 = vst [vmem:[#allocation2 + $0x330] sm:$0xff] %v1238
        %1271 = vst [vmem:[#allocation2 + $0x378] sm:$0xff] %v1239
        %1272 = vst [vmem:[#allocation2 + $0x3c0] sm:$0xff] %v1240
        %1273 = vst [vmem:[#allocation2 + $0x408] sm:$0xff] %v1241
        %1274 = vst [vmem:[#allocation2 + $0x450] sm:$0xff] %v1242
        %v1275 = vld [vmem:[%s1130] sm:$0xf]
        %v1276 = vld [vmem:[%s1130 + $0x4] sm:$0xf]
        %v1277 = vld [vmem:[%s1130 + $0x8] sm:$0x1]
        %v1278 = vld [vmem:[%s1130 + $0xc] sm:$0xf]
        %v1279 = vld [vmem:[%s1130 + $0x10] sm:$0xf]
        %v1280 = vld [vmem:[%s1130 + $0x14] sm:$0x1]
        %v1281 = vld [vmem:[%s1130 + $0x18] sm:$0xf]
        %v1282 = vld [vmem:[%s1130 + $0x1c] sm:$0xf]
        %v1283 = vld [vmem:[%s1130 + $0x20] sm:$0x1]
        %v1284 = vld [vmem:[%s1130 + $0x24] sm:$0xf]
        %v1285 = vld [vmem:[%s1130 + $0x28] sm:$0xf]
        %v1286 = vld [vmem:[%s1130 + $0x2c] sm:$0x1]
        %v1287 = vld [vmem:[%s1130 + $0x30] sm:$0xf]
        %v1288 = vld [vmem:[%s1130 + $0x34] sm:$0xf]
        %v1289 = vld [vmem:[%s1130 + $0x38] sm:$0x1]
        %v1290 = vld [vmem:[%s1130 + $0x3c] sm:$0xf]
        %v1291 = vld [vmem:[%s1130 + $0x40] sm:$0xf]
        %v1292 = vld [vmem:[%s1130 + $0x44] sm:$0x1]
        %v1293 = vld [vmem:[%s1130 + $0x48] sm:$0xf]
        %v1294 = vld [vmem:[%s1130 + $0x4c] sm:$0xf]
        %v1295 = vld [vmem:[%s1130 + $0x50] sm:$0x1]
        %v1296 = vld [vmem:[%s1130 + $0x54] sm:$0xf]
        %v1297 = vld [vmem:[%s1130 + $0x58] sm:$0xf]
        %v1298 = vld [vmem:[%s1130 + $0x5c] sm:$0x1]
        %v1299 = vld [vmem:[%s1130 + $0x60] sm:$0xf]
        %v1300 = vld [vmem:[%s1130 + $0x64] sm:$0xf]
        %v1301 = vld [vmem:[%s1130 + $0x68] sm:$0x1]
        %v1302 = vld [vmem:[%s1130 + $0x6c] sm:$0xf]
        %v1303 = vld [vmem:[%s1130 + $0x70] sm:$0xf]
        %v1304 = vld [vmem:[%s1130 + $0x74] sm:$0x1]
        %v1305 = vld [vmem:[%s1130 + $0x78] sm:$0xf]
        %v1306 = vld [vmem:[%s1130 + $0x7c] sm:$0xf]
        %v1307 = vld [vmem:[%s1130 + $0x80] sm:$0x1]
        %v1308 = vld [vmem:[%s1130 + $0x84] sm:$0xf]
        %v1309 = vld [vmem:[%s1130 + $0x88] sm:$0xf]
        %v1310 = vld [vmem:[%s1130 + $0x8c] sm:$0x1]
        %v1311 = vld [vmem:[%s1130 + $0x90] sm:$0xf]
        %v1312 = vld [vmem:[%s1130 + $0x94] sm:$0xf]
        %v1313 = vld [vmem:[%s1130 + $0x98] sm:$0x1]
        %v1314 = vld [vmem:[%s1130 + $0x9c] sm:$0xf]
        %v1315 = vld [vmem:[%s1130 + $0xa0] sm:$0xf]
        %v1316 = vld [vmem:[%s1130 + $0xa4] sm:$0x1]
        %v1317 = vld [vmem:[%s1130 + $0xa8] sm:$0xf]
        %v1318 = vld [vmem:[%s1130 + $0xac] sm:$0xf]
        %v1319 = vld [vmem:[%s1130 + $0xb0] sm:$0x1]
        %v1320 = vld [vmem:[%s1130 + $0xb4] sm:$0xf]
        %v1321 = vld [vmem:[%s1130 + $0xb8] sm:$0xf]
        %v1322 = vld [vmem:[%s1130 + $0xbc] sm:$0x1]
        %v1371 = vunpack.c.l.b16 %v1275
        %v1372 = vunpack.c.l.b16 %v1276
        %v1373 = vunpack.c.l.b16 %v1277
        %v1374 = vunpack.c.l.b16 %v1278
        %v1375 = vunpack.c.l.b16 %v1279
        %v1376 = vunpack.c.l.b16 %v1280
        %v1377 = vunpack.c.l.b16 %v1281
        %v1378 = vunpack.c.l.b16 %v1282
        %v1379 = vunpack.c.l.b16 %v1283
        %v1380 = vunpack.c.l.b16 %v1284
        %v1381 = vunpack.c.l.b16 %v1285
        %v1382 = vunpack.c.l.b16 %v1286
        %v1383 = vunpack.c.l.b16 %v1287
        %v1384 = vunpack.c.l.b16 %v1288
        %v1385 = vunpack.c.l.b16 %v1289
        %v1386 = vunpack.c.l.b16 %v1290
        %v1387 = vunpack.c.l.b16 %v1291
        %v1388 = vunpack.c.l.b16 %v1292
        %v1389 = vunpack.c.l.b16 %v1293
        %v1390 = vunpack.c.l.b16 %v1294
        %v1391 = vunpack.c.l.b16 %v1295
        %v1392 = vunpack.c.l.b16 %v1296
        %v1393 = vunpack.c.l.b16 %v1297
        %v1394 = vunpack.c.l.b16 %v1298
        %v1395 = vunpack.c.l.b16 %v1299
        %v1396 = vunpack.c.l.b16 %v1300
        %v1397 = vunpack.c.l.b16 %v1301
        %v1398 = vunpack.c.l.b16 %v1302
        %v1399 = vunpack.c.l.b16 %v1303
        %v1400 = vunpack.c.l.b16 %v1304
        %v1401 = vunpack.c.l.b16 %v1305
        %v1402 = vunpack.c.l.b16 %v1306
        %v1403 = vunpack.c.l.b16 %v1307
        %v1404 = vunpack.c.l.b16 %v1308
        %v1405 = vunpack.c.l.b16 %v1309
        %v1406 = vunpack.c.l.b16 %v1310
        %v1407 = vunpack.c.l.b16 %v1311
        %v1408 = vunpack.c.l.b16 %v1312
        %v1409 = vunpack.c.l.b16 %v1313
        %v1410 = vunpack.c.l.b16 %v1314
        %v1411 = vunpack.c.l.b16 %v1315
        %v1412 = vunpack.c.l.b16 %v1316
        %v1413 = vunpack.c.l.b16 %v1317
        %v1414 = vunpack.c.l.b16 %v1318
        %v1415 = vunpack.c.l.b16 %v1319
        %v1416 = vunpack.c.l.b16 %v1320
        %v1417 = vunpack.c.l.b16 %v1321
        %v1418 = vunpack.c.l.b16 %v1322
        %v1419 = vpack.c.b16 %v1372, %v1371
        %v1420 = vpack.c.b16 %v1373, %v1373
        %v1421 = vpack.c.b16 %v1375, %v1374
        %v1422 = vpack.c.b16 %v1376, %v1376
        %v1423 = vpack.c.b16 %v1378, %v1377
        %v1424 = vpack.c.b16 %v1379, %v1379
        %v1425 = vpack.c.b16 %v1381, %v1380
        %v1426 = vpack.c.b16 %v1382, %v1382
        %v1427 = vpack.c.b16 %v1384, %v1383
        %v1428 = vpack.c.b16 %v1385, %v1385
        %v1429 = vpack.c.b16 %v1387, %v1386
        %v1430 = vpack.c.b16 %v1388, %v1388
        %v1431 = vpack.c.b16 %v1390, %v1389
        %v1432 = vpack.c.b16 %v1391, %v1391
        %v1433 = vpack.c.b16 %v1393, %v1392
        %v1434 = vpack.c.b16 %v1394, %v1394
        %v1435 = vpack.c.b16 %v1396, %v1395
        %v1436 = vpack.c.b16 %v1397, %v1397
        %v1437 = vpack.c.b16 %v1399, %v1398
        %v1438 = vpack.c.b16 %v1400, %v1400
        %v1439 = vpack.c.b16 %v1402, %v1401
        %v1440 = vpack.c.b16 %v1403, %v1403
        %v1441 = vpack.c.b16 %v1405, %v1404
        %v1442 = vpack.c.b16 %v1406, %v1406
        %v1443 = vpack.c.b16 %v1408, %v1407
        %v1444 = vpack.c.b16 %v1409, %v1409
        %v1445 = vpack.c.b16 %v1411, %v1410
        %v1446 = vpack.c.b16 %v1412, %v1412
        %v1447 = vpack.c.b16 %v1414, %v1413
        %v1448 = vpack.c.b16 %v1415, %v1415
        %v1449 = vpack.c.b16 %v1417, %v1416
        %v1450 = vpack.c.b16 %v1418, %v1418
        %v1452 = vshrl.u32 %v1419, 16
        %v1454 = vshll.u32 %v1419, 16
        %v1456 = vrot.slane %v1454, 1
        %v1457 = vor.u32 %v1452, %v1456
        %v1459 = vshll.u32 %v1420, 16
        %v1461 = vrot.slane %v1459, 1
        %v1462 = vsel %vm549, %v1457, %v1461
        %v1464 = vshrl.u32 %v1421, 16
        %v1466 = vshll.u32 %v1421, 16
        %v1468 = vrot.slane %v1466, 1
        %v1469 = vor.u32 %v1464, %v1468
        %v1471 = vshll.u32 %v1422, 16
        %v1473 = vrot.slane %v1471, 1
        %v1474 = vsel %vm549, %v1469, %v1473
        %v1476 = vshrl.u32 %v1423, 16
        %v1478 = vshll.u32 %v1423, 16
        %v1480 = vrot.slane %v1478, 1
        %v1481 = vor.u32 %v1476, %v1480
        %v1483 = vshll.u32 %v1424, 16
        %v1485 = vrot.slane %v1483, 1
        %v1486 = vsel %vm549, %v1481, %v1485
        %v1488 = vshrl.u32 %v1425, 16
        %v1490 = vshll.u32 %v1425, 16
        %v1492 = vrot.slane %v1490, 1
        %v1493 = vor.u32 %v1488, %v1492
        %v1495 = vshll.u32 %v1426, 16
        %v1497 = vrot.slane %v1495, 1
        %v1498 = vsel %vm549, %v1493, %v1497
        %v1500 = vshrl.u32 %v1427, 16
        %v1502 = vshll.u32 %v1427, 16
        %v1504 = vrot.slane %v1502, 1
        %v1505 = vor.u32 %v1500, %v1504
        %v1507 = vshll.u32 %v1428, 16
        %v1509 = vrot.slane %v1507, 1
        %v1510 = vsel %vm549, %v1505, %v1509
        %v1512 = vshrl.u32 %v1429, 16
        %v1514 = vshll.u32 %v1429, 16
        %v1516 = vrot.slane %v1514, 1
        %v1517 = vor.u32 %v1512, %v1516
        %v1519 = vshll.u32 %v1430, 16
        %v1521 = vrot.slane %v1519, 1
        %v1522 = vsel %vm549, %v1517, %v1521
        %v1524 = vshrl.u32 %v1431, 16
        %v1526 = vshll.u32 %v1431, 16
        %v1528 = vrot.slane %v1526, 1
        %v1529 = vor.u32 %v1524, %v1528
        %v1531 = vshll.u32 %v1432, 16
        %v1533 = vrot.slane %v1531, 1
        %v1534 = vsel %vm549, %v1529, %v1533
        %v1536 = vshrl.u32 %v1433, 16
        %v1538 = vshll.u32 %v1433, 16
        %v1540 = vrot.slane %v1538, 1
        %v1541 = vor.u32 %v1536, %v1540
        %v1543 = vshll.u32 %v1434, 16
        %v1545 = vrot.slane %v1543, 1
        %v1546 = vsel %vm549, %v1541, %v1545
        %v1548 = vshrl.u32 %v1435, 16
        %v1550 = vshll.u32 %v1435, 16
        %v1552 = vrot.slane %v1550, 1
        %v1553 = vor.u32 %v1548, %v1552
        %v1555 = vshll.u32 %v1436, 16
        %v1557 = vrot.slane %v1555, 1
        %v1558 = vsel %vm549, %v1553, %v1557
        %v1560 = vshrl.u32 %v1437, 16
        %v1562 = vshll.u32 %v1437, 16
        %v1564 = vrot.slane %v1562, 1
        %v1565 = vor.u32 %v1560, %v1564
        %v1567 = vshll.u32 %v1438, 16
        %v1569 = vrot.slane %v1567, 1
        %v1570 = vsel %vm549, %v1565, %v1569
        %v1572 = vshrl.u32 %v1439, 16
        %v1574 = vshll.u32 %v1439, 16
        %v1576 = vrot.slane %v1574, 1
        %v1577 = vor.u32 %v1572, %v1576
        %v1579 = vshll.u32 %v1440, 16
        %v1581 = vrot.slane %v1579, 1
        %v1582 = vsel %vm549, %v1577, %v1581
        %v1584 = vshrl.u32 %v1441, 16
        %v1586 = vshll.u32 %v1441, 16
        %v1588 = vrot.slane %v1586, 1
        %v1589 = vor.u32 %v1584, %v1588
        %v1591 = vshll.u32 %v1442, 16
        %v1593 = vrot.slane %v1591, 1
        %v1594 = vsel %vm549, %v1589, %v1593
        %v1596 = vshrl.u32 %v1443, 16
        %v1598 = vshll.u32 %v1443, 16
        %v1600 = vrot.slane %v1598, 1
        %v1601 = vor.u32 %v1596, %v1600
        %v1603 = vshll.u32 %v1444, 16
        %v1605 = vrot.slane %v1603, 1
        %v1606 = vsel %vm549, %v1601, %v1605
        %v1608 = vshrl.u32 %v1445, 16
        %v1610 = vshll.u32 %v1445, 16
        %v1612 = vrot.slane %v1610, 1
        %v1613 = vor.u32 %v1608, %v1612
        %v1615 = vshll.u32 %v1446, 16
        %v1617 = vrot.slane %v1615, 1
        %v1618 = vsel %vm549, %v1613, %v1617
        %v1620 = vshrl.u32 %v1447, 16
        %v1622 = vshll.u32 %v1447, 16
        %v1624 = vrot.slane %v1622, 1
        %v1625 = vor.u32 %v1620, %v1624
        %v1627 = vshll.u32 %v1448, 16
        %v1629 = vrot.slane %v1627, 1
        %v1630 = vsel %vm549, %v1625, %v1629
        %v1632 = vshrl.u32 %v1449, 16
        %v1634 = vshll.u32 %v1449, 16
        %v1636 = vrot.slane %v1634, 1
        %v1637 = vor.u32 %v1632, %v1636
        %v1639 = vshll.u32 %v1450, 16
        %v1641 = vrot.slane %v1639, 1
        %v1642 = vsel %vm549, %v1637, %v1641
        %1659 = vst [vmem:[#allocation2 + $0x20] sm:$0xff] %v1462
        %1660 = vst [vmem:[#allocation2 + $0x68] sm:$0xff] %v1474
        %1661 = vst [vmem:[#allocation2 + $0xb0] sm:$0xff] %v1486
        %1662 = vst [vmem:[#allocation2 + $0xf8] sm:$0xff] %v1498
        %1663 = vst [vmem:[#allocation2 + $0x140] sm:$0xff] %v1510
        %1664 = vst [vmem:[#allocation2 + $0x188] sm:$0xff] %v1522
        %1665 = vst [vmem:[#allocation2 + $0x1d0] sm:$0xff] %v1534
        %1666 = vst [vmem:[#allocation2 + $0x218] sm:$0xff] %v1546
        %1667 = vst [vmem:[#allocation2 + $0x260] sm:$0xff] %v1558
        %1668 = vst [vmem:[#allocation2 + $0x2a8] sm:$0xff] %v1570
        %1669 = vst [vmem:[#allocation2 + $0x2f0] sm:$0xff] %v1582
        %1670 = vst [vmem:[#allocation2 + $0x338] sm:$0xff] %v1594
        %1671 = vst [vmem:[#allocation2 + $0x380] sm:$0xff] %v1606
        %1672 = vst [vmem:[#allocation2 + $0x3c8] sm:$0xff] %v1618
        %1673 = vst [vmem:[#allocation2 + $0x410] sm:$0xff] %v1630
        %1674 = vst [vmem:[#allocation2 + $0x458] sm:$0xff] %v1642
        %v1675 = vld [vmem:[%s1130] sm:$0xe]
        %v1676 = vld [vmem:[%s1130 + $0x4] sm:$0xf]
        %v1677 = vld [vmem:[%s1130 + $0x8] sm:$0x1]
        %v1678 = vld [vmem:[%s1130 + $0xc] sm:$0xe]
        %v1679 = vld [vmem:[%s1130 + $0x10] sm:$0xf]
        %v1680 = vld [vmem:[%s1130 + $0x14] sm:$0x1]
        %v1681 = vld [vmem:[%s1130 + $0x18] sm:$0xe]
        %v1682 = vld [vmem:[%s1130 + $0x1c] sm:$0xf]
        %v1683 = vld [vmem:[%s1130 + $0x20] sm:$0x1]
        %v1684 = vld [vmem:[%s1130 + $0x24] sm:$0xe]
        %v1685 = vld [vmem:[%s1130 + $0x28] sm:$0xf]
        %v1686 = vld [vmem:[%s1130 + $0x2c] sm:$0x1]
        %v1687 = vld [vmem:[%s1130 + $0x30] sm:$0xe]
        %v1688 = vld [vmem:[%s1130 + $0x34] sm:$0xf]
        %v1689 = vld [vmem:[%s1130 + $0x38] sm:$0x1]
        %v1690 = vld [vmem:[%s1130 + $0x3c] sm:$0xe]
        %v1691 = vld [vmem:[%s1130 + $0x40] sm:$0xf]
        %v1692 = vld [vmem:[%s1130 + $0x44] sm:$0x1]
        %v1693 = vld [vmem:[%s1130 + $0x48] sm:$0xe]
        %v1694 = vld [vmem:[%s1130 + $0x4c] sm:$0xf]
        %v1695 = vld [vmem:[%s1130 + $0x50] sm:$0x1]
        %v1696 = vld [vmem:[%s1130 + $0x54] sm:$0xe]
        %v1697 = vld [vmem:[%s1130 + $0x58] sm:$0xf]
        %v1698 = vld [vmem:[%s1130 + $0x5c] sm:$0x1]
        %v1699 = vld [vmem:[%s1130 + $0x60] sm:$0xe]
        %v1700 = vld [vmem:[%s1130 + $0x64] sm:$0xf]
        %v1701 = vld [vmem:[%s1130 + $0x68] sm:$0x1]
        %v1702 = vld [vmem:[%s1130 + $0x6c] sm:$0xe]
        %v1703 = vld [vmem:[%s1130 + $0x70] sm:$0xf]
        %v1704 = vld [vmem:[%s1130 + $0x74] sm:$0x1]
        %v1705 = vld [vmem:[%s1130 + $0x78] sm:$0xe]
        %v1706 = vld [vmem:[%s1130 + $0x7c] sm:$0xf]
        %v1707 = vld [vmem:[%s1130 + $0x80] sm:$0x1]
        %v1708 = vld [vmem:[%s1130 + $0x84] sm:$0xe]
        %v1709 = vld [vmem:[%s1130 + $0x88] sm:$0xf]
        %v1710 = vld [vmem:[%s1130 + $0x8c] sm:$0x1]
        %v1711 = vld [vmem:[%s1130 + $0x90] sm:$0xe]
        %v1712 = vld [vmem:[%s1130 + $0x94] sm:$0xf]
        %v1713 = vld [vmem:[%s1130 + $0x98] sm:$0x1]
        %v1714 = vld [vmem:[%s1130 + $0x9c] sm:$0xe]
        %v1715 = vld [vmem:[%s1130 + $0xa0] sm:$0xf]
        %v1716 = vld [vmem:[%s1130 + $0xa4] sm:$0x1]
        %v1717 = vld [vmem:[%s1130 + $0xa8] sm:$0xe]
        %v1718 = vld [vmem:[%s1130 + $0xac] sm:$0xf]
        %v1719 = vld [vmem:[%s1130 + $0xb0] sm:$0x1]
        %v1720 = vld [vmem:[%s1130 + $0xb4] sm:$0xe]
        %v1721 = vld [vmem:[%s1130 + $0xb8] sm:$0xf]
        %v1722 = vld [vmem:[%s1130 + $0xbc] sm:$0x1]
        %v1771 = vunpack.c.l.b16 %v1675
        %v1772 = vunpack.c.l.b16 %v1676
        %v1773 = vunpack.c.l.b16 %v1677
        %v1774 = vunpack.c.l.b16 %v1678
        %v1775 = vunpack.c.l.b16 %v1679
        %v1776 = vunpack.c.l.b16 %v1680
        %v1777 = vunpack.c.l.b16 %v1681
        %v1778 = vunpack.c.l.b16 %v1682
        %v1779 = vunpack.c.l.b16 %v1683
        %v1780 = vunpack.c.l.b16 %v1684
        %v1781 = vunpack.c.l.b16 %v1685
        %v1782 = vunpack.c.l.b16 %v1686
        %v1783 = vunpack.c.l.b16 %v1687
        %v1784 = vunpack.c.l.b16 %v1688
        %v1785 = vunpack.c.l.b16 %v1689
        %v1786 = vunpack.c.l.b16 %v1690
        %v1787 = vunpack.c.l.b16 %v1691
        %v1788 = vunpack.c.l.b16 %v1692
        %v1789 = vunpack.c.l.b16 %v1693
        %v1790 = vunpack.c.l.b16 %v1694
        %v1791 = vunpack.c.l.b16 %v1695
        %v1792 = vunpack.c.l.b16 %v1696
        %v1793 = vunpack.c.l.b16 %v1697
        %v1794 = vunpack.c.l.b16 %v1698
        %v1795 = vunpack.c.l.b16 %v1699
        %v1796 = vunpack.c.l.b16 %v1700
        %v1797 = vunpack.c.l.b16 %v1701
        %v1798 = vunpack.c.l.b16 %v1702
        %v1799 = vunpack.c.l.b16 %v1703
        %v1800 = vunpack.c.l.b16 %v1704
        %v1801 = vunpack.c.l.b16 %v1705
        %v1802 = vunpack.c.l.b16 %v1706
        %v1803 = vunpack.c.l.b16 %v1707
        %v1804 = vunpack.c.l.b16 %v1708
        %v1805 = vunpack.c.l.b16 %v1709
        %v1806 = vunpack.c.l.b16 %v1710
        %v1807 = vunpack.c.l.b16 %v1711
        %v1808 = vunpack.c.l.b16 %v1712
        %v1809 = vunpack.c.l.b16 %v1713
        %v1810 = vunpack.c.l.b16 %v1714
        %v1811 = vunpack.c.l.b16 %v1715
        %v1812 = vunpack.c.l.b16 %v1716
        %v1813 = vunpack.c.l.b16 %v1717
        %v1814 = vunpack.c.l.b16 %v1718
        %v1815 = vunpack.c.l.b16 %v1719
        %v1816 = vunpack.c.l.b16 %v1720
        %v1817 = vunpack.c.l.b16 %v1721
        %v1818 = vunpack.c.l.b16 %v1722
        %v1819 = vpack.c.b16 %v1772, %v1771
        %v1820 = vpack.c.b16 %v1773, %v1773
        %v1821 = vpack.c.b16 %v1775, %v1774
        %v1822 = vpack.c.b16 %v1776, %v1776
        %v1823 = vpack.c.b16 %v1778, %v1777
        %v1824 = vpack.c.b16 %v1779, %v1779
        %v1825 = vpack.c.b16 %v1781, %v1780
        %v1826 = vpack.c.b16 %v1782, %v1782
        %v1827 = vpack.c.b16 %v1784, %v1783
        %v1828 = vpack.c.b16 %v1785, %v1785
        %v1829 = vpack.c.b16 %v1787, %v1786
        %v1830 = vpack.c.b16 %v1788, %v1788
        %v1831 = vpack.c.b16 %v1790, %v1789
        %v1832 = vpack.c.b16 %v1791, %v1791
        %v1833 = vpack.c.b16 %v1793, %v1792
        %v1834 = vpack.c.b16 %v1794, %v1794
        %v1835 = vpack.c.b16 %v1796, %v1795
        %v1836 = vpack.c.b16 %v1797, %v1797
        %v1837 = vpack.c.b16 %v1799, %v1798
        %v1838 = vpack.c.b16 %v1800, %v1800
        %v1839 = vpack.c.b16 %v1802, %v1801
        %v1840 = vpack.c.b16 %v1803, %v1803
        %v1841 = vpack.c.b16 %v1805, %v1804
        %v1842 = vpack.c.b16 %v1806, %v1806
        %v1843 = vpack.c.b16 %v1808, %v1807
        %v1844 = vpack.c.b16 %v1809, %v1809
        %v1845 = vpack.c.b16 %v1811, %v1810
        %v1846 = vpack.c.b16 %v1812, %v1812
        %v1847 = vpack.c.b16 %v1814, %v1813
        %v1848 = vpack.c.b16 %v1815, %v1815
        %v1849 = vpack.c.b16 %v1817, %v1816
        %v1850 = vpack.c.b16 %v1818, %v1818
        %v1851 = vrot.slane %v1819, 1
        %v1852 = vrot.slane %v1820, 1
        %v1853 = vsel %vm950, %v1851, %v1852
        %v1854 = vrot.slane %v1821, 1
        %v1855 = vrot.slane %v1822, 1
        %v1856 = vsel %vm950, %v1854, %v1855
        %v1857 = vrot.slane %v1823, 1
        %v1858 = vrot.slane %v1824, 1
        %v1859 = vsel %vm950, %v1857, %v1858
        %v1860 = vrot.slane %v1825, 1
        %v1861 = vrot.slane %v1826, 1
        %v1862 = vsel %vm950, %v1860, %v1861
        %v1863 = vrot.slane %v1827, 1
        %v1864 = vrot.slane %v1828, 1
        %v1865 = vsel %vm950, %v1863, %v1864
        %v1866 = vrot.slane %v1829, 1
        %v1867 = vrot.slane %v1830, 1
        %v1868 = vsel %vm950, %v1866, %v1867
        %v1869 = vrot.slane %v1831, 1
        %v1870 = vrot.slane %v1832, 1
        %v1871 = vsel %vm950, %v1869, %v1870
        %v1872 = vrot.slane %v1833, 1
        %v1873 = vrot.slane %v1834, 1
        %v1874 = vsel %vm950, %v1872, %v1873
        %v1875 = vrot.slane %v1835, 1
        %v1876 = vrot.slane %v1836, 1
        %v1877 = vsel %vm950, %v1875, %v1876
        %v1878 = vrot.slane %v1837, 1
        %v1879 = vrot.slane %v1838, 1
        %v1880 = vsel %vm950, %v1878, %v1879
        %v1881 = vrot.slane %v1839, 1
        %v1882 = vrot.slane %v1840, 1
        %v1883 = vsel %vm950, %v1881, %v1882
        %v1884 = vrot.slane %v1841, 1
        %v1885 = vrot.slane %v1842, 1
        %v1886 = vsel %vm950, %v1884, %v1885
        %v1887 = vrot.slane %v1843, 1
        %v1888 = vrot.slane %v1844, 1
        %v1889 = vsel %vm950, %v1887, %v1888
        %v1890 = vrot.slane %v1845, 1
        %v1891 = vrot.slane %v1846, 1
        %v1892 = vsel %vm950, %v1890, %v1891
        %v1893 = vrot.slane %v1847, 1
        %v1894 = vrot.slane %v1848, 1
        %v1895 = vsel %vm950, %v1893, %v1894
        %v1896 = vrot.slane %v1849, 1
        %v1897 = vrot.slane %v1850, 1
        %v1898 = vsel %vm950, %v1896, %v1897
        %1915 = vst [vmem:[#allocation2 + $0x28] sm:$0xff] %v1853
        %1916 = vst [vmem:[#allocation2 + $0x70] sm:$0xff] %v1856
        %1917 = vst [vmem:[#allocation2 + $0xb8] sm:$0xff] %v1859
        %1918 = vst [vmem:[#allocation2 + $0x100] sm:$0xff] %v1862
        %1919 = vst [vmem:[#allocation2 + $0x148] sm:$0xff] %v1865
        %1920 = vst [vmem:[#allocation2 + $0x190] sm:$0xff] %v1868
        %1921 = vst [vmem:[#allocation2 + $0x1d8] sm:$0xff] %v1871
        %1922 = vst [vmem:[#allocation2 + $0x220] sm:$0xff] %v1874
        %1923 = vst [vmem:[#allocation2 + $0x268] sm:$0xff] %v1877
        %1924 = vst [vmem:[#allocation2 + $0x2b0] sm:$0xff] %v1880
        %1925 = vst [vmem:[#allocation2 + $0x2f8] sm:$0xff] %v1883
        %1926 = vst [vmem:[#allocation2 + $0x340] sm:$0xff] %v1886
        %1927 = vst [vmem:[#allocation2 + $0x388] sm:$0xff] %v1889
        %1928 = vst [vmem:[#allocation2 + $0x3d0] sm:$0xff] %v1892
        %1929 = vst [vmem:[#allocation2 + $0x418] sm:$0xff] %v1895
        %1930 = vst [vmem:[#allocation2 + $0x460] sm:$0xff] %v1898
        %v1931 = vld [vmem:[#allocation2 + $0x18] sm:$0xff]
        %v1932 = vld [vmem:[#allocation2 + $0x20] sm:$0xff]
        %v1933 = vld [vmem:[#allocation2 + $0x28] sm:$0xff]
        %v1934 = vld [vmem:[#allocation2 + $0x60] sm:$0xff]
        %v1935 = vld [vmem:[#allocation2 + $0x68] sm:$0xff]
        %v1936 = vld [vmem:[#allocation2 + $0x70] sm:$0xff]
        %v1937 = vld [vmem:[#allocation2 + $0xa8] sm:$0xff]
        %v1938 = vld [vmem:[#allocation2 + $0xb0] sm:$0xff]
        %v1939 = vld [vmem:[#allocation2 + $0xb8] sm:$0xff]
        %v1940 = vld [vmem:[#allocation2 + $0xf0] sm:$0xff]
        %v1941 = vld [vmem:[#allocation2 + $0xf8] sm:$0xff]
        %v1942 = vld [vmem:[#allocation2 + $0x100] sm:$0xff]
        %v1943 = vld [vmem:[#allocation2 + $0x138] sm:$0xff]
        %v1944 = vld [vmem:[#allocation2 + $0x140] sm:$0xff]
        %v1945 = vld [vmem:[#allocation2 + $0x148] sm:$0xff]
        %v1946 = vld [vmem:[#allocation2 + $0x180] sm:$0xff]
        %v1947 = vld [vmem:[#allocation2 + $0x188] sm:$0xff]
        %v1948 = vld [vmem:[#allocation2 + $0x190] sm:$0xff]
        %v1949 = vld [vmem:[#allocation2 + $0x1c8] sm:$0xff]
        %v1950 = vld [vmem:[#allocation2 + $0x1d0] sm:$0xff]
        %v1951 = vld [vmem:[#allocation2 + $0x1d8] sm:$0xff]
        %v1952 = vld [vmem:[#allocation2 + $0x210] sm:$0xff]
        %v1953 = vld [vmem:[#allocation2 + $0x218] sm:$0xff]
        %v1954 = vld [vmem:[#allocation2 + $0x220] sm:$0xff]
        %v1955 = vld [vmem:[#allocation2 + $0x258] sm:$0xff]
        %v1956 = vld [vmem:[#allocation2 + $0x260] sm:$0xff]
        %v1957 = vld [vmem:[#allocation2 + $0x268] sm:$0xff]
        %v1958 = vld [vmem:[#allocation2 + $0x2a0] sm:$0xff]
        %v1959 = vld [vmem:[#allocation2 + $0x2a8] sm:$0xff]
        %v1960 = vld [vmem:[#allocation2 + $0x2b0] sm:$0xff]
        %v1961 = vld [vmem:[#allocation2 + $0x2e8] sm:$0xff]
        %v1962 = vld [vmem:[#allocation2 + $0x2f0] sm:$0xff]
        %v1963 = vld [vmem:[#allocation2 + $0x2f8] sm:$0xff]
        %v1964 = vld [vmem:[#allocation2 + $0x330] sm:$0xff]
        %v1965 = vld [vmem:[#allocation2 + $0x338] sm:$0xff]
        %v1966 = vld [vmem:[#allocation2 + $0x340] sm:$0xff]
        %v1967 = vld [vmem:[#allocation2 + $0x378] sm:$0xff]
        %v1968 = vld [vmem:[#allocation2 + $0x380] sm:$0xff]
        %v1969 = vld [vmem:[#allocation2 + $0x388] sm:$0xff]
        %v1970 = vld [vmem:[#allocation2 + $0x3c0] sm:$0xff]
        %v1971 = vld [vmem:[#allocation2 + $0x3c8] sm:$0xff]
        %v1972 = vld [vmem:[#allocation2 + $0x3d0] sm:$0xff]
        %v1973 = vld [vmem:[#allocation2 + $0x408] sm:$0xff]
        %v1974 = vld [vmem:[#allocation2 + $0x410] sm:$0xff]
        %v1975 = vld [vmem:[#allocation2 + $0x418] sm:$0xff]
        %v1976 = vld [vmem:[#allocation2 + $0x450] sm:$0xff]
        %v1977 = vld [vmem:[#allocation2 + $0x458] sm:$0xff]
        %v1978 = vld [vmem:[#allocation2 + $0x460] sm:$0xff]
        %s1979 = scalar_lea.vmem %s219, 192
        %v1980 = vld [vmem:[%s1979] sm:$0xf]
        %v1981 = vld [vmem:[%s1979 + $0x4] sm:$0xf]
        %v1982 = vld [vmem:[%s1979 + $0x8] sm:$0xf]
        %v1983 = vld [vmem:[%s1979 + $0xc] sm:$0xf]
        %v1984 = vld [vmem:[%s1979 + $0x10] sm:$0xf]
        %v1985 = vld [vmem:[%s1979 + $0x14] sm:$0xf]
        %v1986 = vld [vmem:[%s1979 + $0x18] sm:$0xf]
        %v1987 = vld [vmem:[%s1979 + $0x1c] sm:$0xf]
        %v1988 = vld [vmem:[%s1979 + $0x20] sm:$0xf]
        %v1989 = vld [vmem:[%s1979 + $0x24] sm:$0xf]
        %v1990 = vld [vmem:[%s1979 + $0x28] sm:$0xf]
        %v1991 = vld [vmem:[%s1979 + $0x2c] sm:$0xf]
        %v1992 = vld [vmem:[%s1979 + $0x30] sm:$0xf]
        %v1993 = vld [vmem:[%s1979 + $0x34] sm:$0xf]
        %v1994 = vld [vmem:[%s1979 + $0x38] sm:$0xf]
        %v1995 = vld [vmem:[%s1979 + $0x3c] sm:$0xf]
        %v1996 = vld [vmem:[%s1979 + $0x40] sm:$0xf]
        %v1997 = vld [vmem:[%s1979 + $0x44] sm:$0xf]
        %v1998 = vld [vmem:[%s1979 + $0x48] sm:$0xf]
        %v1999 = vld [vmem:[%s1979 + $0x4c] sm:$0xf]
        %v2000 = vld [vmem:[%s1979 + $0x50] sm:$0xf]
        %v2001 = vld [vmem:[%s1979 + $0x54] sm:$0xf]
        %v2002 = vld [vmem:[%s1979 + $0x58] sm:$0xf]
        %v2003 = vld [vmem:[%s1979 + $0x5c] sm:$0xf]
        %v2004 = vld [vmem:[%s1979 + $0x60] sm:$0xf]
        %v2005 = vld [vmem:[%s1979 + $0x64] sm:$0xf]
        %v2006 = vld [vmem:[%s1979 + $0x68] sm:$0xf]
        %v2007 = vld [vmem:[%s1979 + $0x6c] sm:$0xf]
        %v2008 = vld [vmem:[%s1979 + $0x70] sm:$0xf]
        %v2009 = vld [vmem:[%s1979 + $0x74] sm:$0xf]
        %v2010 = vld [vmem:[%s1979 + $0x78] sm:$0xf]
        %v2011 = vld [vmem:[%s1979 + $0x7c] sm:$0xf]
        %v2012 = vld [vmem:[%s1979 + $0x80] sm:$0xf]
        %v2013 = vld [vmem:[%s1979 + $0x84] sm:$0xf]
        %v2014 = vld [vmem:[%s1979 + $0x88] sm:$0xf]
        %v2015 = vld [vmem:[%s1979 + $0x8c] sm:$0xf]
        %v2016 = vld [vmem:[%s1979 + $0x90] sm:$0xf]
        %v2017 = vld [vmem:[%s1979 + $0x94] sm:$0xf]
        %v2018 = vld [vmem:[%s1979 + $0x98] sm:$0xf]
        %v2019 = vld [vmem:[%s1979 + $0x9c] sm:$0xf]
        %v2020 = vld [vmem:[%s1979 + $0xa0] sm:$0xf]
        %v2021 = vld [vmem:[%s1979 + $0xa4] sm:$0xf]
        %v2022 = vld [vmem:[%s1979 + $0xa8] sm:$0xf]
        %v2023 = vld [vmem:[%s1979 + $0xac] sm:$0xf]
        %v2024 = vld [vmem:[%s1979 + $0xb0] sm:$0xf]
        %v2025 = vld [vmem:[%s1979 + $0xb4] sm:$0xf]
        %v2026 = vld [vmem:[%s1979 + $0xb8] sm:$0xf]
        %v2027 = vld [vmem:[%s1979 + $0xbc] sm:$0xf]
        %v2076 = vunpack.c.l.b16 %v1980
        %v2077 = vunpack.c.l.b16 %v1981
        %v2078 = vunpack.c.l.b16 %v1982
        %v2079 = vunpack.c.l.b16 %v1983
        %v2080 = vunpack.c.l.b16 %v1984
        %v2081 = vunpack.c.l.b16 %v1985
        %v2082 = vunpack.c.l.b16 %v1986
        %v2083 = vunpack.c.l.b16 %v1987
        %v2084 = vunpack.c.l.b16 %v1988
        %v2085 = vunpack.c.l.b16 %v1989
        %v2086 = vunpack.c.l.b16 %v1990
        %v2087 = vunpack.c.l.b16 %v1991
        %v2088 = vunpack.c.l.b16 %v1992
        %v2089 = vunpack.c.l.b16 %v1993
        %v2090 = vunpack.c.l.b16 %v1994
        %v2091 = vunpack.c.l.b16 %v1995
        %v2092 = vunpack.c.l.b16 %v1996
        %v2093 = vunpack.c.l.b16 %v1997
        %v2094 = vunpack.c.l.b16 %v1998
        %v2095 = vunpack.c.l.b16 %v1999
        %v2096 = vunpack.c.l.b16 %v2000
        %v2097 = vunpack.c.l.b16 %v2001
        %v2098 = vunpack.c.l.b16 %v2002
        %v2099 = vunpack.c.l.b16 %v2003
        %v2100 = vunpack.c.l.b16 %v2004
        %v2101 = vunpack.c.l.b16 %v2005
        %v2102 = vunpack.c.l.b16 %v2006
        %v2103 = vunpack.c.l.b16 %v2007
        %v2104 = vunpack.c.l.b16 %v2008
        %v2105 = vunpack.c.l.b16 %v2009
        %v2106 = vunpack.c.l.b16 %v2010
        %v2107 = vunpack.c.l.b16 %v2011
        %v2108 = vunpack.c.l.b16 %v2012
        %v2109 = vunpack.c.l.b16 %v2013
        %v2110 = vunpack.c.l.b16 %v2014
        %v2111 = vunpack.c.l.b16 %v2015
        %v2112 = vunpack.c.l.b16 %v2016
        %v2113 = vunpack.c.l.b16 %v2017
        %v2114 = vunpack.c.l.b16 %v2018
        %v2115 = vunpack.c.l.b16 %v2019
        %v2116 = vunpack.c.l.b16 %v2020
        %v2117 = vunpack.c.l.b16 %v2021
        %v2118 = vunpack.c.l.b16 %v2022
        %v2119 = vunpack.c.l.b16 %v2023
        %v2120 = vunpack.c.l.b16 %v2024
        %v2121 = vunpack.c.l.b16 %v2025
        %v2122 = vunpack.c.l.b16 %v2026
        %v2123 = vunpack.c.l.b16 %v2027
        %v2124 = vpack.c.b16 %v2077, %v2076
        %v2125 = vpack.c.b16 %v2079, %v2078
        %v2126 = vpack.c.b16 %v2081, %v2080
        %v2127 = vpack.c.b16 %v2083, %v2082
        %v2128 = vpack.c.b16 %v2085, %v2084
        %v2129 = vpack.c.b16 %v2087, %v2086
        %v2130 = vpack.c.b16 %v2089, %v2088
        %v2131 = vpack.c.b16 %v2091, %v2090
        %v2132 = vpack.c.b16 %v2093, %v2092
        %v2133 = vpack.c.b16 %v2095, %v2094
        %v2134 = vpack.c.b16 %v2097, %v2096
        %v2135 = vpack.c.b16 %v2099, %v2098
        %v2136 = vpack.c.b16 %v2101, %v2100
        %v2137 = vpack.c.b16 %v2103, %v2102
        %v2138 = vpack.c.b16 %v2105, %v2104
        %v2139 = vpack.c.b16 %v2107, %v2106
        %v2140 = vpack.c.b16 %v2109, %v2108
        %v2141 = vpack.c.b16 %v2111, %v2110
        %v2142 = vpack.c.b16 %v2113, %v2112
        %v2143 = vpack.c.b16 %v2115, %v2114
        %v2144 = vpack.c.b16 %v2117, %v2116
        %v2145 = vpack.c.b16 %v2119, %v2118
        %v2146 = vpack.c.b16 %v2121, %v2120
        %v2147 = vpack.c.b16 %v2123, %v2122
        %2172 = vmatprep.subr.bf16.mxu0 0
        %2173 = vmatpush1.bf16.msra.mxu0 %v2124
        %2174 = vmatprep.subr.bf16.mxu0 0
        %2175 = vmatpush1.bf16.msra.mxu0 %v2125
        %2176 = vmatprep.subr.bf16.mxu0 0
        %2177 = vmatpush1.bf16.msra.mxu0 %v2126
        %2178 = vmatprep.subr.bf16.mxu0 0
        %2179 = vmatpush1.bf16.msra.mxu0 %v2127
        %2180 = vmatprep.subr.bf16.mxu0 0
        %2181 = vmatpush1.bf16.msra.mxu0 %v2128
        %2182 = vmatprep.subr.bf16.mxu0 0
        %2183 = vmatpush1.bf16.msra.mxu0 %v2129
        %2184 = vmatprep.subr.bf16.mxu0 0
        %2185 = vmatpush1.bf16.msra.mxu0 %v2130
        %2186 = vmatprep.subr.bf16.mxu0 0
        %2187 = vmatpush1.bf16.msra.mxu0 %v2131
        %2188 = vmatprep.subr.bf16.mxu0 0
        %2189 = vmatpush1.bf16.msra.mxu0 %v2132
        %2190 = vmatprep.subr.bf16.mxu0 0
        %2191 = vmatpush1.bf16.msra.mxu0 %v2133
        %2192 = vmatprep.subr.bf16.mxu0 0
        %2193 = vmatpush1.bf16.msra.mxu0 %v2134
        %2194 = vmatprep.subr.bf16.mxu0 0
        %2195 = vmatpush1.bf16.msra.mxu0 %v2135
        %2196 = vmatprep.subr.bf16.mxu0 0
        %2197 = vmatpush1.bf16.msra.mxu0 %v2136
        %2198 = vmatprep.subr.bf16.mxu0 0
        %2199 = vmatpush1.bf16.msra.mxu0 %v2137
        %2200 = vmatprep.subr.bf16.mxu0 0
        %2201 = vmatpush1.bf16.msra.mxu0 %v2138
        %2202 = vmatprep.subr.bf16.mxu0 0
        %2203 = vmatpush1.bf16.msra.mxu0 %v2139
        %2204 = vmatprep.mubr.bf16.mxu0 %v1932
        %2205 = vmatmul.mubr.bf16.gmra.mrb[0].mxu0 %v1931
        %v2206 = vpop.f32.mrb[0].mxu0
        %v2207 = vadd.f32 0.0, %v2206
        %v2208 = vpop.f32.mrb[0].mxu0
        %v2209 = vpop.f32.mrb[0].mxu0
        %v2210 = vadd.f32 0.0, %v2209
        %v2211 = vpop.f32.mrb[0].mxu0
        %2212 = vmatprep.mubr.bf16.mxu0 %v1935
        %2213 = vmatmul.mubr.bf16.gmra.mrb[0].mxu0 %v1934
        %v2214 = vpop.f32.mrb[0].mxu0
        %v2215 = vadd.f32 0.0, %v2214
        %v2216 = vpop.f32.mrb[0].mxu0
        %v2217 = vpop.f32.mrb[0].mxu0
        %v2218 = vadd.f32 0.0, %v2217
        %v2219 = vpop.f32.mrb[0].mxu0
        %2220 = vmatprep.mubr.bf16.mxu0 %v1938
        %2221 = vmatmul.mubr.bf16.gmra.mrb[0].mxu0 %v1937
        %v2222 = vpop.f32.mrb[0].mxu0
        %v2223 = vadd.f32 0.0, %v2222
        %v2224 = vpop.f32.mrb[0].mxu0
        %v2225 = vpop.f32.mrb[0].mxu0
        %v2226 = vadd.f32 0.0, %v2225
        %v2227 = vpop.f32.mrb[0].mxu0
        %2228 = vmatprep.mubr.bf16.mxu0 %v1941
        %2229 = vmatmul.mubr.bf16.gmra.mrb[0].mxu0 %v1940
        %v2230 = vpop.f32.mrb[0].mxu0
        %v2231 = vadd.f32 0.0, %v2230
        %v2232 = vpop.f32.mrb[0].mxu0
        %v2233 = vpop.f32.mrb[0].mxu0
        %v2234 = vadd.f32 0.0, %v2233
        %v2235 = vpop.f32.mrb[0].mxu0
        %2236 = vmatprep.mubr.bf16.mxu0 %v1944
        %2237 = vmatmul.mubr.bf16.gmra.mrb[0].mxu0 %v1943
        %v2238 = vpop.f32.mrb[0].mxu0
        %v2239 = vadd.f32 0.0, %v2238
        %v2240 = vpop.f32.mrb[0].mxu0
        %v2241 = vpop.f32.mrb[0].mxu0
        %v2242 = vadd.f32 0.0, %v2241
        %v2243 = vpop.f32.mrb[0].mxu0
        %2244 = vmatprep.mubr.bf16.mxu0 %v1947
        %2245 = vmatmul.mubr.bf16.gmra.mrb[0].mxu0 %v1946
        %v2246 = vpop.f32.mrb[0].mxu0
        %v2247 = vadd.f32 0.0, %v2246
        %v2248 = vpop.f32.mrb[0].mxu0
        %v2249 = vpop.f32.mrb[0].mxu0
        %v2250 = vadd.f32 0.0, %v2249
        %v2251 = vpop.f32.mrb[0].mxu0
        %2252 = vmatprep.mubr.bf16.mxu0 %v1950
        %2253 = vmatmul.mubr.bf16.gmra.mrb[0].mxu0 %v1949
        %v2254 = vpop.f32.mrb[0].mxu0
        %v2255 = vadd.f32 0.0, %v2254
        %v2256 = vpop.f32.mrb[0].mxu0
        %v2257 = vpop.f32.mrb[0].mxu0
        %v2258 = vadd.f32 0.0, %v2257
        %v2259 = vpop.f32.mrb[0].mxu0
        %2260 = vmatprep.mubr.bf16.mxu0 %v1953
        %2261 = vmatmul.mubr.bf16.gmra.mrb[0].mxu0 %v1952
        %v2262 = vpop.f32.mrb[0].mxu0
        %v2263 = vadd.f32 0.0, %v2262
        %v2264 = vpop.f32.mrb[0].mxu0
        %v2265 = vpop.f32.mrb[0].mxu0
        %v2266 = vadd.f32 0.0, %v2265
        %v2267 = vpop.f32.mrb[0].mxu0
        %2268 = vmatprep.mubr.bf16.mxu0 %v1956
        %2269 = vmatmul.mubr.bf16.gmra.mrb[0].mxu0 %v1955
        %v2270 = vpop.f32.mrb[0].mxu0
        %v2271 = vadd.f32 0.0, %v2270
        %v2272 = vpop.f32.mrb[0].mxu0
        %v2273 = vpop.f32.mrb[0].mxu0
        %v2274 = vadd.f32 0.0, %v2273
        %v2275 = vpop.f32.mrb[0].mxu0
        %2276 = vmatprep.mubr.bf16.mxu0 %v1959
        %2277 = vmatmul.mubr.bf16.gmra.mrb[0].mxu0 %v1958
        %v2278 = vpop.f32.mrb[0].mxu0
        %v2279 = vadd.f32 0.0, %v2278
        %v2280 = vpop.f32.mrb[0].mxu0
        %v2281 = vpop.f32.mrb[0].mxu0
        %v2282 = vadd.f32 0.0, %v2281
        %v2283 = vpop.f32.mrb[0].mxu0
        %2284 = vmatprep.mubr.bf16.mxu0 %v1962
        %2285 = vmatmul.mubr.bf16.gmra.mrb[0].mxu0 %v1961
        %v2286 = vpop.f32.mrb[0].mxu0
        %v2287 = vadd.f32 0.0, %v2286
        %v2288 = vpop.f32.mrb[0].mxu0
        %v2289 = vpop.f32.mrb[0].mxu0
        %v2290 = vadd.f32 0.0, %v2289
        %v2291 = vpop.f32.mrb[0].mxu0
        %2292 = vmatprep.mubr.bf16.mxu0 %v1965
        %2293 = vmatmul.mubr.bf16.gmra.mrb[0].mxu0 %v1964
        %v2294 = vpop.f32.mrb[0].mxu0
        %v2295 = vadd.f32 0.0, %v2294
        %v2296 = vpop.f32.mrb[0].mxu0
        %v2297 = vpop.f32.mrb[0].mxu0
        %v2298 = vadd.f32 0.0, %v2297
        %v2299 = vpop.f32.mrb[0].mxu0
        %2300 = vmatprep.mubr.bf16.mxu0 %v1968
        %2301 = vmatmul.mubr.bf16.gmra.mrb[0].mxu0 %v1967
        %v2302 = vpop.f32.mrb[0].mxu0
        %v2303 = vadd.f32 0.0, %v2302
        %v2304 = vpop.f32.mrb[0].mxu0
        %v2305 = vpop.f32.mrb[0].mxu0
        %v2306 = vadd.f32 0.0, %v2305
        %v2307 = vpop.f32.mrb[0].mxu0
        %2308 = vmatprep.mubr.bf16.mxu0 %v1971
        %2309 = vmatmul.mubr.bf16.gmra.mrb[0].mxu0 %v1970
        %v2310 = vpop.f32.mrb[0].mxu0
        %v2311 = vadd.f32 0.0, %v2310
        %v2312 = vpop.f32.mrb[0].mxu0
        %v2313 = vpop.f32.mrb[0].mxu0
        %v2314 = vadd.f32 0.0, %v2313
        %v2315 = vpop.f32.mrb[0].mxu0
        %2316 = vmatprep.mubr.bf16.mxu0 %v1974
        %2317 = vmatmul.mubr.bf16.gmra.mrb[0].mxu0 %v1973
        %v2318 = vpop.f32.mrb[0].mxu0
        %v2319 = vadd.f32 0.0, %v2318
        %v2320 = vpop.f32.mrb[0].mxu0
        %v2321 = vpop.f32.mrb[0].mxu0
        %v2322 = vadd.f32 0.0, %v2321
        %v2323 = vpop.f32.mrb[0].mxu0
        %2324 = vmatprep.mubr.bf16.mxu0 %v1977
        %2325 = vmatmul.mubr.bf16.gmra.mrb[0].mxu0 %v1976
        %v2326 = vpop.f32.mrb[0].mxu0
        %v2327 = vadd.f32 0.0, %v2326
        %v2328 = vpop.f32.mrb[0].mxu0
        %v2329 = vpop.f32.mrb[0].mxu0
        %v2330 = vadd.f32 0.0, %v2329
        %v2331 = vpop.f32.mrb[0].mxu0
        %2332 = vdwg.mxu0
        %2333 = vmatprep.subr.bf16.mxu0 0
        %2334 = vmatpush1.bf16.msra.mxu0 %v2140
        %2335 = vmatprep.subr.bf16.mxu0 0
        %2336 = vmatpush1.bf16.msra.mxu0 %v2141
        %2337 = vmatprep.subr.bf16.mxu0 0
        %2338 = vmatpush1.bf16.msra.mxu0 %v2142
        %2339 = vmatprep.subr.bf16.mxu0 0
        %2340 = vmatpush1.bf16.msra.mxu0 %v2143
        %2341 = vmatprep.subr.bf16.mxu0 0
        %2342 = vmatpush1.bf16.msra.mxu0 %v2144
        %2343 = vmatprep.subr.bf16.mxu0 0
        %2344 = vmatpush1.bf16.msra.mxu0 %v2145
        %2345 = vmatprep.subr.bf16.mxu0 0
        %2346 = vmatpush1.bf16.msra.mxu0 %v2146
        %2347 = vmatprep.subr.bf16.mxu0 0
        %2348 = vmatpush1.bf16.msra.mxu0 %v2147
        %2349 = vmatprep.subr.bf16.mxu0 0
        %2350 = vmatpush1.bf16.msra.mxu0 0
        %2351 = vmatprep.subr.bf16.mxu0 0
        %2352 = vmatpush1.bf16.msra.mxu0 0
        %2353 = vmatprep.subr.bf16.mxu0 0
        %2354 = vmatpush1.bf16.msra.mxu0 0
        %2355 = vmatprep.subr.bf16.mxu0 0
        %2356 = vmatpush1.bf16.msra.mxu0 0
        %2357 = vmatprep.subr.bf16.mxu0 0
        %2358 = vmatpush1.bf16.msra.mxu0 0
        %2359 = vmatprep.subr.bf16.mxu0 0
        %2360 = vmatpush1.bf16.msra.mxu0 0
        %2361 = vmatprep.subr.bf16.mxu0 0
        %2362 = vmatpush1.bf16.msra.mxu0 0
        %2363 = vmatprep.subr.bf16.mxu0 0
        %2364 = vmatpush1.bf16.msra.mxu0 0
        %2365 = vmatprep.mubr.bf16.mxu0 0
        %2366 = vmatmul.mubr.bf16.gmra.mrb[0].mxu0 %v1933
        %v2367 = vpop.f32.mrb[0].mxu0
        %v2368 = vadd.f32 %v2207, %v2367
        %v2369 = vpop.f32.mrb[0].mxu0
        %v2370 = vpop.f32.mrb[0].mxu0
        %v2371 = vadd.f32 %v2210, %v2370
        %v2372 = vpop.f32.mrb[0].mxu0
        %2373 = vmatprep.mubr.bf16.mxu0 0
        %2374 = vmatmul.mubr.bf16.gmra.mrb[0].mxu0 %v1936
        %v2375 = vpop.f32.mrb[0].mxu0
        %v2376 = vadd.f32 %v2215, %v2375
        %v2377 = vpop.f32.mrb[0].mxu0
        %v2378 = vpop.f32.mrb[0].mxu0
        %v2379 = vadd.f32 %v2218, %v2378
        %v2380 = vpop.f32.mrb[0].mxu0
        %2381 = vmatprep.mubr.bf16.mxu0 0
        %2382 = vmatmul.mubr.bf16.gmra.mrb[0].mxu0 %v1939
        %v2383 = vpop.f32.mrb[0].mxu0
        %v2384 = vadd.f32 %v2223, %v2383
        %v2385 = vpop.f32.mrb[0].mxu0
        %v2386 = vpop.f32.mrb[0].mxu0
        %v2387 = vadd.f32 %v2226, %v2386
        %v2388 = vpop.f32.mrb[0].mxu0
        %2389 = vmatprep.mubr.bf16.mxu0 0
        %2390 = vmatmul.mubr.bf16.gmra.mrb[0].mxu0 %v1942
        %v2391 = vpop.f32.mrb[0].mxu0
        %v2392 = vadd.f32 %v2231, %v2391
        %v2393 = vpop.f32.mrb[0].mxu0
        %v2394 = vpop.f32.mrb[0].mxu0
        %v2395 = vadd.f32 %v2234, %v2394
        %v2396 = vpop.f32.mrb[0].mxu0
        %2397 = vmatprep.mubr.bf16.mxu0 0
        %2398 = vmatmul.mubr.bf16.gmra.mrb[0].mxu0 %v1945
        %v2399 = vpop.f32.mrb[0].mxu0
        %v2400 = vadd.f32 %v2239, %v2399
        %v2401 = vpop.f32.mrb[0].mxu0
        %v2402 = vpop.f32.mrb[0].mxu0
        %v2403 = vadd.f32 %v2242, %v2402
        %v2404 = vpop.f32.mrb[0].mxu0
        %2405 = vmatprep.mubr.bf16.mxu0 0
        %2406 = vmatmul.mubr.bf16.gmra.mrb[0].mxu0 %v1948
        %v2407 = vpop.f32.mrb[0].mxu0
        %v2408 = vadd.f32 %v2247, %v2407
        %v2409 = vpop.f32.mrb[0].mxu0
        %v2410 = vpop.f32.mrb[0].mxu0
        %v2411 = vadd.f32 %v2250, %v2410
        %v2412 = vpop.f32.mrb[0].mxu0
        %2413 = vmatprep.mubr.bf16.mxu0 0
        %2414 = vmatmul.mubr.bf16.gmra.mrb[0].mxu0 %v1951
        %v2415 = vpop.f32.mrb[0].mxu0
        %v2416 = vadd.f32 %v2255, %v2415
        %v2417 = vpop.f32.mrb[0].mxu0
        %v2418 = vpop.f32.mrb[0].mxu0
        %v2419 = vadd.f32 %v2258, %v2418
        %v2420 = vpop.f32.mrb[0].mxu0
        %2421 = vmatprep.mubr.bf16.mxu0 0
        %2422 = vmatmul.mubr.bf16.gmra.mrb[0].mxu0 %v1954
        %v2423 = vpop.f32.mrb[0].mxu0
        %v2424 = vadd.f32 %v2263, %v2423
        %v2425 = vpop.f32.mrb[0].mxu0
        %v2426 = vpop.f32.mrb[0].mxu0
        %v2427 = vadd.f32 %v2266, %v2426
        %v2428 = vpop.f32.mrb[0].mxu0
        %2429 = vmatprep.mubr.bf16.mxu0 0
        %2430 = vmatmul.mubr.bf16.gmra.mrb[0].mxu0 %v1957
        %v2431 = vpop.f32.mrb[0].mxu0
        %v2432 = vadd.f32 %v2271, %v2431
        %v2433 = vpop.f32.mrb[0].mxu0
        %v2434 = vpop.f32.mrb[0].mxu0
        %v2435 = vadd.f32 %v2274, %v2434
        %v2436 = vpop.f32.mrb[0].mxu0
        %2437 = vmatprep.mubr.bf16.mxu0 0
        %2438 = vmatmul.mubr.bf16.gmra.mrb[0].mxu0 %v1960
        %v2439 = vpop.f32.mrb[0].mxu0
        %v2440 = vadd.f32 %v2279, %v2439
        %v2441 = vpop.f32.mrb[0].mxu0
        %v2442 = vpop.f32.mrb[0].mxu0
        %v2443 = vadd.f32 %v2282, %v2442
        %v2444 = vpop.f32.mrb[0].mxu0
        %2445 = vmatprep.mubr.bf16.mxu0 0
        %2446 = vmatmul.mubr.bf16.gmra.mrb[0].mxu0 %v1963
        %v2447 = vpop.f32.mrb[0].mxu0
        %v2448 = vadd.f32 %v2287, %v2447
        %v2449 = vpop.f32.mrb[0].mxu0
        %v2450 = vpop.f32.mrb[0].mxu0
        %v2451 = vadd.f32 %v2290, %v2450
        %v2452 = vpop.f32.mrb[0].mxu0
        %2453 = vmatprep.mubr.bf16.mxu0 0
        %2454 = vmatmul.mubr.bf16.gmra.mrb[0].mxu0 %v1966
        %v2455 = vpop.f32.mrb[0].mxu0
        %v2456 = vadd.f32 %v2295, %v2455
        %v2457 = vpop.f32.mrb[0].mxu0
        %v2458 = vpop.f32.mrb[0].mxu0
        %v2459 = vadd.f32 %v2298, %v2458
        %v2460 = vpop.f32.mrb[0].mxu0
        %2461 = vmatprep.mubr.bf16.mxu0 0
        %2462 = vmatmul.mubr.bf16.gmra.mrb[0].mxu0 %v1969
        %v2463 = vpop.f32.mrb[0].mxu0
        %v2464 = vadd.f32 %v2303, %v2463
        %v2465 = vpop.f32.mrb[0].mxu0
        %v2466 = vpop.f32.mrb[0].mxu0
        %v2467 = vadd.f32 %v2306, %v2466
        %v2468 = vpop.f32.mrb[0].mxu0
        %2469 = vmatprep.mubr.bf16.mxu0 0
        %2470 = vmatmul.mubr.bf16.gmra.mrb[0].mxu0 %v1972
        %v2471 = vpop.f32.mrb[0].mxu0
        %v2472 = vadd.f32 %v2311, %v2471
        %v2473 = vpop.f32.mrb[0].mxu0
        %v2474 = vpop.f32.mrb[0].mxu0
        %v2475 = vadd.f32 %v2314, %v2474
        %v2476 = vpop.f32.mrb[0].mxu0
        %2477 = vmatprep.mubr.bf16.mxu0 0
        %2478 = vmatmul.mubr.bf16.gmra.mrb[0].mxu0 %v1975
        %v2479 = vpop.f32.mrb[0].mxu0
        %v2480 = vadd.f32 %v2319, %v2479
        %v2481 = vpop.f32.mrb[0].mxu0
        %v2482 = vpop.f32.mrb[0].mxu0
        %v2483 = vadd.f32 %v2322, %v2482
        %v2484 = vpop.f32.mrb[0].mxu0
        %2485 = vmatprep.mubr.bf16.mxu0 0
        %2486 = vmatmul.mubr.bf16.gmra.mrb[0].mxu0 %v1978
        %v2487 = vpop.f32.mrb[0].mxu0
        %v2488 = vadd.f32 %v2327, %v2487
        %v2489 = vpop.f32.mrb[0].mxu0
        %v2490 = vpop.f32.mrb[0].mxu0
        %v2491 = vadd.f32 %v2330, %v2490
        %v2492 = vpop.f32.mrb[0].mxu0
        %2493 = vdwg.mxu0
        %v2542 = vunpack.c.l.b16 %v1079
        %v2543 = vunpack.c.l.b16 %v1080
        %v2544 = vunpack.c.l.b16 %v1081
        %v2545 = vunpack.c.l.b16 %v1082
        %v2546 = vunpack.c.l.b16 %v1083
        %v2547 = vunpack.c.l.b16 %v1084
        %v2548 = vunpack.c.l.b16 %v1085
        %v2549 = vunpack.c.l.b16 %v1086
        %v2550 = vunpack.c.l.b16 %v1087
        %v2551 = vunpack.c.l.b16 %v1088
        %v2552 = vunpack.c.l.b16 %v1089
        %v2553 = vunpack.c.l.b16 %v1090
        %v2554 = vunpack.c.l.b16 %v1091
        %v2555 = vunpack.c.l.b16 %v1092
        %v2556 = vunpack.c.l.b16 %v1093
        %v2557 = vunpack.c.l.b16 %v1094
        %v2558 = vunpack.c.l.b16 %v1095
        %v2559 = vunpack.c.l.b16 %v1096
        %v2560 = vunpack.c.l.b16 %v1097
        %v2561 = vunpack.c.l.b16 %v1098
        %v2562 = vunpack.c.l.b16 %v1099
        %v2563 = vunpack.c.l.b16 %v1100
        %v2564 = vunpack.c.l.b16 %v1101
        %v2565 = vunpack.c.l.b16 %v1102
        %v2566 = vunpack.c.l.b16 %v1103
        %v2567 = vunpack.c.l.b16 %v1104
        %v2568 = vunpack.c.l.b16 %v1105
        %v2569 = vunpack.c.l.b16 %v1106
        %v2570 = vunpack.c.l.b16 %v1107
        %v2571 = vunpack.c.l.b16 %v1108
        %v2572 = vunpack.c.l.b16 %v1109
        %v2573 = vunpack.c.l.b16 %v1110
        %v2574 = vunpack.c.l.b16 %v1111
        %v2575 = vunpack.c.l.b16 %v1112
        %v2576 = vunpack.c.l.b16 %v1113
        %v2577 = vunpack.c.l.b16 %v1114
        %v2578 = vunpack.c.l.b16 %v1115
        %v2579 = vunpack.c.l.b16 %v1116
        %v2580 = vunpack.c.l.b16 %v1117
        %v2581 = vunpack.c.l.b16 %v1118
        %v2582 = vunpack.c.l.b16 %v1119
        %v2583 = vunpack.c.l.b16 %v1120
        %v2584 = vunpack.c.l.b16 %v1121
        %v2585 = vunpack.c.l.b16 %v1122
        %v2586 = vunpack.c.l.b16 %v1123
        %v2587 = vunpack.c.l.b16 %v1124
        %v2588 = vunpack.c.l.b16 %v1125
        %v2589 = vunpack.c.l.b16 %v1126
        %v2590 = vpack.c.b16 %v2543, %v2542
        %v2591 = vpack.c.b16 %v2545, %v2544
        %v2592 = vpack.c.b16 %v2547, %v2546
        %v2593 = vpack.c.b16 %v2549, %v2548
        %v2594 = vpack.c.b16 %v2551, %v2550
        %v2595 = vpack.c.b16 %v2553, %v2552
        %v2596 = vpack.c.b16 %v2555, %v2554
        %v2597 = vpack.c.b16 %v2557, %v2556
        %v2598 = vpack.c.b16 %v2559, %v2558
        %v2599 = vpack.c.b16 %v2561, %v2560
        %v2600 = vpack.c.b16 %v2563, %v2562
        %v2601 = vpack.c.b16 %v2565, %v2564
        %v2602 = vpack.c.b16 %v2567, %v2566
        %v2603 = vpack.c.b16 %v2569, %v2568
        %v2604 = vpack.c.b16 %v2571, %v2570
        %v2605 = vpack.c.b16 %v2573, %v2572
        %v2606 = vpack.c.b16 %v2575, %v2574
        %v2607 = vpack.c.b16 %v2577, %v2576
        %v2608 = vpack.c.b16 %v2579, %v2578
        %v2609 = vpack.c.b16 %v2581, %v2580
        %v2610 = vpack.c.b16 %v2583, %v2582
        %v2611 = vpack.c.b16 %v2585, %v2584
        %v2612 = vpack.c.b16 %v2587, %v2586
        %v2613 = vpack.c.b16 %v2589, %v2588
        %2638 = vmatprep.subr.bf16.mxu0 0
        %2639 = vmatpush1.bf16.msra.mxu0 %v2590
        %2640 = vmatprep.subr.bf16.mxu0 0
        %2641 = vmatpush1.bf16.msra.mxu0 %v2591
        %2642 = vmatprep.subr.bf16.mxu0 0
        %2643 = vmatpush1.bf16.msra.mxu0 %v2592
        %2644 = vmatprep.subr.bf16.mxu0 0
        %2645 = vmatpush1.bf16.msra.mxu0 %v2593
        %2646 = vmatprep.subr.bf16.mxu0 0
        %2647 = vmatpush1.bf16.msra.mxu0 %v2594
        %2648 = vmatprep.subr.bf16.mxu0 0
        %2649 = vmatpush1.bf16.msra.mxu0 %v2595
        %2650 = vmatprep.subr.bf16.mxu0 0
        %2651 = vmatpush1.bf16.msra.mxu0 %v2596
        %2652 = vmatprep.subr.bf16.mxu0 0
        %2653 = vmatpush1.bf16.msra.mxu0 %v2597
        %2654 = vmatprep.subr.bf16.mxu0 0
        %2655 = vmatpush1.bf16.msra.mxu0 %v2598
        %2656 = vmatprep.subr.bf16.mxu0 0
        %2657 = vmatpush1.bf16.msra.mxu0 %v2599
        %2658 = vmatprep.subr.bf16.mxu0 0
        %2659 = vmatpush1.bf16.msra.mxu0 %v2600
        %2660 = vmatprep.subr.bf16.mxu0 0
        %2661 = vmatpush1.bf16.msra.mxu0 %v2601
        %2662 = vmatprep.subr.bf16.mxu0 0
        %2663 = vmatpush1.bf16.msra.mxu0 %v2602
        %2664 = vmatprep.subr.bf16.mxu0 0
        %2665 = vmatpush1.bf16.msra.mxu0 %v2603
        %2666 = vmatprep.subr.bf16.mxu0 0
        %2667 = vmatpush1.bf16.msra.mxu0 %v2604
        %2668 = vmatprep.subr.bf16.mxu0 0
        %2669 = vmatpush1.bf16.msra.mxu0 %v2605
        %2670 = vmatprep.mubr.bf16.mxu0 %v1032
        %2671 = vmatmul.mubr.bf16.gmra.mrb[0].mxu0 %v1031
        %v2672 = vpop.f32.mrb[0].mxu0
        %v2673 = vadd.f32 %v2368, %v2672
        %v2674 = vpop.f32.mrb[0].mxu0
        %v2675 = vpop.f32.mrb[0].mxu0
        %v2676 = vadd.f32 %v2371, %v2675
        %v2677 = vpop.f32.mrb[0].mxu0
        %2678 = vmatprep.mubr.bf16.mxu0 %v1035
        %2679 = vmatmul.mubr.bf16.gmra.mrb[0].mxu0 %v1034
        %v2680 = vpop.f32.mrb[0].mxu0
        %v2681 = vadd.f32 %v2376, %v2680
        %v2682 = vpop.f32.mrb[0].mxu0
        %v2683 = vpop.f32.mrb[0].mxu0
        %v2684 = vadd.f32 %v2379, %v2683
        %v2685 = vpop.f32.mrb[0].mxu0
        %2686 = vmatprep.mubr.bf16.mxu0 %v1038
        %2687 = vmatmul.mubr.bf16.gmra.mrb[0].mxu0 %v1037
        %v2688 = vpop.f32.mrb[0].mxu0
        %v2689 = vadd.f32 %v2384, %v2688
        %v2690 = vpop.f32.mrb[0].mxu0
        %v2691 = vpop.f32.mrb[0].mxu0
        %v2692 = vadd.f32 %v2387, %v2691
        %v2693 = vpop.f32.mrb[0].mxu0
        %2694 = vmatprep.mubr.bf16.mxu0 %v1041
        %2695 = vmatmul.mubr.bf16.gmra.mrb[0].mxu0 %v1040
        %v2696 = vpop.f32.mrb[0].mxu0
        %v2697 = vadd.f32 %v2392, %v2696
        %v2698 = vpop.f32.mrb[0].mxu0
        %v2699 = vpop.f32.mrb[0].mxu0
        %v2700 = vadd.f32 %v2395, %v2699
        %v2701 = vpop.f32.mrb[0].mxu0
        %2702 = vmatprep.mubr.bf16.mxu0 %v1044
        %2703 = vmatmul.mubr.bf16.gmra.mrb[0].mxu0 %v1043
        %v2704 = vpop.f32.mrb[0].mxu0
        %v2705 = vadd.f32 %v2400, %v2704
        %v2706 = vpop.f32.mrb[0].mxu0
        %v2707 = vpop.f32.mrb[0].mxu0
        %v2708 = vadd.f32 %v2403, %v2707
        %v2709 = vpop.f32.mrb[0].mxu0
        %2710 = vmatprep.mubr.bf16.mxu0 %v1047
        %2711 = vmatmul.mubr.bf16.gmra.mrb[0].mxu0 %v1046
        %v2712 = vpop.f32.mrb[0].mxu0
        %v2713 = vadd.f32 %v2408, %v2712
        %v2714 = vpop.f32.mrb[0].mxu0
        %v2715 = vpop.f32.mrb[0].mxu0
        %v2716 = vadd.f32 %v2411, %v2715
        %v2717 = vpop.f32.mrb[0].mxu0
        %2718 = vmatprep.mubr.bf16.mxu0 %v1050
        %2719 = vmatmul.mubr.bf16.gmra.mrb[0].mxu0 %v1049
        %v2720 = vpop.f32.mrb[0].mxu0
        %v2721 = vadd.f32 %v2416, %v2720
        %v2722 = vpop.f32.mrb[0].mxu0
        %v2723 = vpop.f32.mrb[0].mxu0
        %v2724 = vadd.f32 %v2419, %v2723
        %v2725 = vpop.f32.mrb[0].mxu0
        %2726 = vmatprep.mubr.bf16.mxu0 %v1053
        %2727 = vmatmul.mubr.bf16.gmra.mrb[0].mxu0 %v1052
        %v2728 = vpop.f32.mrb[0].mxu0
        %v2729 = vadd.f32 %v2424, %v2728
        %v2730 = vpop.f32.mrb[0].mxu0
        %v2731 = vpop.f32.mrb[0].mxu0
        %v2732 = vadd.f32 %v2427, %v2731
        %v2733 = vpop.f32.mrb[0].mxu0
        %2734 = vmatprep.mubr.bf16.mxu0 %v1056
        %2735 = vmatmul.mubr.bf16.gmra.mrb[0].mxu0 %v1055
        %v2736 = vpop.f32.mrb[0].mxu0
        %v2737 = vadd.f32 %v2432, %v2736
        %v2738 = vpop.f32.mrb[0].mxu0
        %v2739 = vpop.f32.mrb[0].mxu0
        %v2740 = vadd.f32 %v2435, %v2739
        %v2741 = vpop.f32.mrb[0].mxu0
        %2742 = vmatprep.mubr.bf16.mxu0 %v1059
        %2743 = vmatmul.mubr.bf16.gmra.mrb[0].mxu0 %v1058
        %v2744 = vpop.f32.mrb[0].mxu0
        %v2745 = vadd.f32 %v2440, %v2744
        %v2746 = vpop.f32.mrb[0].mxu0
        %v2747 = vpop.f32.mrb[0].mxu0
        %v2748 = vadd.f32 %v2443, %v2747
        %v2749 = vpop.f32.mrb[0].mxu0
        %2750 = vmatprep.mubr.bf16.mxu0 %v1062
        %2751 = vmatmul.mubr.bf16.gmra.mrb[0].mxu0 %v1061
        %v2752 = vpop.f32.mrb[0].mxu0
        %v2753 = vadd.f32 %v2448, %v2752
        %v2754 = vpop.f32.mrb[0].mxu0
        %v2755 = vpop.f32.mrb[0].mxu0
        %v2756 = vadd.f32 %v2451, %v2755
        %v2757 = vpop.f32.mrb[0].mxu0
        %2758 = vmatprep.mubr.bf16.mxu0 %v1065
        %2759 = vmatmul.mubr.bf16.gmra.mrb[0].mxu0 %v1064
        %v2760 = vpop.f32.mrb[0].mxu0
        %v2761 = vadd.f32 %v2456, %v2760
        %v2762 = vpop.f32.mrb[0].mxu0
        %v2763 = vpop.f32.mrb[0].mxu0
        %v2764 = vadd.f32 %v2459, %v2763
        %v2765 = vpop.f32.mrb[0].mxu0
        %2766 = vmatprep.mubr.bf16.mxu0 %v1068
        %2767 = vmatmul.mubr.bf16.gmra.mrb[0].mxu0 %v1067
        %v2768 = vpop.f32.mrb[0].mxu0
        %v2769 = vadd.f32 %v2464, %v2768
        %v2770 = vpop.f32.mrb[0].mxu0
        %v2771 = vpop.f32.mrb[0].mxu0
        %v2772 = vadd.f32 %v2467, %v2771
        %v2773 = vpop.f32.mrb[0].mxu0
        %2774 = vmatprep.mubr.bf16.mxu0 %v1071
        %2775 = vmatmul.mubr.bf16.gmra.mrb[0].mxu0 %v1070
        %v2776 = vpop.f32.mrb[0].mxu0
        %v2777 = vadd.f32 %v2472, %v2776
        %v2778 = vpop.f32.mrb[0].mxu0
        %v2779 = vpop.f32.mrb[0].mxu0
        %v2780 = vadd.f32 %v2475, %v2779
        %v2781 = vpop.f32.mrb[0].mxu0
        %2782 = vmatprep.mubr.bf16.mxu0 %v1074
        %2783 = vmatmul.mubr.bf16.gmra.mrb[0].mxu0 %v1073
        %v2784 = vpop.f32.mrb[0].mxu0
        %v2785 = vadd.f32 %v2480, %v2784
        %v2786 = vpop.f32.mrb[0].mxu0
        %v2787 = vpop.f32.mrb[0].mxu0
        %v2788 = vadd.f32 %v2483, %v2787
        %v2789 = vpop.f32.mrb[0].mxu0
        %2790 = vmatprep.mubr.bf16.mxu0 %v1077
        %2791 = vmatmul.mubr.bf16.gmra.mrb[0].mxu0 %v1076
        %v2792 = vpop.f32.mrb[0].mxu0
        %v2793 = vadd.f32 %v2488, %v2792
        %v2794 = vpop.f32.mrb[0].mxu0
        %v2795 = vpop.f32.mrb[0].mxu0
        %v2796 = vadd.f32 %v2491, %v2795
        %v2797 = vpop.f32.mrb[0].mxu0
        %2798 = vdwg.mxu0
        %2799 = vmatprep.subr.bf16.mxu0 0
        %2800 = vmatpush1.bf16.msra.mxu0 %v2606
        %2801 = vmatprep.subr.bf16.mxu0 0
        %2802 = vmatpush1.bf16.msra.mxu0 %v2607
        %2803 = vmatprep.subr.bf16.mxu0 0
        %2804 = vmatpush1.bf16.msra.mxu0 %v2608
        %2805 = vmatprep.subr.bf16.mxu0 0
        %2806 = vmatpush1.bf16.msra.mxu0 %v2609
        %2807 = vmatprep.subr.bf16.mxu0 0
        %2808 = vmatpush1.bf16.msra.mxu0 %v2610
        %2809 = vmatprep.subr.bf16.mxu0 0
        %2810 = vmatpush1.bf16.msra.mxu0 %v2611
        %2811 = vmatprep.subr.bf16.mxu0 0
        %2812 = vmatpush1.bf16.msra.mxu0 %v2612
        %2813 = vmatprep.subr.bf16.mxu0 0
        %2814 = vmatpush1.bf16.msra.mxu0 %v2613
        %2815 = vmatprep.subr.bf16.mxu0 0
        %2816 = vmatpush1.bf16.msra.mxu0 0
        %2817 = vmatprep.subr.bf16.mxu0 0
        %2818 = vmatpush1.bf16.msra.mxu0 0
        %2819 = vmatprep.subr.bf16.mxu0 0
        %2820 = vmatpush1.bf16.msra.mxu0 0
        %2821 = vmatprep.subr.bf16.mxu0 0
        %2822 = vmatpush1.bf16.msra.mxu0 0
        %2823 = vmatprep.subr.bf16.mxu0 0
        %2824 = vmatpush1.bf16.msra.mxu0 0
        %2825 = vmatprep.subr.bf16.mxu0 0
        %2826 = vmatpush1.bf16.msra.mxu0 0
        %2827 = vmatprep.subr.bf16.mxu0 0
        %2828 = vmatpush1.bf16.msra.mxu0 0
        %2829 = vmatprep.subr.bf16.mxu0 0
        %2830 = vmatpush1.bf16.msra.mxu0 0
        %2831 = vmatprep.mubr.bf16.mxu0 0
        %2832 = vmatmul.mubr.bf16.gmra.mrb[0].mxu0 %v1033
        %v2833 = vpop.f32.mrb[0].mxu0
        %v2834 = vadd.f32 %v2673, %v2833
        %v2835 = vpop.f32.mrb[0].mxu0
        %v2836 = vpop.f32.mrb[0].mxu0
        %v2837 = vadd.f32 %v2676, %v2836
        %v2838 = vpop.f32.mrb[0].mxu0
        %2839 = vmatprep.mubr.bf16.mxu0 0
        %2840 = vmatmul.mubr.bf16.gmra.mrb[0].mxu0 %v1036
        %v2841 = vpop.f32.mrb[0].mxu0
        %v2842 = vadd.f32 %v2681, %v2841
        %v2843 = vpop.f32.mrb[0].mxu0
        %v2844 = vpop.f32.mrb[0].mxu0
        %v2845 = vadd.f32 %v2684, %v2844
        %v2846 = vpop.f32.mrb[0].mxu0
        %2847 = vmatprep.mubr.bf16.mxu0 0
        %2848 = vmatmul.mubr.bf16.gmra.mrb[0].mxu0 %v1039
        %v2849 = vpop.f32.mrb[0].mxu0
        %v2850 = vadd.f32 %v2689, %v2849
        %v2851 = vpop.f32.mrb[0].mxu0
        %v2852 = vpop.f32.mrb[0].mxu0
        %v2853 = vadd.f32 %v2692, %v2852
        %v2854 = vpop.f32.mrb[0].mxu0
        %2855 = vmatprep.mubr.bf16.mxu0 0
        %2856 = vmatmul.mubr.bf16.gmra.mrb[0].mxu0 %v1042
        %v2857 = vpop.f32.mrb[0].mxu0
        %v2858 = vadd.f32 %v2697, %v2857
        %v2859 = vpop.f32.mrb[0].mxu0
        %v2860 = vpop.f32.mrb[0].mxu0
        %v2861 = vadd.f32 %v2700, %v2860
        %v2862 = vpop.f32.mrb[0].mxu0
        %2863 = vmatprep.mubr.bf16.mxu0 0
        %2864 = vmatmul.mubr.bf16.gmra.mrb[0].mxu0 %v1045
        %v2865 = vpop.f32.mrb[0].mxu0
        %v2866 = vadd.f32 %v2705, %v2865
        %v2867 = vpop.f32.mrb[0].mxu0
        %v2868 = vpop.f32.mrb[0].mxu0
        %v2869 = vadd.f32 %v2708, %v2868
        %v2870 = vpop.f32.mrb[0].mxu0
        %2871 = vmatprep.mubr.bf16.mxu0 0
        %2872 = vmatmul.mubr.bf16.gmra.mrb[0].mxu0 %v1048
        %v2873 = vpop.f32.mrb[0].mxu0
        %v2874 = vadd.f32 %v2713, %v2873
        %v2875 = vpop.f32.mrb[0].mxu0
        %v2876 = vpop.f32.mrb[0].mxu0
        %v2877 = vadd.f32 %v2716, %v2876
        %v2878 = vpop.f32.mrb[0].mxu0
        %2879 = vmatprep.mubr.bf16.mxu0 0
        %2880 = vmatmul.mubr.bf16.gmra.mrb[0].mxu0 %v1051
        %v2881 = vpop.f32.mrb[0].mxu0
        %v2882 = vadd.f32 %v2721, %v2881
        %v2883 = vpop.f32.mrb[0].mxu0
        %v2884 = vpop.f32.mrb[0].mxu0
        %v2885 = vadd.f32 %v2724, %v2884
        %v2886 = vpop.f32.mrb[0].mxu0
        %2887 = vmatprep.mubr.bf16.mxu0 0
        %2888 = vmatmul.mubr.bf16.gmra.mrb[0].mxu0 %v1054
        %v2889 = vpop.f32.mrb[0].mxu0
        %v2890 = vadd.f32 %v2729, %v2889
        %v2891 = vpop.f32.mrb[0].mxu0
        %v2892 = vpop.f32.mrb[0].mxu0
        %v2893 = vadd.f32 %v2732, %v2892
        %v2894 = vpop.f32.mrb[0].mxu0
        %2895 = vmatprep.mubr.bf16.mxu0 0
        %2896 = vmatmul.mubr.bf16.gmra.mrb[0].mxu0 %v1057
        %v2897 = vpop.f32.mrb[0].mxu0
        %v2898 = vadd.f32 %v2737, %v2897
        %v2899 = vpop.f32.mrb[0].mxu0
        %v2900 = vpop.f32.mrb[0].mxu0
        %v2901 = vadd.f32 %v2740, %v2900
        %v2902 = vpop.f32.mrb[0].mxu0
        %2903 = vmatprep.mubr.bf16.mxu0 0
        %2904 = vmatmul.mubr.bf16.gmra.mrb[0].mxu0 %v1060
        %v2905 = vpop.f32.mrb[0].mxu0
        %v2906 = vadd.f32 %v2745, %v2905
        %v2907 = vpop.f32.mrb[0].mxu0
        %v2908 = vpop.f32.mrb[0].mxu0
        %v2909 = vadd.f32 %v2748, %v2908
        %v2910 = vpop.f32.mrb[0].mxu0
        %2911 = vmatprep.mubr.bf16.mxu0 0
        %2912 = vmatmul.mubr.bf16.gmra.mrb[0].mxu0 %v1063
        %v2913 = vpop.f32.mrb[0].mxu0
        %v2914 = vadd.f32 %v2753, %v2913
        %v2915 = vpop.f32.mrb[0].mxu0
        %v2916 = vpop.f32.mrb[0].mxu0
        %v2917 = vadd.f32 %v2756, %v2916
        %v2918 = vpop.f32.mrb[0].mxu0
        %2919 = vmatprep.mubr.bf16.mxu0 0
        %2920 = vmatmul.mubr.bf16.gmra.mrb[0].mxu0 %v1066
        %v2921 = vpop.f32.mrb[0].mxu0
        %v2922 = vadd.f32 %v2761, %v2921
        %v2923 = vpop.f32.mrb[0].mxu0
        %v2924 = vpop.f32.mrb[0].mxu0
        %v2925 = vadd.f32 %v2764, %v2924
        %v2926 = vpop.f32.mrb[0].mxu0
        %2927 = vmatprep.mubr.bf16.mxu0 0
        %2928 = vmatmul.mubr.bf16.gmra.mrb[0].mxu0 %v1069
        %v2929 = vpop.f32.mrb[0].mxu0
        %v2930 = vadd.f32 %v2769, %v2929
        %v2931 = vpop.f32.mrb[0].mxu0
        %v2932 = vpop.f32.mrb[0].mxu0
        %v2933 = vadd.f32 %v2772, %v2932
        %v2934 = vpop.f32.mrb[0].mxu0
        %2935 = vmatprep.mubr.bf16.mxu0 0
        %2936 = vmatmul.mubr.bf16.gmra.mrb[0].mxu0 %v1072
        %v2937 = vpop.f32.mrb[0].mxu0
        %v2938 = vadd.f32 %v2777, %v2937
        %v2939 = vpop.f32.mrb[0].mxu0
        %v2940 = vpop.f32.mrb[0].mxu0
        %v2941 = vadd.f32 %v2780, %v2940
        %v2942 = vpop.f32.mrb[0].mxu0
        %2943 = vmatprep.mubr.bf16.mxu0 0
        %2944 = vmatmul.mubr.bf16.gmra.mrb[0].mxu0 %v1075
        %v2945 = vpop.f32.mrb[0].mxu0
        %v2946 = vadd.f32 %v2785, %v2945
        %v2947 = vpop.f32.mrb[0].mxu0
        %v2948 = vpop.f32.mrb[0].mxu0
        %v2949 = vadd.f32 %v2788, %v2948
        %v2950 = vpop.f32.mrb[0].mxu0
        %2951 = vmatprep.mubr.bf16.mxu0 0
        %2952 = vmatmul.mubr.bf16.gmra.mrb[0].mxu0 %v1078
        %v2953 = vpop.f32.mrb[0].mxu0
        %v2954 = vadd.f32 %v2793, %v2953
        %v2955 = vpop.f32.mrb[0].mxu0
        %v2956 = vpop.f32.mrb[0].mxu0
        %v2957 = vadd.f32 %v2796, %v2956
        %v2958 = vpop.f32.mrb[0].mxu0
        %2959 = vdwg.mxu0
        %s2960 = sadd.s32 %s225, 2
        %s2961 = smul.u32 %s2960, 3
        %s2962 = smul.addr %s2961, 4
        %s2963 = scalar_lea.vmem %s215, %s2962
        %v2964 = vld [vmem:[%s2963] sm:$0xf]
        %v2965 = vld [vmem:[%s2963 + $0x4] sm:$0xf]
        %v2966 = vld [vmem:[%s2963 + $0xc] sm:$0xf]
        %v2967 = vld [vmem:[%s2963 + $0x10] sm:$0xf]
        %v2968 = vld [vmem:[%s2963 + $0x18] sm:$0xf]
        %v2969 = vld [vmem:[%s2963 + $0x1c] sm:$0xf]
        %v2970 = vld [vmem:[%s2963 + $0x24] sm:$0xf]
        %v2971 = vld [vmem:[%s2963 + $0x28] sm:$0xf]
        %v2972 = vld [vmem:[%s2963 + $0x30] sm:$0xf]
        %v2973 = vld [vmem:[%s2963 + $0x34] sm:$0xf]
        %v2974 = vld [vmem:[%s2963 + $0x3c] sm:$0xf]
        %v2975 = vld [vmem:[%s2963 + $0x40] sm:$0xf]
        %v2976 = vld [vmem:[%s2963 + $0x48] sm:$0xf]
        %v2977 = vld [vmem:[%s2963 + $0x4c] sm:$0xf]
        %v2978 = vld [vmem:[%s2963 + $0x54] sm:$0xf]
        %v2979 = vld [vmem:[%s2963 + $0x58] sm:$0xf]
        %v2980 = vld [vmem:[%s2963 + $0x60] sm:$0xf]
        %v2981 = vld [vmem:[%s2963 + $0x64] sm:$0xf]
        %v2982 = vld [vmem:[%s2963 + $0x6c] sm:$0xf]
        %v2983 = vld [vmem:[%s2963 + $0x70] sm:$0xf]
        %v2984 = vld [vmem:[%s2963 + $0x78] sm:$0xf]
        %v2985 = vld [vmem:[%s2963 + $0x7c] sm:$0xf]
        %v2986 = vld [vmem:[%s2963 + $0x84] sm:$0xf]
        %v2987 = vld [vmem:[%s2963 + $0x88] sm:$0xf]
        %v2988 = vld [vmem:[%s2963 + $0x90] sm:$0xf]
        %v2989 = vld [vmem:[%s2963 + $0x94] sm:$0xf]
        %v2990 = vld [vmem:[%s2963 + $0x9c] sm:$0xf]
        %v2991 = vld [vmem:[%s2963 + $0xa0] sm:$0xf]
        %v2992 = vld [vmem:[%s2963 + $0xa8] sm:$0xf]
        %v2993 = vld [vmem:[%s2963 + $0xac] sm:$0xf]
        %v2994 = vld [vmem:[%s2963 + $0xb4] sm:$0xf]
        %v2995 = vld [vmem:[%s2963 + $0xb8] sm:$0xf]
        %v3028 = vunpack.c.l.b16 %v2964
        %v3029 = vunpack.c.l.b16 %v2965
        %v3030 = vunpack.c.l.b16 %v2966
        %v3031 = vunpack.c.l.b16 %v2967
        %v3032 = vunpack.c.l.b16 %v2968
        %v3033 = vunpack.c.l.b16 %v2969
        %v3034 = vunpack.c.l.b16 %v2970
        %v3035 = vunpack.c.l.b16 %v2971
        %v3036 = vunpack.c.l.b16 %v2972
        %v3037 = vunpack.c.l.b16 %v2973
        %v3038 = vunpack.c.l.b16 %v2974
        %v3039 = vunpack.c.l.b16 %v2975
        %v3040 = vunpack.c.l.b16 %v2976
        %v3041 = vunpack.c.l.b16 %v2977
        %v3042 = vunpack.c.l.b16 %v2978
        %v3043 = vunpack.c.l.b16 %v2979
        %v3044 = vunpack.c.l.b16 %v2980
        %v3045 = vunpack.c.l.b16 %v2981
        %v3046 = vunpack.c.l.b16 %v2982
        %v3047 = vunpack.c.l.b16 %v2983
        %v3048 = vunpack.c.l.b16 %v2984
        %v3049 = vunpack.c.l.b16 %v2985
        %v3050 = vunpack.c.l.b16 %v2986
        %v3051 = vunpack.c.l.b16 %v2987
        %v3052 = vunpack.c.l.b16 %v2988
        %v3053 = vunpack.c.l.b16 %v2989
        %v3054 = vunpack.c.l.b16 %v2990
        %v3055 = vunpack.c.l.b16 %v2991
        %v3056 = vunpack.c.l.b16 %v2992
        %v3057 = vunpack.c.l.b16 %v2993
        %v3058 = vunpack.c.l.b16 %v2994
        %v3059 = vunpack.c.l.b16 %v2995
        %v3060 = vpack.c.b16 %v3029, %v3028
        %v3061 = vpack.c.b16 %v3031, %v3030
        %v3062 = vpack.c.b16 %v3033, %v3032
        %v3063 = vpack.c.b16 %v3035, %v3034
        %v3064 = vpack.c.b16 %v3037, %v3036
        %v3065 = vpack.c.b16 %v3039, %v3038
        %v3066 = vpack.c.b16 %v3041, %v3040
        %v3067 = vpack.c.b16 %v3043, %v3042
        %v3068 = vpack.c.b16 %v3045, %v3044
        %v3069 = vpack.c.b16 %v3047, %v3046
        %v3070 = vpack.c.b16 %v3049, %v3048
        %v3071 = vpack.c.b16 %v3051, %v3050
        %v3072 = vpack.c.b16 %v3053, %v3052
        %v3073 = vpack.c.b16 %v3055, %v3054
        %v3074 = vpack.c.b16 %v3057, %v3056
        %v3075 = vpack.c.b16 %v3059, %v3058
        %3092 = vst [vmem:[#allocation2 + $0x30] sm:$0xff] %v3060
        %3093 = vst [vmem:[#allocation2 + $0x78] sm:$0xff] %v3061
        %3094 = vst [vmem:[#allocation2 + $0xc0] sm:$0xff] %v3062
        %3095 = vst [vmem:[#allocation2 + $0x108] sm:$0xff] %v3063
        %3096 = vst [vmem:[#allocation2 + $0x150] sm:$0xff] %v3064
        %3097 = vst [vmem:[#allocation2 + $0x198] sm:$0xff] %v3065
        %3098 = vst [vmem:[#allocation2 + $0x1e0] sm:$0xff] %v3066
        %3099 = vst [vmem:[#allocation2 + $0x228] sm:$0xff] %v3067
        %3100 = vst [vmem:[#allocation2 + $0x270] sm:$0xff] %v3068
        %3101 = vst [vmem:[#allocation2 + $0x2b8] sm:$0xff] %v3069
        %3102 = vst [vmem:[#allocation2 + $0x300] sm:$0xff] %v3070
        %3103 = vst [vmem:[#allocation2 + $0x348] sm:$0xff] %v3071
        %3104 = vst [vmem:[#allocation2 + $0x390] sm:$0xff] %v3072
        %3105 = vst [vmem:[#allocation2 + $0x3d8] sm:$0xff] %v3073
        %3106 = vst [vmem:[#allocation2 + $0x420] sm:$0xff] %v3074
        %3107 = vst [vmem:[#allocation2 + $0x468] sm:$0xff] %v3075
        %v3108 = vld [vmem:[%s2963] sm:$0xf]
        %v3109 = vld [vmem:[%s2963 + $0x4] sm:$0xf]
        %v3110 = vld [vmem:[%s2963 + $0x8] sm:$0x1]
        %v3111 = vld [vmem:[%s2963 + $0xc] sm:$0xf]
        %v3112 = vld [vmem:[%s2963 + $0x10] sm:$0xf]
        %v3113 = vld [vmem:[%s2963 + $0x14] sm:$0x1]
        %v3114 = vld [vmem:[%s2963 + $0x18] sm:$0xf]
        %v3115 = vld [vmem:[%s2963 + $0x1c] sm:$0xf]
        %v3116 = vld [vmem:[%s2963 + $0x20] sm:$0x1]
        %v3117 = vld [vmem:[%s2963 + $0x24] sm:$0xf]
        %v3118 = vld [vmem:[%s2963 + $0x28] sm:$0xf]
        %v3119 = vld [vmem:[%s2963 + $0x2c] sm:$0x1]
        %v3120 = vld [vmem:[%s2963 + $0x30] sm:$0xf]
        %v3121 = vld [vmem:[%s2963 + $0x34] sm:$0xf]
        %v3122 = vld [vmem:[%s2963 + $0x38] sm:$0x1]
        %v3123 = vld [vmem:[%s2963 + $0x3c] sm:$0xf]
        %v3124 = vld [vmem:[%s2963 + $0x40] sm:$0xf]
        %v3125 = vld [vmem:[%s2963 + $0x44] sm:$0x1]
        %v3126 = vld [vmem:[%s2963 + $0x48] sm:$0xf]
        %v3127 = vld [vmem:[%s2963 + $0x4c] sm:$0xf]
        %v3128 = vld [vmem:[%s2963 + $0x50] sm:$0x1]
        %v3129 = vld [vmem:[%s2963 + $0x54] sm:$0xf]
        %v3130 = vld [vmem:[%s2963 + $0x58] sm:$0xf]
        %v3131 = vld [vmem:[%s2963 + $0x5c] sm:$0x1]
        %v3132 = vld [vmem:[%s2963 + $0x60] sm:$0xf]
        %v3133 = vld [vmem:[%s2963 + $0x64] sm:$0xf]
        %v3134 = vld [vmem:[%s2963 + $0x68] sm:$0x1]
        %v3135 = vld [vmem:[%s2963 + $0x6c] sm:$0xf]
        %v3136 = vld [vmem:[%s2963 + $0x70] sm:$0xf]
        %v3137 = vld [vmem:[%s2963 + $0x74] sm:$0x1]
        %v3138 = vld [vmem:[%s2963 + $0x78] sm:$0xf]
        %v3139 = vld [vmem:[%s2963 + $0x7c] sm:$0xf]
        %v3140 = vld [vmem:[%s2963 + $0x80] sm:$0x1]
        %v3141 = vld [vmem:[%s2963 + $0x84] sm:$0xf]
        %v3142 = vld [vmem:[%s2963 + $0x88] sm:$0xf]
        %v3143 = vld [vmem:[%s2963 + $0x8c] sm:$0x1]
        %v3144 = vld [vmem:[%s2963 + $0x90] sm:$0xf]
        %v3145 = vld [vmem:[%s2963 + $0x94] sm:$0xf]
        %v3146 = vld [vmem:[%s2963 + $0x98] sm:$0x1]
        %v3147 = vld [vmem:[%s2963 + $0x9c] sm:$0xf]
        %v3148 = vld [vmem:[%s2963 + $0xa0] sm:$0xf]
        %v3149 = vld [vmem:[%s2963 + $0xa4] sm:$0x1]
        %v3150 = vld [vmem:[%s2963 + $0xa8] sm:$0xf]
        %v3151 = vld [vmem:[%s2963 + $0xac] sm:$0xf]
        %v3152 = vld [vmem:[%s2963 + $0xb0] sm:$0x1]
        %v3153 = vld [vmem:[%s2963 + $0xb4] sm:$0xf]
        %v3154 = vld [vmem:[%s2963 + $0xb8] sm:$0xf]
        %v3155 = vld [vmem:[%s2963 + $0xbc] sm:$0x1]
        %v3204 = vunpack.c.l.b16 %v3108
        %v3205 = vunpack.c.l.b16 %v3109
        %v3206 = vunpack.c.l.b16 %v3110
        %v3207 = vunpack.c.l.b16 %v3111
        %v3208 = vunpack.c.l.b16 %v3112
        %v3209 = vunpack.c.l.b16 %v3113
        %v3210 = vunpack.c.l.b16 %v3114
        %v3211 = vunpack.c.l.b16 %v3115
        %v3212 = vunpack.c.l.b16 %v3116
        %v3213 = vunpack.c.l.b16 %v3117
        %v3214 = vunpack.c.l.b16 %v3118
        %v3215 = vunpack.c.l.b16 %v3119
        %v3216 = vunpack.c.l.b16 %v3120
        %v3217 = vunpack.c.l.b16 %v3121
        %v3218 = vunpack.c.l.b16 %v3122
        %v3219 = vunpack.c.l.b16 %v3123
        %v3220 = vunpack.c.l.b16 %v3124
        %v3221 = vunpack.c.l.b16 %v3125
        %v3222 = vunpack.c.l.b16 %v3126
        %v3223 = vunpack.c.l.b16 %v3127
        %v3224 = vunpack.c.l.b16 %v3128
        %v3225 = vunpack.c.l.b16 %v3129
        %v3226 = vunpack.c.l.b16 %v3130
        %v3227 = vunpack.c.l.b16 %v3131
        %v3228 = vunpack.c.l.b16 %v3132
        %v3229 = vunpack.c.l.b16 %v3133
        %v3230 = vunpack.c.l.b16 %v3134
        %v3231 = vunpack.c.l.b16 %v3135
        %v3232 = vunpack.c.l.b16 %v3136
        %v3233 = vunpack.c.l.b16 %v3137
        %v3234 = vunpack.c.l.b16 %v3138
        %v3235 = vunpack.c.l.b16 %v3139
        %v3236 = vunpack.c.l.b16 %v3140
        %v3237 = vunpack.c.l.b16 %v3141
        %v3238 = vunpack.c.l.b16 %v3142
        %v3239 = vunpack.c.l.b16 %v3143
        %v3240 = vunpack.c.l.b16 %v3144
        %v3241 = vunpack.c.l.b16 %v3145
        %v3242 = vunpack.c.l.b16 %v3146
        %v3243 = vunpack.c.l.b16 %v3147
        %v3244 = vunpack.c.l.b16 %v3148
        %v3245 = vunpack.c.l.b16 %v3149
        %v3246 = vunpack.c.l.b16 %v3150
        %v3247 = vunpack.c.l.b16 %v3151
        %v3248 = vunpack.c.l.b16 %v3152
        %v3249 = vunpack.c.l.b16 %v3153
        %v3250 = vunpack.c.l.b16 %v3154
        %v3251 = vunpack.c.l.b16 %v3155
        %v3252 = vpack.c.b16 %v3205, %v3204
        %v3253 = vpack.c.b16 %v3206, %v3206
        %v3254 = vpack.c.b16 %v3208, %v3207
        %v3255 = vpack.c.b16 %v3209, %v3209
        %v3256 = vpack.c.b16 %v3211, %v3210
        %v3257 = vpack.c.b16 %v3212, %v3212
        %v3258 = vpack.c.b16 %v3214, %v3213
        %v3259 = vpack.c.b16 %v3215, %v3215
        %v3260 = vpack.c.b16 %v3217, %v3216
        %v3261 = vpack.c.b16 %v3218, %v3218
        %v3262 = vpack.c.b16 %v3220, %v3219
        %v3263 = vpack.c.b16 %v3221, %v3221
        %v3264 = vpack.c.b16 %v3223, %v3222
        %v3265 = vpack.c.b16 %v3224, %v3224
        %v3266 = vpack.c.b16 %v3226, %v3225
        %v3267 = vpack.c.b16 %v3227, %v3227
        %v3268 = vpack.c.b16 %v3229, %v3228
        %v3269 = vpack.c.b16 %v3230, %v3230
        %v3270 = vpack.c.b16 %v3232, %v3231
        %v3271 = vpack.c.b16 %v3233, %v3233
        %v3272 = vpack.c.b16 %v3235, %v3234
        %v3273 = vpack.c.b16 %v3236, %v3236
        %v3274 = vpack.c.b16 %v3238, %v3237
        %v3275 = vpack.c.b16 %v3239, %v3239
        %v3276 = vpack.c.b16 %v3241, %v3240
        %v3277 = vpack.c.b16 %v3242, %v3242
        %v3278 = vpack.c.b16 %v3244, %v3243
        %v3279 = vpack.c.b16 %v3245, %v3245
        %v3280 = vpack.c.b16 %v3247, %v3246
        %v3281 = vpack.c.b16 %v3248, %v3248
        %v3282 = vpack.c.b16 %v3250, %v3249
        %v3283 = vpack.c.b16 %v3251, %v3251
        %v3285 = vshrl.u32 %v3252, 16
        %v3287 = vshll.u32 %v3252, 16
        %v3289 = vrot.slane %v3287, 1
        %v3290 = vor.u32 %v3285, %v3289
        %v3292 = vshll.u32 %v3253, 16
        %v3294 = vrot.slane %v3292, 1
        %v3295 = vsel %vm549, %v3290, %v3294
        %v3297 = vshrl.u32 %v3254, 16
        %v3299 = vshll.u32 %v3254, 16
        %v3301 = vrot.slane %v3299, 1
        %v3302 = vor.u32 %v3297, %v3301
        %v3304 = vshll.u32 %v3255, 16
        %v3306 = vrot.slane %v3304, 1
        %v3307 = vsel %vm549, %v3302, %v3306
        %v3309 = vshrl.u32 %v3256, 16
        %v3311 = vshll.u32 %v3256, 16
        %v3313 = vrot.slane %v3311, 1
        %v3314 = vor.u32 %v3309, %v3313
        %v3316 = vshll.u32 %v3257, 16
        %v3318 = vrot.slane %v3316, 1
        %v3319 = vsel %vm549, %v3314, %v3318
        %v3321 = vshrl.u32 %v3258, 16
        %v3323 = vshll.u32 %v3258, 16
        %v3325 = vrot.slane %v3323, 1
        %v3326 = vor.u32 %v3321, %v3325
        %v3328 = vshll.u32 %v3259, 16
        %v3330 = vrot.slane %v3328, 1
        %v3331 = vsel %vm549, %v3326, %v3330
        %v3333 = vshrl.u32 %v3260, 16
        %v3335 = vshll.u32 %v3260, 16
        %v3337 = vrot.slane %v3335, 1
        %v3338 = vor.u32 %v3333, %v3337
        %v3340 = vshll.u32 %v3261, 16
        %v3342 = vrot.slane %v3340, 1
        %v3343 = vsel %vm549, %v3338, %v3342
        %v3345 = vshrl.u32 %v3262, 16
        %v3347 = vshll.u32 %v3262, 16
        %v3349 = vrot.slane %v3347, 1
        %v3350 = vor.u32 %v3345, %v3349
        %v3352 = vshll.u32 %v3263, 16
        %v3354 = vrot.slane %v3352, 1
        %v3355 = vsel %vm549, %v3350, %v3354
        %v3357 = vshrl.u32 %v3264, 16
        %v3359 = vshll.u32 %v3264, 16
        %v3361 = vrot.slane %v3359, 1
        %v3362 = vor.u32 %v3357, %v3361
        %v3364 = vshll.u32 %v3265, 16
        %v3366 = vrot.slane %v3364, 1
        %v3367 = vsel %vm549, %v3362, %v3366
        %v3369 = vshrl.u32 %v3266, 16
        %v3371 = vshll.u32 %v3266, 16
        %v3373 = vrot.slane %v3371, 1
        %v3374 = vor.u32 %v3369, %v3373
        %v3376 = vshll.u32 %v3267, 16
        %v3378 = vrot.slane %v3376, 1
        %v3379 = vsel %vm549, %v3374, %v3378
        %v3381 = vshrl.u32 %v3268, 16
        %v3383 = vshll.u32 %v3268, 16
        %v3385 = vrot.slane %v3383, 1
        %v3386 = vor.u32 %v3381, %v3385
        %v3388 = vshll.u32 %v3269, 16
        %v3390 = vrot.slane %v3388, 1
        %v3391 = vsel %vm549, %v3386, %v3390
        %v3393 = vshrl.u32 %v3270, 16
        %v3395 = vshll.u32 %v3270, 16
        %v3397 = vrot.slane %v3395, 1
        %v3398 = vor.u32 %v3393, %v3397
        %v3400 = vshll.u32 %v3271, 16
        %v3402 = vrot.slane %v3400, 1
        %v3403 = vsel %vm549, %v3398, %v3402
        %v3405 = vshrl.u32 %v3272, 16
        %v3407 = vshll.u32 %v3272, 16
        %v3409 = vrot.slane %v3407, 1
        %v3410 = vor.u32 %v3405, %v3409
        %v3412 = vshll.u32 %v3273, 16
        %v3414 = vrot.slane %v3412, 1
        %v3415 = vsel %vm549, %v3410, %v3414
        %v3417 = vshrl.u32 %v3274, 16
        %v3419 = vshll.u32 %v3274, 16
        %v3421 = vrot.slane %v3419, 1
        %v3422 = vor.u32 %v3417, %v3421
        %v3424 = vshll.u32 %v3275, 16
        %v3426 = vrot.slane %v3424, 1
        %v3427 = vsel %vm549, %v3422, %v3426
        %v3429 = vshrl.u32 %v3276, 16
        %v3431 = vshll.u32 %v3276, 16
        %v3433 = vrot.slane %v3431, 1
        %v3434 = vor.u32 %v3429, %v3433
        %v3436 = vshll.u32 %v3277, 16
        %v3438 = vrot.slane %v3436, 1
        %v3439 = vsel %vm549, %v3434, %v3438
        %v3441 = vshrl.u32 %v3278, 16
        %v3443 = vshll.u32 %v3278, 16
        %v3445 = vrot.slane %v3443, 1
        %v3446 = vor.u32 %v3441, %v3445
        %v3448 = vshll.u32 %v3279, 16
        %v3450 = vrot.slane %v3448, 1
        %v3451 = vsel %vm549, %v3446, %v3450
        %v3453 = vshrl.u32 %v3280, 16
        %v3455 = vshll.u32 %v3280, 16
        %v3457 = vrot.slane %v3455, 1
        %v3458 = vor.u32 %v3453, %v3457
        %v3460 = vshll.u32 %v3281, 16
        %v3462 = vrot.slane %v3460, 1
        %v3463 = vsel %vm549, %v3458, %v3462
        %v3465 = vshrl.u32 %v3282, 16
        %v3467 = vshll.u32 %v3282, 16
        %v3469 = vrot.slane %v3467, 1
        %v3470 = vor.u32 %v3465, %v3469
        %v3472 = vshll.u32 %v3283, 16
        %v3474 = vrot.slane %v3472, 1
        %v3475 = vsel %vm549, %v3470, %v3474
        %3492 = vst [vmem:[#allocation2 + $0x38] sm:$0xff] %v3295
        %3493 = vst [vmem:[#allocation2 + $0x80] sm:$0xff] %v3307
        %3494 = vst [vmem:[#allocation2 + $0xc8] sm:$0xff] %v3319
        %3495 = vst [vmem:[#allocation2 + $0x110] sm:$0xff] %v3331
        %3496 = vst [vmem:[#allocation2 + $0x158] sm:$0xff] %v3343
        %3497 = vst [vmem:[#allocation2 + $0x1a0] sm:$0xff] %v3355
        %3498 = vst [vmem:[#allocation2 + $0x1e8] sm:$0xff] %v3367
        %3499 = vst [vmem:[#allocation2 + $0x230] sm:$0xff] %v3379
        %3500 = vst [vmem:[#allocation2 + $0x278] sm:$0xff] %v3391
        %3501 = vst [vmem:[#allocation2 + $0x2c0] sm:$0xff] %v3403
        %3502 = vst [vmem:[#allocation2 + $0x308] sm:$0xff] %v3415
        %3503 = vst [vmem:[#allocation2 + $0x350] sm:$0xff] %v3427
        %3504 = vst [vmem:[#allocation2 + $0x398] sm:$0xff] %v3439
        %3505 = vst [vmem:[#allocation2 + $0x3e0] sm:$0xff] %v3451
        %3506 = vst [vmem:[#allocation2 + $0x428] sm:$0xff] %v3463
        %3507 = vst [vmem:[#allocation2 + $0x470] sm:$0xff] %v3475
        %v3508 = vld [vmem:[%s2963] sm:$0xe]
        %v3509 = vld [vmem:[%s2963 + $0x4] sm:$0xf]
        %v3510 = vld [vmem:[%s2963 + $0x8] sm:$0x1]
        %v3511 = vld [vmem:[%s2963 + $0xc] sm:$0xe]
        %v3512 = vld [vmem:[%s2963 + $0x10] sm:$0xf]
        %v3513 = vld [vmem:[%s2963 + $0x14] sm:$0x1]
        %v3514 = vld [vmem:[%s2963 + $0x18] sm:$0xe]
        %v3515 = vld [vmem:[%s2963 + $0x1c] sm:$0xf]
        %v3516 = vld [vmem:[%s2963 + $0x20] sm:$0x1]
        %v3517 = vld [vmem:[%s2963 + $0x24] sm:$0xe]
        %v3518 = vld [vmem:[%s2963 + $0x28] sm:$0xf]
        %v3519 = vld [vmem:[%s2963 + $0x2c] sm:$0x1]
        %v3520 = vld [vmem:[%s2963 + $0x30] sm:$0xe]
        %v3521 = vld [vmem:[%s2963 + $0x34] sm:$0xf]
        %v3522 = vld [vmem:[%s2963 + $0x38] sm:$0x1]
        %v3523 = vld [vmem:[%s2963 + $0x3c] sm:$0xe]
        %v3524 = vld [vmem:[%s2963 + $0x40] sm:$0xf]
        %v3525 = vld [vmem:[%s2963 + $0x44] sm:$0x1]
        %v3526 = vld [vmem:[%s2963 + $0x48] sm:$0xe]
        %v3527 = vld [vmem:[%s2963 + $0x4c] sm:$0xf]
        %v3528 = vld [vmem:[%s2963 + $0x50] sm:$0x1]
        %v3529 = vld [vmem:[%s2963 + $0x54] sm:$0xe]
        %v3530 = vld [vmem:[%s2963 + $0x58] sm:$0xf]
        %v3531 = vld [vmem:[%s2963 + $0x5c] sm:$0x1]
        %v3532 = vld [vmem:[%s2963 + $0x60] sm:$0xe]
        %v3533 = vld [vmem:[%s2963 + $0x64] sm:$0xf]
        %v3534 = vld [vmem:[%s2963 + $0x68] sm:$0x1]
        %v3535 = vld [vmem:[%s2963 + $0x6c] sm:$0xe]
        %v3536 = vld [vmem:[%s2963 + $0x70] sm:$0xf]
        %v3537 = vld [vmem:[%s2963 + $0x74] sm:$0x1]
        %v3538 = vld [vmem:[%s2963 + $0x78] sm:$0xe]
        %v3539 = vld [vmem:[%s2963 + $0x7c] sm:$0xf]
        %v3540 = vld [vmem:[%s2963 + $0x80] sm:$0x1]
        %v3541 = vld [vmem:[%s2963 + $0x84] sm:$0xe]
        %v3542 = vld [vmem:[%s2963 + $0x88] sm:$0xf]
        %v3543 = vld [vmem:[%s2963 + $0x8c] sm:$0x1]
        %v3544 = vld [vmem:[%s2963 + $0x90] sm:$0xe]
        %v3545 = vld [vmem:[%s2963 + $0x94] sm:$0xf]
        %v3546 = vld [vmem:[%s2963 + $0x98] sm:$0x1]
        %v3547 = vld [vmem:[%s2963 + $0x9c] sm:$0xe]
        %v3548 = vld [vmem:[%s2963 + $0xa0] sm:$0xf]
        %v3549 = vld [vmem:[%s2963 + $0xa4] sm:$0x1]
        %v3550 = vld [vmem:[%s2963 + $0xa8] sm:$0xe]
        %v3551 = vld [vmem:[%s2963 + $0xac] sm:$0xf]
        %v3552 = vld [vmem:[%s2963 + $0xb0] sm:$0x1]
        %v3553 = vld [vmem:[%s2963 + $0xb4] sm:$0xe]
        %v3554 = vld [vmem:[%s2963 + $0xb8] sm:$0xf]
        %v3555 = vld [vmem:[%s2963 + $0xbc] sm:$0x1]
        %v3604 = vunpack.c.l.b16 %v3508
        %v3605 = vunpack.c.l.b16 %v3509
        %v3606 = vunpack.c.l.b16 %v3510
        %v3607 = vunpack.c.l.b16 %v3511
        %v3608 = vunpack.c.l.b16 %v3512
        %v3609 = vunpack.c.l.b16 %v3513
        %v3610 = vunpack.c.l.b16 %v3514
        %v3611 = vunpack.c.l.b16 %v3515
        %v3612 = vunpack.c.l.b16 %v3516
        %v3613 = vunpack.c.l.b16 %v3517
        %v3614 = vunpack.c.l.b16 %v3518
        %v3615 = vunpack.c.l.b16 %v3519
        %v3616 = vunpack.c.l.b16 %v3520
        %v3617 = vunpack.c.l.b16 %v3521
        %v3618 = vunpack.c.l.b16 %v3522
        %v3619 = vunpack.c.l.b16 %v3523
        %v3620 = vunpack.c.l.b16 %v3524
        %v3621 = vunpack.c.l.b16 %v3525
        %v3622 = vunpack.c.l.b16 %v3526
        %v3623 = vunpack.c.l.b16 %v3527
        %v3624 = vunpack.c.l.b16 %v3528
        %v3625 = vunpack.c.l.b16 %v3529
        %v3626 = vunpack.c.l.b16 %v3530
        %v3627 = vunpack.c.l.b16 %v3531
        %v3628 = vunpack.c.l.b16 %v3532
        %v3629 = vunpack.c.l.b16 %v3533
        %v3630 = vunpack.c.l.b16 %v3534
        %v3631 = vunpack.c.l.b16 %v3535
        %v3632 = vunpack.c.l.b16 %v3536
        %v3633 = vunpack.c.l.b16 %v3537
        %v3634 = vunpack.c.l.b16 %v3538
        %v3635 = vunpack.c.l.b16 %v3539
        %v3636 = vunpack.c.l.b16 %v3540
        %v3637 = vunpack.c.l.b16 %v3541
        %v3638 = vunpack.c.l.b16 %v3542
        %v3639 = vunpack.c.l.b16 %v3543
        %v3640 = vunpack.c.l.b16 %v3544
        %v3641 = vunpack.c.l.b16 %v3545
        %v3642 = vunpack.c.l.b16 %v3546
        %v3643 = vunpack.c.l.b16 %v3547
        %v3644 = vunpack.c.l.b16 %v3548
        %v3645 = vunpack.c.l.b16 %v3549
        %v3646 = vunpack.c.l.b16 %v3550
        %v3647 = vunpack.c.l.b16 %v3551
        %v3648 = vunpack.c.l.b16 %v3552
        %v3649 = vunpack.c.l.b16 %v3553
        %v3650 = vunpack.c.l.b16 %v3554
        %v3651 = vunpack.c.l.b16 %v3555
        %v3652 = vpack.c.b16 %v3605, %v3604
        %v3653 = vpack.c.b16 %v3606, %v3606
        %v3654 = vpack.c.b16 %v3608, %v3607
        %v3655 = vpack.c.b16 %v3609, %v3609
        %v3656 = vpack.c.b16 %v3611, %v3610
        %v3657 = vpack.c.b16 %v3612, %v3612
        %v3658 = vpack.c.b16 %v3614, %v3613
        %v3659 = vpack.c.b16 %v3615, %v3615
        %v3660 = vpack.c.b16 %v3617, %v3616
        %v3661 = vpack.c.b16 %v3618, %v3618
        %v3662 = vpack.c.b16 %v3620, %v3619
        %v3663 = vpack.c.b16 %v3621, %v3621
        %v3664 = vpack.c.b16 %v3623, %v3622
        %v3665 = vpack.c.b16 %v3624, %v3624
        %v3666 = vpack.c.b16 %v3626, %v3625
        %v3667 = vpack.c.b16 %v3627, %v3627
        %v3668 = vpack.c.b16 %v3629, %v3628
        %v3669 = vpack.c.b16 %v3630, %v3630
        %v3670 = vpack.c.b16 %v3632, %v3631
        %v3671 = vpack.c.b16 %v3633, %v3633
        %v3672 = vpack.c.b16 %v3635, %v3634
        %v3673 = vpack.c.b16 %v3636, %v3636
        %v3674 = vpack.c.b16 %v3638, %v3637
        %v3675 = vpack.c.b16 %v3639, %v3639
        %v3676 = vpack.c.b16 %v3641, %v3640
        %v3677 = vpack.c.b16 %v3642, %v3642
        %v3678 = vpack.c.b16 %v3644, %v3643
        %v3679 = vpack.c.b16 %v3645, %v3645
        %v3680 = vpack.c.b16 %v3647, %v3646
        %v3681 = vpack.c.b16 %v3648, %v3648
        %v3682 = vpack.c.b16 %v3650, %v3649
        %v3683 = vpack.c.b16 %v3651, %v3651
        %v3684 = vrot.slane %v3652, 1
        %v3685 = vrot.slane %v3653, 1
        %v3686 = vsel %vm950, %v3684, %v3685
        %v3687 = vrot.slane %v3654, 1
        %v3688 = vrot.slane %v3655, 1
        %v3689 = vsel %vm950, %v3687, %v3688
        %v3690 = vrot.slane %v3656, 1
        %v3691 = vrot.slane %v3657, 1
        %v3692 = vsel %vm950, %v3690, %v3691
        %v3693 = vrot.slane %v3658, 1
        %v3694 = vrot.slane %v3659, 1
        %v3695 = vsel %vm950, %v3693, %v3694
        %v3696 = vrot.slane %v3660, 1
        %v3697 = vrot.slane %v3661, 1
        %v3698 = vsel %vm950, %v3696, %v3697
        %v3699 = vrot.slane %v3662, 1
        %v3700 = vrot.slane %v3663, 1
        %v3701 = vsel %vm950, %v3699, %v3700
        %v3702 = vrot.slane %v3664, 1
        %v3703 = vrot.slane %v3665, 1
        %v3704 = vsel %vm950, %v3702, %v3703
        %v3705 = vrot.slane %v3666, 1
        %v3706 = vrot.slane %v3667, 1
        %v3707 = vsel %vm950, %v3705, %v3706
        %v3708 = vrot.slane %v3668, 1
        %v3709 = vrot.slane %v3669, 1
        %v3710 = vsel %vm950, %v3708, %v3709
        %v3711 = vrot.slane %v3670, 1
        %v3712 = vrot.slane %v3671, 1
        %v3713 = vsel %vm950, %v3711, %v3712
        %v3714 = vrot.slane %v3672, 1
        %v3715 = vrot.slane %v3673, 1
        %v3716 = vsel %vm950, %v3714, %v3715
        %v3717 = vrot.slane %v3674, 1
        %v3718 = vrot.slane %v3675, 1
        %v3719 = vsel %vm950, %v3717, %v3718
        %v3720 = vrot.slane %v3676, 1
        %v3721 = vrot.slane %v3677, 1
        %v3722 = vsel %vm950, %v3720, %v3721
        %v3723 = vrot.slane %v3678, 1
        %v3724 = vrot.slane %v3679, 1
        %v3725 = vsel %vm950, %v3723, %v3724
        %v3726 = vrot.slane %v3680, 1
        %v3727 = vrot.slane %v3681, 1
        %v3728 = vsel %vm950, %v3726, %v3727
        %v3729 = vrot.slane %v3682, 1
        %v3730 = vrot.slane %v3683, 1
        %v3731 = vsel %vm950, %v3729, %v3730
        %3748 = vst [vmem:[#allocation2 + $0x40] sm:$0xff] %v3686
        %3749 = vst [vmem:[#allocation2 + $0x88] sm:$0xff] %v3689
        %3750 = vst [vmem:[#allocation2 + $0xd0] sm:$0xff] %v3692
        %3751 = vst [vmem:[#allocation2 + $0x118] sm:$0xff] %v3695
        %3752 = vst [vmem:[#allocation2 + $0x160] sm:$0xff] %v3698
        %3753 = vst [vmem:[#allocation2 + $0x1a8] sm:$0xff] %v3701
        %3754 = vst [vmem:[#allocation2 + $0x1f0] sm:$0xff] %v3704
        %3755 = vst [vmem:[#allocation2 + $0x238] sm:$0xff] %v3707
        %3756 = vst [vmem:[#allocation2 + $0x280] sm:$0xff] %v3710
        %3757 = vst [vmem:[#allocation2 + $0x2c8] sm:$0xff] %v3713
        %3758 = vst [vmem:[#allocation2 + $0x310] sm:$0xff] %v3716
        %3759 = vst [vmem:[#allocation2 + $0x358] sm:$0xff] %v3719
        %3760 = vst [vmem:[#allocation2 + $0x3a0] sm:$0xff] %v3722
        %3761 = vst [vmem:[#allocation2 + $0x3e8] sm:$0xff] %v3725
        %3762 = vst [vmem:[#allocation2 + $0x430] sm:$0xff] %v3728
        %3763 = vst [vmem:[#allocation2 + $0x478] sm:$0xff] %v3731
        %v3764 = vld [vmem:[#allocation2 + $0x30] sm:$0xff]
        %v3765 = vld [vmem:[#allocation2 + $0x38] sm:$0xff]
        %v3766 = vld [vmem:[#allocation2 + $0x40] sm:$0xff]
        %v3767 = vld [vmem:[#allocation2 + $0x78] sm:$0xff]
        %v3768 = vld [vmem:[#allocation2 + $0x80] sm:$0xff]
        %v3769 = vld [vmem:[#allocation2 + $0x88] sm:$0xff]
        %v3770 = vld [vmem:[#allocation2 + $0xc0] sm:$0xff]
        %v3771 = vld [vmem:[#allocation2 + $0xc8] sm:$0xff]
        %v3772 = vld [vmem:[#allocation2 + $0xd0] sm:$0xff]
        %v3773 = vld [vmem:[#allocation2 + $0x108] sm:$0xff]
        %v3774 = vld [vmem:[#allocation2 + $0x110] sm:$0xff]
        %v3775 = vld [vmem:[#allocation2 + $0x118] sm:$0xff]
        %v3776 = vld [vmem:[#allocation2 + $0x150] sm:$0xff]
        %v3777 = vld [vmem:[#allocation2 + $0x158] sm:$0xff]
        %v3778 = vld [vmem:[#allocation2 + $0x160] sm:$0xff]
        %v3779 = vld [vmem:[#allocation2 + $0x198] sm:$0xff]
        %v3780 = vld [vmem:[#allocation2 + $0x1a0] sm:$0xff]
        %v3781 = vld [vmem:[#allocation2 + $0x1a8] sm:$0xff]
        %v3782 = vld [vmem:[#allocation2 + $0x1e0] sm:$0xff]
        %v3783 = vld [vmem:[#allocation2 + $0x1e8] sm:$0xff]
        %v3784 = vld [vmem:[#allocation2 + $0x1f0] sm:$0xff]
        %v3785 = vld [vmem:[#allocation2 + $0x228] sm:$0xff]
        %v3786 = vld [vmem:[#allocation2 + $0x230] sm:$0xff]
        %v3787 = vld [vmem:[#allocation2 + $0x238] sm:$0xff]
        %v3788 = vld [vmem:[#allocation2 + $0x270] sm:$0xff]
        %v3789 = vld [vmem:[#allocation2 + $0x278] sm:$0xff]
        %v3790 = vld [vmem:[#allocation2 + $0x280] sm:$0xff]
        %v3791 = vld [vmem:[#allocation2 + $0x2b8] sm:$0xff]
        %v3792 = vld [vmem:[#allocation2 + $0x2c0] sm:$0xff]
        %v3793 = vld [vmem:[#allocation2 + $0x2c8] sm:$0xff]
        %v3794 = vld [vmem:[#allocation2 + $0x300] sm:$0xff]
        %v3795 = vld [vmem:[#allocation2 + $0x308] sm:$0xff]
        %v3796 = vld [vmem:[#allocation2 + $0x310] sm:$0xff]
        %v3797 = vld [vmem:[#allocation2 + $0x348] sm:$0xff]
        %v3798 = vld [vmem:[#allocation2 + $0x350] sm:$0xff]
        %v3799 = vld [vmem:[#allocation2 + $0x358] sm:$0xff]
        %v3800 = vld [vmem:[#allocation2 + $0x390] sm:$0xff]
        %v3801 = vld [vmem:[#allocation2 + $0x398] sm:$0xff]
        %v3802 = vld [vmem:[#allocation2 + $0x3a0] sm:$0xff]
        %v3803 = vld [vmem:[#allocation2 + $0x3d8] sm:$0xff]
        %v3804 = vld [vmem:[#allocation2 + $0x3e0] sm:$0xff]
        %v3805 = vld [vmem:[#allocation2 + $0x3e8] sm:$0xff]
        %v3806 = vld [vmem:[#allocation2 + $0x420] sm:$0xff]
        %v3807 = vld [vmem:[#allocation2 + $0x428] sm:$0xff]
        %v3808 = vld [vmem:[#allocation2 + $0x430] sm:$0xff]
        %v3809 = vld [vmem:[#allocation2 + $0x468] sm:$0xff]
        %v3810 = vld [vmem:[#allocation2 + $0x470] sm:$0xff]
        %v3811 = vld [vmem:[#allocation2 + $0x478] sm:$0xff]
        %s3812 = scalar_lea.vmem %s219, 384
        %v3813 = vld [vmem:[%s3812] sm:$0xf]
        %v3814 = vld [vmem:[%s3812 + $0x4] sm:$0xf]
        %v3815 = vld [vmem:[%s3812 + $0x8] sm:$0xf]
        %v3816 = vld [vmem:[%s3812 + $0xc] sm:$0xf]
        %v3817 = vld [vmem:[%s3812 + $0x10] sm:$0xf]
        %v3818 = vld [vmem:[%s3812 + $0x14] sm:$0xf]
        %v3819 = vld [vmem:[%s3812 + $0x18] sm:$0xf]
        %v3820 = vld [vmem:[%s3812 + $0x1c] sm:$0xf]
        %v3821 = vld [vmem:[%s3812 + $0x20] sm:$0xf]
        %v3822 = vld [vmem:[%s3812 + $0x24] sm:$0xf]
        %v3823 = vld [vmem:[%s3812 + $0x28] sm:$0xf]
        %v3824 = vld [vmem:[%s3812 + $0x2c] sm:$0xf]
        %v3825 = vld [vmem:[%s3812 + $0x30] sm:$0xf]
        %v3826 = vld [vmem:[%s3812 + $0x34] sm:$0xf]
        %v3827 = vld [vmem:[%s3812 + $0x38] sm:$0xf]
        %v3828 = vld [vmem:[%s3812 + $0x3c] sm:$0xf]
        %v3829 = vld [vmem:[%s3812 + $0x40] sm:$0xf]
        %v3830 = vld [vmem:[%s3812 + $0x44] sm:$0xf]
        %v3831 = vld [vmem:[%s3812 + $0x48] sm:$0xf]
        %v3832 = vld [vmem:[%s3812 + $0x4c] sm:$0xf]
        %v3833 = vld [vmem:[%s3812 + $0x50] sm:$0xf]
        %v3834 = vld [vmem:[%s3812 + $0x54] sm:$0xf]
        %v3835 = vld [vmem:[%s3812 + $0x58] sm:$0xf]
        %v3836 = vld [vmem:[%s3812 + $0x5c] sm:$0xf]
        %v3837 = vld [vmem:[%s3812 + $0x60] sm:$0xf]
        %v3838 = vld [vmem:[%s3812 + $0x64] sm:$0xf]
        %v3839 = vld [vmem:[%s3812 + $0x68] sm:$0xf]
        %v3840 = vld [vmem:[%s3812 + $0x6c] sm:$0xf]
        %v3841 = vld [vmem:[%s3812 + $0x70] sm:$0xf]
        %v3842 = vld [vmem:[%s3812 + $0x74] sm:$0xf]
        %v3843 = vld [vmem:[%s3812 + $0x78] sm:$0xf]
        %v3844 = vld [vmem:[%s3812 + $0x7c] sm:$0xf]
        %v3845 = vld [vmem:[%s3812 + $0x80] sm:$0xf]
        %v3846 = vld [vmem:[%s3812 + $0x84] sm:$0xf]
        %v3847 = vld [vmem:[%s3812 + $0x88] sm:$0xf]
        %v3848 = vld [vmem:[%s3812 + $0x8c] sm:$0xf]
        %v3849 = vld [vmem:[%s3812 + $0x90] sm:$0xf]
        %v3850 = vld [vmem:[%s3812 + $0x94] sm:$0xf]
        %v3851 = vld [vmem:[%s3812 + $0x98] sm:$0xf]
        %v3852 = vld [vmem:[%s3812 + $0x9c] sm:$0xf]
        %v3853 = vld [vmem:[%s3812 + $0xa0] sm:$0xf]
        %v3854 = vld [vmem:[%s3812 + $0xa4] sm:$0xf]
        %v3855 = vld [vmem:[%s3812 + $0xa8] sm:$0xf]
        %v3856 = vld [vmem:[%s3812 + $0xac] sm:$0xf]
        %v3857 = vld [vmem:[%s3812 + $0xb0] sm:$0xf]
        %v3858 = vld [vmem:[%s3812 + $0xb4] sm:$0xf]
        %v3859 = vld [vmem:[%s3812 + $0xb8] sm:$0xf]
        %v3860 = vld [vmem:[%s3812 + $0xbc] sm:$0xf]
        %v3909 = vunpack.c.l.b16 %v3813
        %v3910 = vunpack.c.l.b16 %v3814
        %v3911 = vunpack.c.l.b16 %v3815
        %v3912 = vunpack.c.l.b16 %v3816
        %v3913 = vunpack.c.l.b16 %v3817
        %v3914 = vunpack.c.l.b16 %v3818
        %v3915 = vunpack.c.l.b16 %v3819
        %v3916 = vunpack.c.l.b16 %v3820
        %v3917 = vunpack.c.l.b16 %v3821
        %v3918 = vunpack.c.l.b16 %v3822
        %v3919 = vunpack.c.l.b16 %v3823
        %v3920 = vunpack.c.l.b16 %v3824
        %v3921 = vunpack.c.l.b16 %v3825
        %v3922 = vunpack.c.l.b16 %v3826
        %v3923 = vunpack.c.l.b16 %v3827
        %v3924 = vunpack.c.l.b16 %v3828
        %v3925 = vunpack.c.l.b16 %v3829
        %v3926 = vunpack.c.l.b16 %v3830
        %v3927 = vunpack.c.l.b16 %v3831
        %v3928 = vunpack.c.l.b16 %v3832
        %v3929 = vunpack.c.l.b16 %v3833
        %v3930 = vunpack.c.l.b16 %v3834
        %v3931 = vunpack.c.l.b16 %v3835
        %v3932 = vunpack.c.l.b16 %v3836
        %v3933 = vunpack.c.l.b16 %v3837
        %v3934 = vunpack.c.l.b16 %v3838
        %v3935 = vunpack.c.l.b16 %v3839
        %v3936 = vunpack.c.l.b16 %v3840
        %v3937 = vunpack.c.l.b16 %v3841
        %v3938 = vunpack.c.l.b16 %v3842
        %v3939 = vunpack.c.l.b16 %v3843
        %v3940 = vunpack.c.l.b16 %v3844
        %v3941 = vunpack.c.l.b16 %v3845
        %v3942 = vunpack.c.l.b16 %v3846
        %v3943 = vunpack.c.l.b16 %v3847
        %v3944 = vunpack.c.l.b16 %v3848
        %v3945 = vunpack.c.l.b16 %v3849
        %v3946 = vunpack.c.l.b16 %v3850
        %v3947 = vunpack.c.l.b16 %v3851
        %v3948 = vunpack.c.l.b16 %v3852
        %v3949 = vunpack.c.l.b16 %v3853
        %v3950 = vunpack.c.l.b16 %v3854
        %v3951 = vunpack.c.l.b16 %v3855
        %v3952 = vunpack.c.l.b16 %v3856
        %v3953 = vunpack.c.l.b16 %v3857
        %v3954 = vunpack.c.l.b16 %v3858
        %v3955 = vunpack.c.l.b16 %v3859
        %v3956 = vunpack.c.l.b16 %v3860
        %v3957 = vpack.c.b16 %v3910, %v3909
        %v3958 = vpack.c.b16 %v3912, %v3911
        %v3959 = vpack.c.b16 %v3914, %v3913
        %v3960 = vpack.c.b16 %v3916, %v3915
        %v3961 = vpack.c.b16 %v3918, %v3917
        %v3962 = vpack.c.b16 %v3920, %v3919
        %v3963 = vpack.c.b16 %v3922, %v3921
        %v3964 = vpack.c.b16 %v3924, %v3923
        %v3965 = vpack.c.b16 %v3926, %v3925
        %v3966 = vpack.c.b16 %v3928, %v3927
        %v3967 = vpack.c.b16 %v3930, %v3929
        %v3968 = vpack.c.b16 %v3932, %v3931
        %v3969 = vpack.c.b16 %v3934, %v3933
        %v3970 = vpack.c.b16 %v3936, %v3935
        %v3971 = vpack.c.b16 %v3938, %v3937
        %v3972 = vpack.c.b16 %v3940, %v3939
        %v3973 = vpack.c.b16 %v3942, %v3941
        %v3974 = vpack.c.b16 %v3944, %v3943
        %v3975 = vpack.c.b16 %v3946, %v3945
        %v3976 = vpack.c.b16 %v3948, %v3947
        %v3977 = vpack.c.b16 %v3950, %v3949
        %v3978 = vpack.c.b16 %v3952, %v3951
        %v3979 = vpack.c.b16 %v3954, %v3953
        %v3980 = vpack.c.b16 %v3956, %v3955
        %4005 = vmatprep.subr.bf16.mxu0 0
        %4006 = vmatpush1.bf16.msra.mxu0 %v3957
        %4007 = vmatprep.subr.bf16.mxu0 0
        %4008 = vmatpush1.bf16.msra.mxu0 %v3958
        %4009 = vmatprep.subr.bf16.mxu0 0
        %4010 = vmatpush1.bf16.msra.mxu0 %v3959
        %4011 = vmatprep.subr.bf16.mxu0 0
        %4012 = vmatpush1.bf16.msra.mxu0 %v3960
        %4013 = vmatprep.subr.bf16.mxu0 0
        %4014 = vmatpush1.bf16.msra.mxu0 %v3961
        %4015 = vmatprep.subr.bf16.mxu0 0
        %4016 = vmatpush1.bf16.msra.mxu0 %v3962
        %4017 = vmatprep.subr.bf16.mxu0 0
        %4018 = vmatpush1.bf16.msra.mxu0 %v3963
        %4019 = vmatprep.subr.bf16.mxu0 0
        %4020 = vmatpush1.bf16.msra.mxu0 %v3964
        %4021 = vmatprep.subr.bf16.mxu0 0
        %4022 = vmatpush1.bf16.msra.mxu0 %v3965
        %4023 = vmatprep.subr.bf16.mxu0 0
        %4024 = vmatpush1.bf16.msra.mxu0 %v3966
        %4025 = vmatprep.subr.bf16.mxu0 0
        %4026 = vmatpush1.bf16.msra.mxu0 %v3967
        %4027 = vmatprep.subr.bf16.mxu0 0
        %4028 = vmatpush1.bf16.msra.mxu0 %v3968
        %4029 = vmatprep.subr.bf16.mxu0 0
        %4030 = vmatpush1.bf16.msra.mxu0 %v3969
        %4031 = vmatprep.subr.bf16.mxu0 0
        %4032 = vmatpush1.bf16.msra.mxu0 %v3970
        %4033 = vmatprep.subr.bf16.mxu0 0
        %4034 = vmatpush1.bf16.msra.mxu0 %v3971
        %4035 = vmatprep.subr.bf16.mxu0 0
        %4036 = vmatpush1.bf16.msra.mxu0 %v3972
        %4037 = vmatprep.mubr.bf16.mxu0 %v3765
        %4038 = vmatmul.mubr.bf16.gmra.mrb[0].mxu0 %v3764
        %v4039 = vpop.f32.mrb[0].mxu0
        %v4040 = vadd.f32 0.0, %v4039
        %v4041 = vpop.f32.mrb[0].mxu0
        %v4042 = vpop.f32.mrb[0].mxu0
        %v4043 = vadd.f32 0.0, %v4042
        %v4044 = vpop.f32.mrb[0].mxu0
        %4045 = vmatprep.mubr.bf16.mxu0 %v3768
        %4046 = vmatmul.mubr.bf16.gmra.mrb[0].mxu0 %v3767
        %v4047 = vpop.f32.mrb[0].mxu0
        %v4048 = vadd.f32 0.0, %v4047
        %v4049 = vpop.f32.mrb[0].mxu0
        %v4050 = vpop.f32.mrb[0].mxu0
        %v4051 = vadd.f32 0.0, %v4050
        %v4052 = vpop.f32.mrb[0].mxu0
        %4053 = vmatprep.mubr.bf16.mxu0 %v3771
        %4054 = vmatmul.mubr.bf16.gmra.mrb[0].mxu0 %v3770
        %v4055 = vpop.f32.mrb[0].mxu0
        %v4056 = vadd.f32 0.0, %v4055
        %v4057 = vpop.f32.mrb[0].mxu0
        %v4058 = vpop.f32.mrb[0].mxu0
        %v4059 = vadd.f32 0.0, %v4058
        %v4060 = vpop.f32.mrb[0].mxu0
        %4061 = vmatprep.mubr.bf16.mxu0 %v3774
        %4062 = vmatmul.mubr.bf16.gmra.mrb[0].mxu0 %v3773
        %v4063 = vpop.f32.mrb[0].mxu0
        %v4064 = vadd.f32 0.0, %v4063
        %v4065 = vpop.f32.mrb[0].mxu0
        %v4066 = vpop.f32.mrb[0].mxu0
        %v4067 = vadd.f32 0.0, %v4066
        %v4068 = vpop.f32.mrb[0].mxu0
        %4069 = vmatprep.mubr.bf16.mxu0 %v3777
        %4070 = vmatmul.mubr.bf16.gmra.mrb[0].mxu0 %v3776
        %v4071 = vpop.f32.mrb[0].mxu0
        %v4072 = vadd.f32 0.0, %v4071
        %v4073 = vpop.f32.mrb[0].mxu0
        %v4074 = vpop.f32.mrb[0].mxu0
        %v4075 = vadd.f32 0.0, %v4074
        %v4076 = vpop.f32.mrb[0].mxu0
        %4077 = vmatprep.mubr.bf16.mxu0 %v3780
        %4078 = vmatmul.mubr.bf16.gmra.mrb[0].mxu0 %v3779
        %v4079 = vpop.f32.mrb[0].mxu0
        %v4080 = vadd.f32 0.0, %v4079
        %v4081 = vpop.f32.mrb[0].mxu0
        %v4082 = vpop.f32.mrb[0].mxu0
        %v4083 = vadd.f32 0.0, %v4082
        %v4084 = vpop.f32.mrb[0].mxu0
        %4085 = vmatprep.mubr.bf16.mxu0 %v3783
        %4086 = vmatmul.mubr.bf16.gmra.mrb[0].mxu0 %v3782
        %v4087 = vpop.f32.mrb[0].mxu0
        %v4088 = vadd.f32 0.0, %v4087
        %v4089 = vpop.f32.mrb[0].mxu0
        %v4090 = vpop.f32.mrb[0].mxu0
        %v4091 = vadd.f32 0.0, %v4090
        %v4092 = vpop.f32.mrb[0].mxu0
        %4093 = vmatprep.mubr.bf16.mxu0 %v3786
        %4094 = vmatmul.mubr.bf16.gmra.mrb[0].mxu0 %v3785
        %v4095 = vpop.f32.mrb[0].mxu0
        %v4096 = vadd.f32 0.0, %v4095
        %v4097 = vpop.f32.mrb[0].mxu0
        %v4098 = vpop.f32.mrb[0].mxu0
        %v4099 = vadd.f32 0.0, %v4098
        %v4100 = vpop.f32.mrb[0].mxu0
        %4101 = vmatprep.mubr.bf16.mxu0 %v3789
        %4102 = vmatmul.mubr.bf16.gmra.mrb[0].mxu0 %v3788
        %v4103 = vpop.f32.mrb[0].mxu0
        %v4104 = vadd.f32 0.0, %v4103
        %v4105 = vpop.f32.mrb[0].mxu0
        %v4106 = vpop.f32.mrb[0].mxu0
        %v4107 = vadd.f32 0.0, %v4106
        %v4108 = vpop.f32.mrb[0].mxu0
        %4109 = vmatprep.mubr.bf16.mxu0 %v3792
        %4110 = vmatmul.mubr.bf16.gmra.mrb[0].mxu0 %v3791
        %v4111 = vpop.f32.mrb[0].mxu0
        %v4112 = vadd.f32 0.0, %v4111
        %v4113 = vpop.f32.mrb[0].mxu0
        %v4114 = vpop.f32.mrb[0].mxu0
        %v4115 = vadd.f32 0.0, %v4114
        %v4116 = vpop.f32.mrb[0].mxu0
        %4117 = vmatprep.mubr.bf16.mxu0 %v3795
        %4118 = vmatmul.mubr.bf16.gmra.mrb[0].mxu0 %v3794
        %v4119 = vpop.f32.mrb[0].mxu0
        %v4120 = vadd.f32 0.0, %v4119
        %v4121 = vpop.f32.mrb[0].mxu0
        %v4122 = vpop.f32.mrb[0].mxu0
        %v4123 = vadd.f32 0.0, %v4122
        %v4124 = vpop.f32.mrb[0].mxu0
        %4125 = vmatprep.mubr.bf16.mxu0 %v3798
        %4126 = vmatmul.mubr.bf16.gmra.mrb[0].mxu0 %v3797
        %v4127 = vpop.f32.mrb[0].mxu0
        %v4128 = vadd.f32 0.0, %v4127
        %v4129 = vpop.f32.mrb[0].mxu0
        %v4130 = vpop.f32.mrb[0].mxu0
        %v4131 = vadd.f32 0.0, %v4130
        %v4132 = vpop.f32.mrb[0].mxu0
        %4133 = vmatprep.mubr.bf16.mxu0 %v3801
        %4134 = vmatmul.mubr.bf16.gmra.mrb[0].mxu0 %v3800
        %v4135 = vpop.f32.mrb[0].mxu0
        %v4136 = vadd.f32 0.0, %v4135
        %v4137 = vpop.f32.mrb[0].mxu0
        %v4138 = vpop.f32.mrb[0].mxu0
        %v4139 = vadd.f32 0.0, %v4138
        %v4140 = vpop.f32.mrb[0].mxu0
        %4141 = vmatprep.mubr.bf16.mxu0 %v3804
        %4142 = vmatmul.mubr.bf16.gmra.mrb[0].mxu0 %v3803
        %v4143 = vpop.f32.mrb[0].mxu0
        %v4144 = vadd.f32 0.0, %v4143
        %v4145 = vpop.f32.mrb[0].mxu0
        %v4146 = vpop.f32.mrb[0].mxu0
        %v4147 = vadd.f32 0.0, %v4146
        %v4148 = vpop.f32.mrb[0].mxu0
        %4149 = vmatprep.mubr.bf16.mxu0 %v3807
        %4150 = vmatmul.mubr.bf16.gmra.mrb[0].mxu0 %v3806
        %v4151 = vpop.f32.mrb[0].mxu0
        %v4152 = vadd.f32 0.0, %v4151
        %v4153 = vpop.f32.mrb[0].mxu0
        %v4154 = vpop.f32.mrb[0].mxu0
        %v4155 = vadd.f32 0.0, %v4154
        %v4156 = vpop.f32.mrb[0].mxu0
        %4157 = vmatprep.mubr.bf16.mxu0 %v3810
        %4158 = vmatmul.mubr.bf16.gmra.mrb[0].mxu0 %v3809
        %v4159 = vpop.f32.mrb[0].mxu0
        %v4160 = vadd.f32 0.0, %v4159
        %v4161 = vpop.f32.mrb[0].mxu0
        %v4162 = vpop.f32.mrb[0].mxu0
        %v4163 = vadd.f32 0.0, %v4162
        %v4164 = vpop.f32.mrb[0].mxu0
        %4165 = vdwg.mxu0
        %4166 = vmatprep.subr.bf16.mxu0 0
        %4167 = vmatpush1.bf16.msra.mxu0 %v3973
        %4168 = vmatprep.subr.bf16.mxu0 0
        %4169 = vmatpush1.bf16.msra.mxu0 %v3974
        %4170 = vmatprep.subr.bf16.mxu0 0
        %4171 = vmatpush1.bf16.msra.mxu0 %v3975
        %4172 = vmatprep.subr.bf16.mxu0 0
        %4173 = vmatpush1.bf16.msra.mxu0 %v3976
        %4174 = vmatprep.subr.bf16.mxu0 0
        %4175 = vmatpush1.bf16.msra.mxu0 %v3977
        %4176 = vmatprep.subr.bf16.mxu0 0
        %4177 = vmatpush1.bf16.msra.mxu0 %v3978
        %4178 = vmatprep.subr.bf16.mxu0 0
        %4179 = vmatpush1.bf16.msra.mxu0 %v3979
        %4180 = vmatprep.subr.bf16.mxu0 0
        %4181 = vmatpush1.bf16.msra.mxu0 %v3980
        %4182 = vmatprep.subr.bf16.mxu0 0
        %4183 = vmatpush1.bf16.msra.mxu0 0
        %4184 = vmatprep.subr.bf16.mxu0 0
        %4185 = vmatpush1.bf16.msra.mxu0 0
        %4186 = vmatprep.subr.bf16.mxu0 0
        %4187 = vmatpush1.bf16.msra.mxu0 0
        %4188 = vmatprep.subr.bf16.mxu0 0
        %4189 = vmatpush1.bf16.msra.mxu0 0
        %4190 = vmatprep.subr.bf16.mxu0 0
        %4191 = vmatpush1.bf16.msra.mxu0 0
        %4192 = vmatprep.subr.bf16.mxu0 0
        %4193 = vmatpush1.bf16.msra.mxu0 0
        %4194 = vmatprep.subr.bf16.mxu0 0
        %4195 = vmatpush1.bf16.msra.mxu0 0
        %4196 = vmatprep.subr.bf16.mxu0 0
        %4197 = vmatpush1.bf16.msra.mxu0 0
        %4198 = vmatprep.mubr.bf16.mxu0 0
        %4199 = vmatmul.mubr.bf16.gmra.mrb[0].mxu0 %v3766
        %v4200 = vpop.f32.mrb[0].mxu0
        %v4201 = vadd.f32 %v4040, %v4200
        %v4202 = vpop.f32.mrb[0].mxu0
        %v4203 = vpop.f32.mrb[0].mxu0
        %v4204 = vadd.f32 %v4043, %v4203
        %v4205 = vpop.f32.mrb[0].mxu0
        %4206 = vmatprep.mubr.bf16.mxu0 0
        %4207 = vmatmul.mubr.bf16.gmra.mrb[0].mxu0 %v3769
        %v4208 = vpop.f32.mrb[0].mxu0
        %v4209 = vadd.f32 %v4048, %v4208
        %v4210 = vpop.f32.mrb[0].mxu0
        %v4211 = vpop.f32.mrb[0].mxu0
        %v4212 = vadd.f32 %v4051, %v4211
        %v4213 = vpop.f32.mrb[0].mxu0
        %4214 = vmatprep.mubr.bf16.mxu0 0
        %4215 = vmatmul.mubr.bf16.gmra.mrb[0].mxu0 %v3772
        %v4216 = vpop.f32.mrb[0].mxu0
        %v4217 = vadd.f32 %v4056, %v4216
        %v4218 = vpop.f32.mrb[0].mxu0
        %v4219 = vpop.f32.mrb[0].mxu0
        %v4220 = vadd.f32 %v4059, %v4219
        %v4221 = vpop.f32.mrb[0].mxu0
        %4222 = vmatprep.mubr.bf16.mxu0 0
        %4223 = vmatmul.mubr.bf16.gmra.mrb[0].mxu0 %v3775
        %v4224 = vpop.f32.mrb[0].mxu0
        %v4225 = vadd.f32 %v4064, %v4224
        %v4226 = vpop.f32.mrb[0].mxu0
        %v4227 = vpop.f32.mrb[0].mxu0
        %v4228 = vadd.f32 %v4067, %v4227
        %v4229 = vpop.f32.mrb[0].mxu0
        %4230 = vmatprep.mubr.bf16.mxu0 0
        %4231 = vmatmul.mubr.bf16.gmra.mrb[0].mxu0 %v3778
        %v4232 = vpop.f32.mrb[0].mxu0
        %v4233 = vadd.f32 %v4072, %v4232
        %v4234 = vpop.f32.mrb[0].mxu0
        %v4235 = vpop.f32.mrb[0].mxu0
        %v4236 = vadd.f32 %v4075, %v4235
        %v4237 = vpop.f32.mrb[0].mxu0
        %4238 = vmatprep.mubr.bf16.mxu0 0
        %4239 = vmatmul.mubr.bf16.gmra.mrb[0].mxu0 %v3781
        %v4240 = vpop.f32.mrb[0].mxu0
        %v4241 = vadd.f32 %v4080, %v4240
        %v4242 = vpop.f32.mrb[0].mxu0
        %v4243 = vpop.f32.mrb[0].mxu0
        %v4244 = vadd.f32 %v4083, %v4243
        %v4245 = vpop.f32.mrb[0].mxu0
        %4246 = vmatprep.mubr.bf16.mxu0 0
        %4247 = vmatmul.mubr.bf16.gmra.mrb[0].mxu0 %v3784
        %v4248 = vpop.f32.mrb[0].mxu0
        %v4249 = vadd.f32 %v4088, %v4248
        %v4250 = vpop.f32.mrb[0].mxu0
        %v4251 = vpop.f32.mrb[0].mxu0
        %v4252 = vadd.f32 %v4091, %v4251
        %v4253 = vpop.f32.mrb[0].mxu0
        %4254 = vmatprep.mubr.bf16.mxu0 0
        %4255 = vmatmul.mubr.bf16.gmra.mrb[0].mxu0 %v3787
        %v4256 = vpop.f32.mrb[0].mxu0
        %v4257 = vadd.f32 %v4096, %v4256
        %v4258 = vpop.f32.mrb[0].mxu0
        %v4259 = vpop.f32.mrb[0].mxu0
        %v4260 = vadd.f32 %v4099, %v4259
        %v4261 = vpop.f32.mrb[0].mxu0
        %4262 = vmatprep.mubr.bf16.mxu0 0
        %4263 = vmatmul.mubr.bf16.gmra.mrb[0].mxu0 %v3790
        %v4264 = vpop.f32.mrb[0].mxu0
        %v4265 = vadd.f32 %v4104, %v4264
        %v4266 = vpop.f32.mrb[0].mxu0
        %v4267 = vpop.f32.mrb[0].mxu0
        %v4268 = vadd.f32 %v4107, %v4267
        %v4269 = vpop.f32.mrb[0].mxu0
        %4270 = vmatprep.mubr.bf16.mxu0 0
        %4271 = vmatmul.mubr.bf16.gmra.mrb[0].mxu0 %v3793
        %v4272 = vpop.f32.mrb[0].mxu0
        %v4273 = vadd.f32 %v4112, %v4272
        %v4274 = vpop.f32.mrb[0].mxu0
        %v4275 = vpop.f32.mrb[0].mxu0
        %v4276 = vadd.f32 %v4115, %v4275
        %v4277 = vpop.f32.mrb[0].mxu0
        %4278 = vmatprep.mubr.bf16.mxu0 0
        %4279 = vmatmul.mubr.bf16.gmra.mrb[0].mxu0 %v3796
        %v4280 = vpop.f32.mrb[0].mxu0
        %v4281 = vadd.f32 %v4120, %v4280
        %v4282 = vpop.f32.mrb[0].mxu0
        %v4283 = vpop.f32.mrb[0].mxu0
        %v4284 = vadd.f32 %v4123, %v4283
        %v4285 = vpop.f32.mrb[0].mxu0
        %4286 = vmatprep.mubr.bf16.mxu0 0
        %4287 = vmatmul.mubr.bf16.gmra.mrb[0].mxu0 %v3799
        %v4288 = vpop.f32.mrb[0].mxu0
        %v4289 = vadd.f32 %v4128, %v4288
        %v4290 = vpop.f32.mrb[0].mxu0
        %v4291 = vpop.f32.mrb[0].mxu0
        %v4292 = vadd.f32 %v4131, %v4291
        %v4293 = vpop.f32.mrb[0].mxu0
        %4294 = vmatprep.mubr.bf16.mxu0 0
        %4295 = vmatmul.mubr.bf16.gmra.mrb[0].mxu0 %v3802
        %v4296 = vpop.f32.mrb[0].mxu0
        %v4297 = vadd.f32 %v4136, %v4296
        %v4298 = vpop.f32.mrb[0].mxu0
        %v4299 = vpop.f32.mrb[0].mxu0
        %v4300 = vadd.f32 %v4139, %v4299
        %v4301 = vpop.f32.mrb[0].mxu0
        %4302 = vmatprep.mubr.bf16.mxu0 0
        %4303 = vmatmul.mubr.bf16.gmra.mrb[0].mxu0 %v3805
        %v4304 = vpop.f32.mrb[0].mxu0
        %v4305 = vadd.f32 %v4144, %v4304
        %v4306 = vpop.f32.mrb[0].mxu0
        %v4307 = vpop.f32.mrb[0].mxu0
        %v4308 = vadd.f32 %v4147, %v4307
        %v4309 = vpop.f32.mrb[0].mxu0
        %4310 = vmatprep.mubr.bf16.mxu0 0
        %4311 = vmatmul.mubr.bf16.gmra.mrb[0].mxu0 %v3808
        %v4312 = vpop.f32.mrb[0].mxu0
        %v4313 = vadd.f32 %v4152, %v4312
        %v4314 = vpop.f32.mrb[0].mxu0
        %v4315 = vpop.f32.mrb[0].mxu0
        %v4316 = vadd.f32 %v4155, %v4315
        %v4317 = vpop.f32.mrb[0].mxu0
        %4318 = vmatprep.mubr.bf16.mxu0 0
        %4319 = vmatmul.mubr.bf16.gmra.mrb[0].mxu0 %v3811
        %v4320 = vpop.f32.mrb[0].mxu0
        %v4321 = vadd.f32 %v4160, %v4320
        %v4322 = vpop.f32.mrb[0].mxu0
        %v4323 = vpop.f32.mrb[0].mxu0
        %v4324 = vadd.f32 %v4163, %v4323
        %v4325 = vpop.f32.mrb[0].mxu0
        %4326 = vdwg.mxu0
        %v4327 = vadd.f32 %v2834, %v4201
        %v4328 = vadd.f32 %v2837, %v4204
        %v4329 = vadd.f32 %v2842, %v4209
        %v4330 = vadd.f32 %v2845, %v4212
        %v4331 = vadd.f32 %v2850, %v4217
        %v4332 = vadd.f32 %v2853, %v4220
        %v4333 = vadd.f32 %v2858, %v4225
        %v4334 = vadd.f32 %v2861, %v4228
        %v4335 = vadd.f32 %v2866, %v4233
        %v4336 = vadd.f32 %v2869, %v4236
        %v4337 = vadd.f32 %v2874, %v4241
        %v4338 = vadd.f32 %v2877, %v4244
        %v4339 = vadd.f32 %v2882, %v4249
        %v4340 = vadd.f32 %v2885, %v4252
        %v4341 = vadd.f32 %v2890, %v4257
        %v4342 = vadd.f32 %v2893, %v4260
        %v4343 = vadd.f32 %v2898, %v4265
        %v4344 = vadd.f32 %v2901, %v4268
        %v4345 = vadd.f32 %v2906, %v4273
        %v4346 = vadd.f32 %v2909, %v4276
        %v4347 = vadd.f32 %v2914, %v4281
        %v4348 = vadd.f32 %v2917, %v4284
        %v4349 = vadd.f32 %v2922, %v4289
        %v4350 = vadd.f32 %v2925, %v4292
        %v4351 = vadd.f32 %v2930, %v4297
        %v4352 = vadd.f32 %v2933, %v4300
        %v4353 = vadd.f32 %v2938, %v4305
        %v4354 = vadd.f32 %v2941, %v4308
        %v4355 = vadd.f32 %v2946, %v4313
        %v4356 = vadd.f32 %v2949, %v4316
        %v4357 = vadd.f32 %v2954, %v4321
        %v4358 = vadd.f32 %v2957, %v4324
        %v4359 = vld [vmem:[%s222] sm:$0x1]
        %v4361 = vlaneseq
        %v4362 = vshrl.u32 %v4361, 7
        %v4363 = vsub.s32 0, %v4362
        %v4364 = vrot.slane %v4359, %v4363
        %v4366 = vadd.f32 %v4327, %v4364
        %v4367 = vadd.f32 %v4328, %v4364
        %v4368 = vadd.f32 %v4329, %v4364
        %v4369 = vadd.f32 %v4330, %v4364
        %v4370 = vadd.f32 %v4331, %v4364
        %v4371 = vadd.f32 %v4332, %v4364
        %v4372 = vadd.f32 %v4333, %v4364
        %v4373 = vadd.f32 %v4334, %v4364
        %v4374 = vadd.f32 %v4335, %v4364
        %v4375 = vadd.f32 %v4336, %v4364
        %v4376 = vadd.f32 %v4337, %v4364
        %v4377 = vadd.f32 %v4338, %v4364
        %v4378 = vadd.f32 %v4339, %v4364
        %v4379 = vadd.f32 %v4340, %v4364
        %v4380 = vadd.f32 %v4341, %v4364
        %v4381 = vadd.f32 %v4342, %v4364
        %v4382 = vadd.f32 %v4343, %v4364
        %v4383 = vadd.f32 %v4344, %v4364
        %v4384 = vadd.f32 %v4345, %v4364
        %v4385 = vadd.f32 %v4346, %v4364
        %v4386 = vadd.f32 %v4347, %v4364
        %v4387 = vadd.f32 %v4348, %v4364
        %v4388 = vadd.f32 %v4349, %v4364
        %v4389 = vadd.f32 %v4350, %v4364
        %v4390 = vadd.f32 %v4351, %v4364
        %v4391 = vadd.f32 %v4352, %v4364
        %v4392 = vadd.f32 %v4353, %v4364
        %v4393 = vadd.f32 %v4354, %v4364
        %v4394 = vadd.f32 %v4355, %v4364
        %v4395 = vadd.f32 %v4356, %v4364
        %v4396 = vadd.f32 %v4357, %v4364
        %v4397 = vadd.f32 %v4358, %v4364
        %v4398 = vmax.f32 %v4366, 0.0
        %v4399 = vmax.f32 %v4367, 0.0
        %v4400 = vmax.f32 %v4368, 0.0
        %v4401 = vmax.f32 %v4369, 0.0
        %v4402 = vmax.f32 %v4370, 0.0
        %v4403 = vmax.f32 %v4371, 0.0
        %v4404 = vmax.f32 %v4372, 0.0
        %v4405 = vmax.f32 %v4373, 0.0
        %v4406 = vmax.f32 %v4374, 0.0
        %v4407 = vmax.f32 %v4375, 0.0
        %v4408 = vmax.f32 %v4376, 0.0
        %v4409 = vmax.f32 %v4377, 0.0
        %v4410 = vmax.f32 %v4378, 0.0
        %v4411 = vmax.f32 %v4379, 0.0
        %v4412 = vmax.f32 %v4380, 0.0
        %v4413 = vmax.f32 %v4381, 0.0
        %v4414 = vmax.f32 %v4382, 0.0
        %v4415 = vmax.f32 %v4383, 0.0
        %v4416 = vmax.f32 %v4384, 0.0
        %v4417 = vmax.f32 %v4385, 0.0
        %v4418 = vmax.f32 %v4386, 0.0
        %v4419 = vmax.f32 %v4387, 0.0
        %v4420 = vmax.f32 %v4388, 0.0
        %v4421 = vmax.f32 %v4389, 0.0
        %v4422 = vmax.f32 %v4390, 0.0
        %v4423 = vmax.f32 %v4391, 0.0
        %v4424 = vmax.f32 %v4392, 0.0
        %v4425 = vmax.f32 %v4393, 0.0
        %v4426 = vmax.f32 %v4394, 0.0
        %v4427 = vmax.f32 %v4395, 0.0
        %v4428 = vmax.f32 %v4396, 0.0
        %v4429 = vmax.f32 %v4397, 0.0
        %v4430 = vpack.c.bf16 %v4399, %v4398
        %v4431 = vpack.c.bf16 %v4401, %v4400
        %v4432 = vpack.c.bf16 %v4403, %v4402
        %v4433 = vpack.c.bf16 %v4405, %v4404
        %v4434 = vpack.c.bf16 %v4407, %v4406
        %v4435 = vpack.c.bf16 %v4409, %v4408
        %v4436 = vpack.c.bf16 %v4411, %v4410
        %v4437 = vpack.c.bf16 %v4413, %v4412
        %v4438 = vpack.c.bf16 %v4415, %v4414
        %v4439 = vpack.c.bf16 %v4417, %v4416
        %v4440 = vpack.c.bf16 %v4419, %v4418
        %v4441 = vpack.c.bf16 %v4421, %v4420
        %v4442 = vpack.c.bf16 %v4423, %v4422
        %v4443 = vpack.c.bf16 %v4425, %v4424
        %v4444 = vpack.c.bf16 %v4427, %v4426
        %v4445 = vpack.c.bf16 %v4429, %v4428
        %v4462 = vunpack.c.l.b16 %v4430
        %v4463 = vunpack.c.h.b16 %v4430
        %v4464 = vunpack.c.l.b16 %v4431
        %v4465 = vunpack.c.h.b16 %v4431
        %v4466 = vunpack.c.l.b16 %v4432
        %v4467 = vunpack.c.h.b16 %v4432
        %v4468 = vunpack.c.l.b16 %v4433
        %v4469 = vunpack.c.h.b16 %v4433
        %v4470 = vunpack.c.l.b16 %v4434
        %v4471 = vunpack.c.h.b16 %v4434
        %v4472 = vunpack.c.l.b16 %v4435
        %v4473 = vunpack.c.h.b16 %v4435
        %v4474 = vunpack.c.l.b16 %v4436
        %v4475 = vunpack.c.h.b16 %v4436
        %v4476 = vunpack.c.l.b16 %v4437
        %v4477 = vunpack.c.h.b16 %v4437
        %v4478 = vunpack.c.l.b16 %v4438
        %v4479 = vunpack.c.h.b16 %v4438
        %v4480 = vunpack.c.l.b16 %v4439
        %v4481 = vunpack.c.h.b16 %v4439
        %v4482 = vunpack.c.l.b16 %v4440
        %v4483 = vunpack.c.h.b16 %v4440
        %v4484 = vunpack.c.l.b16 %v4441
        %v4485 = vunpack.c.h.b16 %v4441
        %v4486 = vunpack.c.l.b16 %v4442
        %v4487 = vunpack.c.h.b16 %v4442
        %v4488 = vunpack.c.l.b16 %v4443
        %v4489 = vunpack.c.h.b16 %v4443
        %v4490 = vunpack.c.l.b16 %v4444
        %v4491 = vunpack.c.h.b16 %v4444
        %v4492 = vunpack.c.l.b16 %v4445
        %v4493 = vunpack.c.h.b16 %v4445
        %v4494 = vpack.c.b16 %v4462, %v4462
        %v4495 = vpack.c.b16 %v4463, %v4463
        %v4496 = vpack.c.b16 %v4464, %v4464
        %v4497 = vpack.c.b16 %v4465, %v4465
        %v4498 = vpack.c.b16 %v4466, %v4466
        %v4499 = vpack.c.b16 %v4467, %v4467
        %v4500 = vpack.c.b16 %v4468, %v4468
        %v4501 = vpack.c.b16 %v4469, %v4469
        %v4502 = vpack.c.b16 %v4470, %v4470
        %v4503 = vpack.c.b16 %v4471, %v4471
        %v4504 = vpack.c.b16 %v4472, %v4472
        %v4505 = vpack.c.b16 %v4473, %v4473
        %v4506 = vpack.c.b16 %v4474, %v4474
        %v4507 = vpack.c.b16 %v4475, %v4475
        %v4508 = vpack.c.b16 %v4476, %v4476
        %v4509 = vpack.c.b16 %v4477, %v4477
        %v4510 = vpack.c.b16 %v4478, %v4478
        %v4511 = vpack.c.b16 %v4479, %v4479
        %v4512 = vpack.c.b16 %v4480, %v4480
        %v4513 = vpack.c.b16 %v4481, %v4481
        %v4514 = vpack.c.b16 %v4482, %v4482
        %v4515 = vpack.c.b16 %v4483, %v4483
        %v4516 = vpack.c.b16 %v4484, %v4484
        %v4517 = vpack.c.b16 %v4485, %v4485
        %v4518 = vpack.c.b16 %v4486, %v4486
        %v4519 = vpack.c.b16 %v4487, %v4487
        %v4520 = vpack.c.b16 %v4488, %v4488
        %v4521 = vpack.c.b16 %v4489, %v4489
        %v4522 = vpack.c.b16 %v4490, %v4490
        %v4523 = vpack.c.b16 %v4491, %v4491
        %v4524 = vpack.c.b16 %v4492, %v4492
        %v4525 = vpack.c.b16 %v4493, %v4493
        %4558 = vst [vmem:[%s210] sm:$0xf] %v4494
        %4559 = vst [vmem:[%s210 + $0x4] sm:$0xf] %v4495
        %4560 = vst [vmem:[%s210 + $0x8] sm:$0xf] %v4496
        %4561 = vst [vmem:[%s210 + $0xc] sm:$0xf] %v4497
        %4562 = vst [vmem:[%s210 + $0x10] sm:$0xf] %v4498
        %4563 = vst [vmem:[%s210 + $0x14] sm:$0xf] %v4499
        %4564 = vst [vmem:[%s210 + $0x18] sm:$0xf] %v4500
        %4565 = vst [vmem:[%s210 + $0x1c] sm:$0xf] %v4501
        %4566 = vst [vmem:[%s210 + $0x20] sm:$0xf] %v4502
        %4567 = vst [vmem:[%s210 + $0x24] sm:$0xf] %v4503
        %4568 = vst [vmem:[%s210 + $0x28] sm:$0xf] %v4504
        %4569 = vst [vmem:[%s210 + $0x2c] sm:$0xf] %v4505
        %4570 = vst [vmem:[%s210 + $0x30] sm:$0xf] %v4506
        %4571 = vst [vmem:[%s210 + $0x34] sm:$0xf] %v4507
        %4572 = vst [vmem:[%s210 + $0x38] sm:$0xf] %v4508
        %4573 = vst [vmem:[%s210 + $0x3c] sm:$0xf] %v4509
        %4574 = vst [vmem:[%s210 + $0x40] sm:$0xf] %v4510
        %4575 = vst [vmem:[%s210 + $0x44] sm:$0xf] %v4511
        %4576 = vst [vmem:[%s210 + $0x48] sm:$0xf] %v4512
        %4577 = vst [vmem:[%s210 + $0x4c] sm:$0xf] %v4513
        %4578 = vst [vmem:[%s210 + $0x50] sm:$0xf] %v4514
        %4579 = vst [vmem:[%s210 + $0x54] sm:$0xf] %v4515
        %4580 = vst [vmem:[%s210 + $0x58] sm:$0xf] %v4516
        %4581 = vst [vmem:[%s210 + $0x5c] sm:$0xf] %v4517
        %4582 = vst [vmem:[%s210 + $0x60] sm:$0xf] %v4518
        %4583 = vst [vmem:[%s210 + $0x64] sm:$0xf] %v4519
        %4584 = vst [vmem:[%s210 + $0x68] sm:$0xf] %v4520
        %4585 = vst [vmem:[%s210 + $0x6c] sm:$0xf] %v4521
        %4586 = vst [vmem:[%s210 + $0x70] sm:$0xf] %v4522
        %4587 = vst [vmem:[%s210 + $0x74] sm:$0xf] %v4523
        %4588 = vst [vmem:[%s210 + $0x78] sm:$0xf] %v4524
        %4589 = vst [vmem:[%s210 + $0x7c] sm:$0xf] %v4525
        %s4590 = sand.u32 %s126, 1
        %s4591 = scalar_lea.sflag [#allocation4], %s4590
        %s4592 = sand.u32 %s126, 1
        %s4593 = smul.addr %s4592, 128
        %s4594 = scalar_lea.vmem [#allocation3], %s4593
        // Predicated region
        $region33: #{tpu_custom_call.1} parent=31 // pred_check
          %p4595 = pneg %p136
        $region34: #{tpu_custom_call.1} parent=31 // pred_check_branch
          %4597 = sbr.rel (%p4595) target = $region36
        $region35: #{tpu_custom_call.1} parent=31 // pred_region
          %s4598 = smul.u32 16, %s23
          %s4600 = ssub.s32 2048, 2048
          %4601 = vsyncadd %s4591, %s4600
          %s4602 = smul.addr %s4598, 2
          %s4603 = sadd.s32 %s24, %s4602
          %s4604 = smul.addr %s22, 32
          %s4605 = sadd.s32 %s4603, %s4604
          %s4606 = smul.addr %s4605, 64
          %s4607 = scalar_lea.hbm %s3, %s4606
          %s4608 = sshll.u32 %s4594, 4
          %s4609 = int_to_ptr.vmem [resolvable:$true] %s4608
          %4614 = dma.vmem_to_hbm [thread:$0]  %s4609, 2048, %s4607, %s4591, 64, 64, 4
        $region36: #{tpu_custom_call.1} parent=31 // pred_fallthru
          _
      $region32: #{tpu_custom_call.1} parent=5 // pred_fallthru
        _
      %p4615 = scmp.le.s32.totalorder 2, %s12
      // Predicated region
      $region37: #{tpu_custom_call.1} parent=5 // pred_check
        %p4616 = pneg %p4615
      $region38: #{tpu_custom_call.1} parent=5 // pred_check_branch
        %4618 = sbr.rel (%p4616) target = $region40
      $region39: #{tpu_custom_call.1} parent=5 // pred_region
        %s4619 = ssub.s32 %s12, 2
        // Predicated region
        $region41: #{tpu_custom_call.1} parent=39 // pred_check
          %p4620 = pneg %p142
        $region42: #{tpu_custom_call.1} parent=39 // pred_check_branch
          %4622 = sbr.rel (%p4620) target = $region44
        $region43: #{tpu_custom_call.1} parent=39 // pred_region
          %s4623 = sand.u32 %s127, 1
          %s4624 = scalar_lea.sflag [#allocation4], %s4623
          %s4625 = sand.u32 %s127, 1
          %s4626 = smul.addr %s4625, 128
          %s4627 = scalar_lea.vmem [#allocation3], %s4626
          %4628 = dma.done %s4624, 2048
        $region44: #{tpu_custom_call.1} parent=39 // pred_fallthru
          _
      $region40: #{tpu_custom_call.1} parent=5 // pred_fallthru
        _
    $region6: #{tpu_custom_call.1} parent=1 // loop_footer
      %s16 = sadd.s32 1, %s12
    $region7: #{tpu_custom_call.1} parent=1 // loop_footer_branch
      %11 = sbr.rel target = $region3
    $region8: #{tpu_custom_call.1} parent=1 // loop_exit
      _
    %4629 = vsyncpa [#allocation4], 1
    %s4630 = scalar_lea.sflag [#allocation4], 1
    %4631 = vsyncpa %s4630, 1

</llo_original>
